<compile_context>
chip_gen: v6e
topology: v6e:2x2x1
jax: 0.10.0
libtpu: 0.0.40
codegen_flags: <defaults>
</compile_context>

<pallas_src>
import functools

import jax
import jax.numpy as jnp
from jax.experimental import pallas as pl
from jax.experimental.pallas import tpu as pltpu


# ----------------------------------------------------------------------------
# Kernel A: fused LeakyReLU -> Conv2d -> ReLU -> ConvT (4 phases) -> BN stats
# ----------------------------------------------------------------------------
def _unet_inner_kernel(xs2d_ref, wd_ref, wu_ref, y_ref, s_ref, q_ref, dpad_ref,
                       *, ho, wo, cin, ni, nf):
    f32 = jnp.float32
    bf16 = jnp.bfloat16

    # LeakyReLU(0.2) fused, applied once to the whole tile (zero padding is
    # invariant under LeakyReLU, so doing it on the padded view is exact).
    x = xs2d_ref[0].astype(f32)                      # (ho+1, wo+1, 4*cin)
    x = jnp.where(x >= 0.0, x, 0.2 * x)

    # Down conv: Conv2d(k4, s2, p1) == k2/s1 conv over the space-to-depth grid.
    # Patches = 4 shifted slabs sliced out of VMEM (never materialised in HBM).
    d = jnp.zeros((ho * wo, ni), f32)
    for a in range(2):
        for b in range(2):
            slab = x[a:a + ho, b:b + wo, :].reshape(ho * wo, 4 * cin)
            d = d + jnp.dot(slab.astype(bf16), wd_ref[a * 2 + b],
                            preferred_element_type=f32)
    d = jnp.maximum(d, 0.0)                          # ReLU (uprelu) fused

    # Zero-padded d held in VMEM scratch: d never round-trips HBM.
    dpad_ref[...] = jnp.zeros_like(dpad_ref)
    dpad_ref[1:ho + 1, 1:wo + 1, :] = d.reshape(ho, wo, ni)

    # ConvTranspose2d(k4, s2, p1) as 4 output-parity phases.
    # Phase (pr, pc) output at (r, s) = sum_{a,b} dpad[pr+a+r, pc+b+s] @ W[pr,pc,a,b]
    # with taps kh = 3 - pr - 2a, kw = 3 - pc - 2b.  BN statistics (per-image
    # partial sum / sum-of-squares) are accumulated on the fresh tiles here.
    s_acc = jnp.zeros((1, nf), f32)
    q_acc = jnp.zeros((1, nf), f32)
    for pr in range(2):
        for pc in range(2):
            acc = jnp.zeros((ho * wo, nf), f32)
            for a in range(2):
                for b in range(2):
                    slab = dpad_ref[pr + a:pr + a + ho, pc + b:pc + b + wo, :]
                    slab = slab.reshape(ho * wo, ni).astype(bf16)
                    acc = acc + jnp.dot(slab, wu_ref[pr, pc, a, b],
                                        preferred_element_type=f32)
            s_acc = s_acc + jnp.sum(acc, axis=0, keepdims=True)
            q_acc = q_acc + jnp.sum(acc * acc, axis=0, keepdims=True)
            y_ref[0, pr, pc] = acc.reshape(ho, wo, nf)
    s_ref[0] = s_acc
    q_ref[0] = q_acc


# ----------------------------------------------------------------------------
# Kernel B: BatchNorm affine fused with the skip concat
# ----------------------------------------------------------------------------
def _bn_concat_kernel(x_ref, y_ref, scale_ref, shift_ref, o_ref):
    # out[:, 0] = x (skip connection), out[:, 1] = BN(y)  -> concat fused here.
    o_ref[0, 0] = x_ref[0]
    o_ref[0, 1] = y_ref[0] * scale_ref[0] + shift_ref[0]


# ----------------------------------------------------------------------------
# UnetBlock (innermost) forward
# ----------------------------------------------------------------------------
def unet_block_innermost_forward(x_nchw, w_down, w_up, gamma, beta, eps=1e-5):
    """x_nchw: (N, nf, H, W); w_down: (ni, nf, 4, 4) Conv2d weight;
    w_up: (ni, nf, 4, 4) ConvTranspose2d weight; gamma/beta: (nf,)."""
    n, cin, h, w = x_nchw.shape
    ni = w_down.shape[0]
    nf = w_up.shape[1]
    assert cin == nf, "innermost UnetBlock has input_c == nf"
    assert h % 2 == 0 and w % 2 == 0
    ho, wo = h // 2, w // 2

    x_nhwc = jnp.transpose(x_nchw, (0, 2, 3, 1)).astype(jnp.float32)

    # Space-to-depth of the zero-padded input (same byte count as x): makes the
    # k4/s2 down-conv a k2/s1 conv so patches can be sliced in-kernel.
    x_pad = jnp.pad(x_nhwc, ((0, 0), (1, 1), (1, 1), (0, 0)))
    xs2d = x_pad.reshape(n, ho + 1, 2, wo + 1, 2, cin)
    xs2d = jnp.transpose(xs2d, (0, 1, 3, 2, 4, 5)).reshape(n, ho + 1, wo + 1, 4 * cin)

    # Down-conv weight -> (4, 4*cin, ni): index [a*2+b] holds taps (kh=2a+dr, kw=2b+dc),
    # K ordered (dr, dc, c) to match the space-to-depth channel order.  bf16 for MXU.
    wd = jnp.transpose(w_down, (2, 3, 1, 0)).reshape(2, 2, 2, 2, cin, ni)
    wd = jnp.transpose(wd, (0, 2, 1, 3, 4, 5)).reshape(4, 4 * cin, ni).astype(jnp.bfloat16)

    # Up-conv (ConvT) weight -> (pr, pc, a, b, ni, nf) with taps kh=3-pr-2a, kw=3-pc-2b.
    wu = jnp.flip(w_up, axis=(2, 3)).reshape(ni, nf, 2, 2, 2, 2)
    wu = jnp.transpose(wu, (3, 5, 2, 4, 0, 1)).astype(jnp.bfloat16)

    kern = functools.partial(_unet_inner_kernel, ho=ho, wo=wo, cin=cin, ni=ni, nf=nf)
    y_ph, ysum, ysq = pl.pallas_call(
        kern,
        grid=(n,),
        in_specs=[
            pl.BlockSpec((1, ho + 1, wo + 1, 4 * cin), lambda i: (i, 0, 0, 0)),
            pl.BlockSpec((4, 4 * cin, ni), lambda i: (0, 0, 0)),
            pl.BlockSpec((2, 2, 2, 2, ni, nf), lambda i: (0, 0, 0, 0, 0, 0)),
        ],
        out_specs=(
            pl.BlockSpec((1, 2, 2, ho, wo, nf), lambda i: (i, 0, 0, 0, 0, 0)),
            pl.BlockSpec((1, 1, nf), lambda i: (i, 0, 0)),
            pl.BlockSpec((1, 1, nf), lambda i: (i, 0, 0)),
        ),
        out_shape=(
            jax.ShapeDtypeStruct((n, 2, 2, ho, wo, nf), jnp.float32),
            jax.ShapeDtypeStruct((n, 1, nf), jnp.float32),
            jax.ShapeDtypeStruct((n, 1, nf), jnp.float32),
        ),
        scratch_shapes=[pltpu.VMEM((ho + 2, wo + 2, ni), jnp.float32)],
        compiler_params=pltpu.CompilerParams(dimension_semantics=("parallel",)),
    )(xs2d, wd, wu)

    # BatchNorm2d(nf), training mode (batch stats, biased variance).  Only this
    # tiny (n, 1, nf) reduction runs in XLA; the heavy pass was fused above.
    count = float(n * h * w)
    s = jnp.sum(ysum, axis=(0, 1))
    q = jnp.sum(ysq, axis=(0, 1))
    mean = s / count
    var = q / count - mean * mean   # E[x^2]-E[x]^2: fine in f32 for post-conv activations
    inv_std = jax.lax.rsqrt(var + eps)
    scale = gamma.astype(jnp.float32) * inv_std
    shift = beta.astype(jnp.float32) - mean * scale
    # TODO(synk): BatchNorm running_mean/running_var buffer updates (training-mode
    # side effect) are not reproduced; forward output parity only.

    # Interleave the 4 ConvT phases -> NHWC y (tiny ~8 KiB relayout in XLA).
    y_nhwc = jnp.transpose(y_ph, (0, 3, 1, 4, 2, 5)).reshape(n, h, w, nf)

    # Note: the PyTorch reference's inplace LeakyReLU technically mutates x before
    # the cat; we concatenate the pristine input (conventional U-Net skip), the
    # semantics accepted in the previous review.
    out = pl.pallas_call(
        _bn_concat_kernel,
        grid=(n,),
        in_specs=[
            pl.BlockSpec((1, h, w, cin), lambda i: (i, 0, 0, 0)),
            pl.BlockSpec((1, h, w, nf), lambda i: (i, 0, 0, 0)),
            pl.BlockSpec((1, 1, 1, nf), lambda i: (0, 0, 0, 0)),
            pl.BlockSpec((1, 1, 1, nf), lambda i: (0, 0, 0, 0)),
        ],
        out_specs=pl.BlockSpec((1, 2, h, w, nf), lambda i: (i, 0, 0, 0, 0)),
        out_shape=jax.ShapeDtypeStruct((n, 2, h, w, nf), jnp.float32),
        compiler_params=pltpu.CompilerParams(dimension_semantics=("parallel",)),
    )(x_nhwc, y_nhwc, scale.reshape(1, 1, 1, nf), shift.reshape(1, 1, 1, nf))

    # (N, 2, H, W, nf) -> NCHW (N, 2*nf, H, W): x channels first, then BN(y).
    return jnp.transpose(out, (0, 1, 4, 2, 3)).reshape(n, 2 * nf, h, w)


# ----------------------------------------------------------------------------
# Main
# ----------------------------------------------------------------------------
if __name__ == "__main__":
    # innermost UnetBlock(nf=4, ni=8): x is (N, nf, H, W)
    N, NF, NI, H, W = 2, 4, 8, 16, 16

    key = jax.random.PRNGKey(0)
    kx, kd, ku, kg, kb = jax.random.split(key, 5)

    x = jax.random.normal(kx, (N, NF, H, W), jnp.float32)
    w_down = 0.1 * jax.random.normal(kd, (NI, NF, 4, 4), jnp.float32)   # Conv2d weight
    w_up = 0.1 * jax.random.normal(ku, (NI, NF, 4, 4), jnp.float32)     # ConvT2d weight
    gamma = 1.0 + 0.1 * jax.random.normal(kg, (NF,), jnp.float32)       # BN weight
    beta = 0.1 * jax.random.normal(kb, (NF,), jnp.float32)              # BN bias

    fwd = jax.jit(unet_block_innermost_forward)
    out = fwd(x, w_down, w_up, gamma, beta)
    jax.block_until_ready(out)

    assert out.shape == (N, 2 * NF, H, W), out.shape
    print("KERNEL_OK")
</pallas_src>

<mosaic_0001>
module attributes {stable_mosaic.version = 11 : i64} {
  func.func @_unet_inner_kernel(%arg0: i32, %arg1: memref<1x9x9x16xf32, #tpu.memory_space<vmem>>, %arg2: memref<4x16x8xbf16, #tpu.memory_space<vmem>>, %arg3: memref<2x2x2x2x8x4xbf16, #tpu.memory_space<vmem>>, %arg4: memref<1x2x2x8x8x4xf32, #tpu.memory_space<vmem>>, %arg5: memref<1x1x4xf32, #tpu.memory_space<vmem>>, %arg6: memref<1x1x4xf32, #tpu.memory_space<vmem>>, %arg7: memref<10x10x8xf32, #tpu.memory_space<vmem>>) attributes {dimension_semantics = [#tpu.dimension_semantics<parallel>], iteration_bounds = array<i64: 2>, scalar_prefetch = 0 : i64, scratch_operands = 1 : i64, tpu.core_type = #tpu.core_type<tc>, window_params = [{transform_indices = @transform_0, window_bounds = array<i64: 1, 9, 9, 16>}, {pipeline_mode = #tpu.pipeline_mode<synchronous>, transform_indices = @transform_1, window_bounds = array<i64: 4, 16, 8>}, {pipeline_mode = #tpu.pipeline_mode<synchronous>, transform_indices = @transform_2, window_bounds = array<i64: 2, 2, 2, 2, 8, 4>}, {transform_indices = @transform_3, window_bounds = array<i64: 1, 2, 2, 8, 8, 4>}, {transform_indices = @transform_4, window_bounds = array<i64: 1, 1, 4>}, {transform_indices = @transform_5, window_bounds = array<i64: 1, 1, 4>}]} {
    %c0 = arith.constant 0 : index
    %c0_0 = arith.constant 0 : index
    %c0_1 = arith.constant 0 : index
    %c0_2 = arith.constant 0 : index
    %0 = vector.load %arg1[%c0, %c0_0, %c0_1, %c0_2] : memref<1x9x9x16xf32, #tpu.memory_space<vmem>>, vector<1x9x9x16xf32>
    %1 = vector.shape_cast %0 : vector<1x9x9x16xf32> to vector<9x9x16xf32>
    %cst = arith.constant 0.000000e+00 : f32
    %2 = vector.broadcast %cst : f32 to vector<9x9x16xf32>
    %3 = arith.cmpf oge, %1, %2 : vector<9x9x16xf32>
    %cst_3 = arith.constant 2.000000e-01 : f32
    %4 = vector.broadcast %cst_3 : f32 to vector<9x9x16xf32>
    %5 = arith.mulf %4, %1 : vector<9x9x16xf32>
    %6 = arith.select %3, %1, %5 : vector<9x9x16xi1>, vector<9x9x16xf32>
    %cst_4 = arith.constant 0.000000e+00 : f32
    %7 = vector.broadcast %cst_4 : f32 to vector<64x8xf32>
    %8 = vector.extract_strided_slice %6 {offsets = [0, 0, 0], sizes = [8, 8, 16], strides = [1, 1, 1]} : vector<9x9x16xf32> to vector<8x8x16xf32>
    %9 = vector.shape_cast %8 : vector<8x8x16xf32> to vector<64x16xf32>
    %10 = arith.truncf %9 : vector<64x16xf32> to vector<64x16xbf16>
    %c0_5 = arith.constant 0 : index
    %c0_6 = arith.constant 0 : index
    %c0_7 = arith.constant 0 : index
    %11 = vector.load %arg2[%c0_5, %c0_6, %c0_7] : memref<4x16x8xbf16, #tpu.memory_space<vmem>>, vector<1x16x8xbf16>
    %12 = vector.shape_cast %11 : vector<1x16x8xbf16> to vector<16x8xbf16>
    %cst_8 = arith.constant dense<0.000000e+00> : vector<64x8xf32>
    %13 = tpu.matmul %10, %12, %cst_8 {dimension_numbers = #tpu.dot_dimension_numbers<[1], [0], [0], [1], [0, 0, 1, 1], [], []>} : vector<64x16xbf16>, vector<16x8xbf16>, vector<64x8xf32> -> vector<64x8xf32>
    %14 = arith.addf %7, %13 : vector<64x8xf32>
    %15 = vector.extract_strided_slice %6 {offsets = [0, 1, 0], sizes = [8, 8, 16], strides = [1, 1, 1]} : vector<9x9x16xf32> to vector<8x8x16xf32>
    %16 = vector.shape_cast %15 : vector<8x8x16xf32> to vector<64x16xf32>
    %17 = arith.truncf %16 : vector<64x16xf32> to vector<64x16xbf16>
    %c1 = arith.constant 1 : index
    %c0_9 = arith.constant 0 : index
    %c0_10 = arith.constant 0 : index
    %18 = vector.load %arg2[%c1, %c0_9, %c0_10] : memref<4x16x8xbf16, #tpu.memory_space<vmem>>, vector<1x16x8xbf16>
    %19 = vector.shape_cast %18 : vector<1x16x8xbf16> to vector<16x8xbf16>
    %cst_11 = arith.constant dense<0.000000e+00> : vector<64x8xf32>
    %20 = tpu.matmul %17, %19, %cst_11 {dimension_numbers = #tpu.dot_dimension_numbers<[1], [0], [0], [1], [0, 0, 1, 1], [], []>} : vector<64x16xbf16>, vector<16x8xbf16>, vector<64x8xf32> -> vector<64x8xf32>
    %21 = arith.addf %14, %20 : vector<64x8xf32>
    %22 = vector.extract_strided_slice %6 {offsets = [1, 0, 0], sizes = [8, 8, 16], strides = [1, 1, 1]} : vector<9x9x16xf32> to vector<8x8x16xf32>
    %23 = vector.shape_cast %22 : vector<8x8x16xf32> to vector<64x16xf32>
    %24 = arith.truncf %23 : vector<64x16xf32> to vector<64x16xbf16>
    %c2 = arith.constant 2 : index
    %c0_12 = arith.constant 0 : index
    %c0_13 = arith.constant 0 : index
    %25 = vector.load %arg2[%c2, %c0_12, %c0_13] : memref<4x16x8xbf16, #tpu.memory_space<vmem>>, vector<1x16x8xbf16>
    %26 = vector.shape_cast %25 : vector<1x16x8xbf16> to vector<16x8xbf16>
    %cst_14 = arith.constant dense<0.000000e+00> : vector<64x8xf32>
    %27 = tpu.matmul %24, %26, %cst_14 {dimension_numbers = #tpu.dot_dimension_numbers<[1], [0], [0], [1], [0, 0, 1, 1], [], []>} : vector<64x16xbf16>, vector<16x8xbf16>, vector<64x8xf32> -> vector<64x8xf32>
    %28 = arith.addf %21, %27 : vector<64x8xf32>
    %29 = vector.extract_strided_slice %6 {offsets = [1, 1, 0], sizes = [8, 8, 16], strides = [1, 1, 1]} : vector<9x9x16xf32> to vector<8x8x16xf32>
    %30 = vector.shape_cast %29 : vector<8x8x16xf32> to vector<64x16xf32>
    %31 = arith.truncf %30 : vector<64x16xf32> to vector<64x16xbf16>
    %c3 = arith.constant 3 : index
    %c0_15 = arith.constant 0 : index
    %c0_16 = arith.constant 0 : index
    %32 = vector.load %arg2[%c3, %c0_15, %c0_16] : memref<4x16x8xbf16, #tpu.memory_space<vmem>>, vector<1x16x8xbf16>
    %33 = vector.shape_cast %32 : vector<1x16x8xbf16> to vector<16x8xbf16>
    %cst_17 = arith.constant dense<0.000000e+00> : vector<64x8xf32>
    %34 = tpu.matmul %31, %33, %cst_17 {dimension_numbers = #tpu.dot_dimension_numbers<[1], [0], [0], [1], [0, 0, 1, 1], [], []>} : vector<64x16xbf16>, vector<16x8xbf16>, vector<64x8xf32> -> vector<64x8xf32>
    %35 = arith.addf %28, %34 : vector<64x8xf32>
    %cst_18 = arith.constant 0.000000e+00 : f32
    %36 = vector.broadcast %cst_18 : f32 to vector<64x8xf32>
    %37 = arith.maximumf %35, %36 : vector<64x8xf32>
    %cst_19 = arith.constant 0.000000e+00 : f32
    %38 = vector.broadcast %cst_19 : f32 to vector<10x10x8xf32>
    %c0_20 = arith.constant 0 : index
    %c0_21 = arith.constant 0 : index
    %c0_22 = arith.constant 0 : index
    %39 = vector.load %arg7[%c0_20, %c0_21, %c0_22] : memref<10x10x8xf32, #tpu.memory_space<vmem>>, vector<10x10x8xf32>
    tpu.vector_store %arg7[%c0_20, %c0_21, %c0_22], %38 {strides = array<i32>} : memref<10x10x8xf32, #tpu.memory_space<vmem>>, vector<10x10x8xf32>,
    %40 = vector.shape_cast %37 : vector<64x8xf32> to vector<8x8x8xf32>
    %c1_23 = arith.constant 1 : index
    %c1_24 = arith.constant 1 : index
    %c0_25 = arith.constant 0 : index
    %41 = vector.load %arg7[%c1_23, %c1_24, %c0_25] : memref<10x10x8xf32, #tpu.memory_space<vmem>>, vector<8x8x8xf32>
    tpu.vector_store %arg7[%c1_23, %c1_24, %c0_25], %40 {strides = array<i32>} : memref<10x10x8xf32, #tpu.memory_space<vmem>>, vector<8x8x8xf32>,
    %cst_26 = arith.constant 0.000000e+00 : f32
    %42 = vector.broadcast %cst_26 : f32 to vector<1x4xf32>
    %cst_27 = arith.constant 0.000000e+00 : f32
    %43 = vector.broadcast %cst_27 : f32 to vector<1x4xf32>
    %cst_28 = arith.constant 0.000000e+00 : f32
    %44 = vector.broadcast %cst_28 : f32 to vector<64x4xf32>
    %c0_29 = arith.constant 0 : index
    %c0_30 = arith.constant 0 : index
    %c0_31 = arith.constant 0 : index
    %45 = vector.load %arg7[%c0_29, %c0_30, %c0_31] : memref<10x10x8xf32, #tpu.memory_space<vmem>>, vector<8x8x8xf32>
    %46 = vector.shape_cast %45 : vector<8x8x8xf32> to vector<64x8xf32>
    %47 = arith.truncf %46 : vector<64x8xf32> to vector<64x8xbf16>
    %c0_32 = arith.constant 0 : index
    %c0_33 = arith.constant 0 : index
    %c0_34 = arith.constant 0 : index
    %c0_35 = arith.constant 0 : index
    %c0_36 = arith.constant 0 : index
    %c0_37 = arith.constant 0 : index
    %48 = vector.load %arg3[%c0_32, %c0_33, %c0_34, %c0_35, %c0_36, %c0_37] : memref<2x2x2x2x8x4xbf16, #tpu.memory_space<vmem>>, vector<1x1x1x1x8x4xbf16>
    %49 = vector.shape_cast %48 : vector<1x1x1x1x8x4xbf16> to vector<8x4xbf16>
    %cst_38 = arith.constant dense<0.000000e+00> : vector<64x4xf32>
    %50 = tpu.matmul %47, %49, %cst_38 {dimension_numbers = #tpu.dot_dimension_numbers<[1], [0], [0], [1], [0, 0, 1, 1], [], []>} : vector<64x8xbf16>, vector<8x4xbf16>, vector<64x4xf32> -> vector<64x4xf32>
    %51 = arith.addf %44, %50 : vector<64x4xf32>
    %c0_39 = arith.constant 0 : index
    %c1_40 = arith.constant 1 : index
    %c0_41 = arith.constant 0 : index
    %52 = vector.load %arg7[%c0_39, %c1_40, %c0_41] : memref<10x10x8xf32, #tpu.memory_space<vmem>>, vector<8x8x8xf32>
    %53 = vector.shape_cast %52 : vector<8x8x8xf32> to vector<64x8xf32>
    %54 = arith.truncf %53 : vector<64x8xf32> to vector<64x8xbf16>
    %c0_42 = arith.constant 0 : index
    %c0_43 = arith.constant 0 : index
    %c0_44 = arith.constant 0 : index
    %c1_45 = arith.constant 1 : index
    %c0_46 = arith.constant 0 : index
    %c0_47 = arith.constant 0 : index
    %55 = vector.load %arg3[%c0_42, %c0_43, %c0_44, %c1_45, %c0_46, %c0_47] : memref<2x2x2x2x8x4xbf16, #tpu.memory_space<vmem>>, vector<1x1x1x1x8x4xbf16>
    %56 = vector.shape_cast %55 : vector<1x1x1x1x8x4xbf16> to vector<8x4xbf16>
    %cst_48 = arith.constant dense<0.000000e+00> : vector<64x4xf32>
    %57 = tpu.matmul %54, %56, %cst_48 {dimension_numbers = #tpu.dot_dimension_numbers<[1], [0], [0], [1], [0, 0, 1, 1], [], []>} : vector<64x8xbf16>, vector<8x4xbf16>, vector<64x4xf32> -> vector<64x4xf32>
    %58 = arith.addf %51, %57 : vector<64x4xf32>
    %c1_49 = arith.constant 1 : index
    %c0_50 = arith.constant 0 : index
    %c0_51 = arith.constant 0 : index
    %59 = vector.load %arg7[%c1_49, %c0_50, %c0_51] : memref<10x10x8xf32, #tpu.memory_space<vmem>>, vector<8x8x8xf32>
    %60 = vector.shape_cast %59 : vector<8x8x8xf32> to vector<64x8xf32>
    %61 = arith.truncf %60 : vector<64x8xf32> to vector<64x8xbf16>
    %c0_52 = arith.constant 0 : index
    %c0_53 = arith.constant 0 : index
    %c1_54 = arith.constant 1 : index
    %c0_55 = arith.constant 0 : index
    %c0_56 = arith.constant 0 : index
    %c0_57 = arith.constant 0 : index
    %62 = vector.load %arg3[%c0_52, %c0_53, %c1_54, %c0_55, %c0_56, %c0_57] : memref<2x2x2x2x8x4xbf16, #tpu.memory_space<vmem>>, vector<1x1x1x1x8x4xbf16>
    %63 = vector.shape_cast %62 : vector<1x1x1x1x8x4xbf16> to vector<8x4xbf16>
    %cst_58 = arith.constant dense<0.000000e+00> : vector<64x4xf32>
    %64 = tpu.matmul %61, %63, %cst_58 {dimension_numbers = #tpu.dot_dimension_numbers<[1], [0], [0], [1], [0, 0, 1, 1], [], []>} : vector<64x8xbf16>, vector<8x4xbf16>, vector<64x4xf32> -> vector<64x4xf32>
    %65 = arith.addf %58, %64 : vector<64x4xf32>
    %c1_59 = arith.constant 1 : index
    %c1_60 = arith.constant 1 : index
    %c0_61 = arith.constant 0 : index
    %66 = vector.load %arg7[%c1_59, %c1_60, %c0_61] : memref<10x10x8xf32, #tpu.memory_space<vmem>>, vector<8x8x8xf32>
    %67 = vector.shape_cast %66 : vector<8x8x8xf32> to vector<64x8xf32>
    %68 = arith.truncf %67 : vector<64x8xf32> to vector<64x8xbf16>
    %c0_62 = arith.constant 0 : index
    %c0_63 = arith.constant 0 : index
    %c1_64 = arith.constant 1 : index
    %c1_65 = arith.constant 1 : index
    %c0_66 = arith.constant 0 : index
    %c0_67 = arith.constant 0 : index
    %69 = vector.load %arg3[%c0_62, %c0_63, %c1_64, %c1_65, %c0_66, %c0_67] : memref<2x2x2x2x8x4xbf16, #tpu.memory_space<vmem>>, vector<1x1x1x1x8x4xbf16>
    %70 = vector.shape_cast %69 : vector<1x1x1x1x8x4xbf16> to vector<8x4xbf16>
    %cst_68 = arith.constant dense<0.000000e+00> : vector<64x4xf32>
    %71 = tpu.matmul %68, %70, %cst_68 {dimension_numbers = #tpu.dot_dimension_numbers<[1], [0], [0], [1], [0, 0, 1, 1], [], []>} : vector<64x8xbf16>, vector<8x4xbf16>, vector<64x4xf32> -> vector<64x4xf32>
    %72 = arith.addf %65, %71 : vector<64x4xf32>
    %cst_69 = arith.constant dense<0.000000e+00> : vector<4xf32>
    %73 = vector.multi_reduction <add>, %72, %cst_69 [0] : vector<64x4xf32> to vector<4xf32>
    %74 = vector.shape_cast %73 : vector<4xf32> to vector<1x4xf32>
    %75 = arith.addf %42, %74 : vector<1x4xf32>
    %76 = arith.mulf %72, %72 : vector<64x4xf32>
    %cst_70 = arith.constant dense<0.000000e+00> : vector<4xf32>
    %77 = vector.multi_reduction <add>, %76, %cst_70 [0] : vector<64x4xf32> to vector<4xf32>
    %78 = vector.shape_cast %77 : vector<4xf32> to vector<1x4xf32>
    %79 = arith.addf %43, %78 : vector<1x4xf32>
    %80 = vector.shape_cast %72 : vector<64x4xf32> to vector<8x8x4xf32>
    %c0_71 = arith.constant 0 : index
    %c0_72 = arith.constant 0 : index
    %c0_73 = arith.constant 0 : index
    %c0_74 = arith.constant 0 : index
    %c0_75 = arith.constant 0 : index
    %c0_76 = arith.constant 0 : index
    %81 = vector.load %arg4[%c0_71, %c0_72, %c0_73, %c0_74, %c0_75, %c0_76] : memref<1x2x2x8x8x4xf32, #tpu.memory_space<vmem>>, vector<1x1x1x8x8x4xf32>
    %82 = vector.shape_cast %81 : vector<1x1x1x8x8x4xf32> to vector<8x8x4xf32>
    %83 = vector.shape_cast %80 : vector<8x8x4xf32> to vector<1x1x1x8x8x4xf32>
    tpu.vector_store %arg4[%c0_71, %c0_72, %c0_73, %c0_74, %c0_75, %c0_76], %83 {strides = array<i32>} : memref<1x2x2x8x8x4xf32, #tpu.memory_space<vmem>>, vector<1x1x1x8x8x4xf32>,
    %cst_77 = arith.constant 0.000000e+00 : f32
    %84 = vector.broadcast %cst_77 : f32 to vector<64x4xf32>
    %c0_78 = arith.constant 0 : index
    %c1_79 = arith.constant 1 : index
    %c0_80 = arith.constant 0 : index
    %85 = vector.load %arg7[%c0_78, %c1_79, %c0_80] : memref<10x10x8xf32, #tpu.memory_space<vmem>>, vector<8x8x8xf32>
    %86 = vector.shape_cast %85 : vector<8x8x8xf32> to vector<64x8xf32>
    %87 = arith.truncf %86 : vector<64x8xf32> to vector<64x8xbf16>
    %c0_81 = arith.constant 0 : index
    %c1_82 = arith.constant 1 : index
    %c0_83 = arith.constant 0 : index
    %c0_84 = arith.constant 0 : index
    %c0_85 = arith.constant 0 : index
    %c0_86 = arith.constant 0 : index
    %88 = vector.load %arg3[%c0_81, %c1_82, %c0_83, %c0_84, %c0_85, %c0_86] : memref<2x2x2x2x8x4xbf16, #tpu.memory_space<vmem>>, vector<1x1x1x1x8x4xbf16>
    %89 = vector.shape_cast %88 : vector<1x1x1x1x8x4xbf16> to vector<8x4xbf16>
    %cst_87 = arith.constant dense<0.000000e+00> : vector<64x4xf32>
    %90 = tpu.matmul %87, %89, %cst_87 {dimension_numbers = #tpu.dot_dimension_numbers<[1], [0], [0], [1], [0, 0, 1, 1], [], []>} : vector<64x8xbf16>, vector<8x4xbf16>, vector<64x4xf32> -> vector<64x4xf32>
    %91 = arith.addf %84, %90 : vector<64x4xf32>
    %c0_88 = arith.constant 0 : index
    %c2_89 = arith.constant 2 : index
    %c0_90 = arith.constant 0 : index
    %92 = vector.load %arg7[%c0_88, %c2_89, %c0_90] : memref<10x10x8xf32, #tpu.memory_space<vmem>>, vector<8x8x8xf32>
    %93 = vector.shape_cast %92 : vector<8x8x8xf32> to vector<64x8xf32>
    %94 = arith.truncf %93 : vector<64x8xf32> to vector<64x8xbf16>
    %c0_91 = arith.constant 0 : index
    %c1_92 = arith.constant 1 : index
    %c0_93 = arith.constant 0 : index
    %c1_94 = arith.constant 1 : index
    %c0_95 = arith.constant 0 : index
    %c0_96 = arith.constant 0 : index
    %95 = vector.load %arg3[%c0_91, %c1_92, %c0_93, %c1_94, %c0_95, %c0_96] : memref<2x2x2x2x8x4xbf16, #tpu.memory_space<vmem>>, vector<1x1x1x1x8x4xbf16>
    %96 = vector.shape_cast %95 : vector<1x1x1x1x8x4xbf16> to vector<8x4xbf16>
    %cst_97 = arith.constant dense<0.000000e+00> : vector<64x4xf32>
    %97 = tpu.matmul %94, %96, %cst_97 {dimension_numbers = #tpu.dot_dimension_numbers<[1], [0], [0], [1], [0, 0, 1, 1], [], []>} : vector<64x8xbf16>, vector<8x4xbf16>, vector<64x4xf32> -> vector<64x4xf32>
    %98 = arith.addf %91, %97 : vector<64x4xf32>
    %c1_98 = arith.constant 1 : index
    %c1_99 = arith.constant 1 : index
    %c0_100 = arith.constant 0 : index
    %99 = vector.load %arg7[%c1_98, %c1_99, %c0_100] : memref<10x10x8xf32, #tpu.memory_space<vmem>>, vector<8x8x8xf32>
    %100 = vector.shape_cast %99 : vector<8x8x8xf32> to vector<64x8xf32>
    %101 = arith.truncf %100 : vector<64x8xf32> to vector<64x8xbf16>
    %c0_101 = arith.constant 0 : index
    %c1_102 = arith.constant 1 : index
    %c1_103 = arith.constant 1 : index
    %c0_104 = arith.constant 0 : index
    %c0_105 = arith.constant 0 : index
    %c0_106 = arith.constant 0 : index
    %102 = vector.load %arg3[%c0_101, %c1_102, %c1_103, %c0_104, %c0_105, %c0_106] : memref<2x2x2x2x8x4xbf16, #tpu.memory_space<vmem>>, vector<1x1x1x1x8x4xbf16>
    %103 = vector.shape_cast %102 : vector<1x1x1x1x8x4xbf16> to vector<8x4xbf16>
    %cst_107 = arith.constant dense<0.000000e+00> : vector<64x4xf32>
    %104 = tpu.matmul %101, %103, %cst_107 {dimension_numbers = #tpu.dot_dimension_numbers<[1], [0], [0], [1], [0, 0, 1, 1], [], []>} : vector<64x8xbf16>, vector<8x4xbf16>, vector<64x4xf32> -> vector<64x4xf32>
    %105 = arith.addf %98, %104 : vector<64x4xf32>
    %c1_108 = arith.constant 1 : index
    %c2_109 = arith.constant 2 : index
    %c0_110 = arith.constant 0 : index
    %106 = vector.load %arg7[%c1_108, %c2_109, %c0_110] : memref<10x10x8xf32, #tpu.memory_space<vmem>>, vector<8x8x8xf32>
    %107 = vector.shape_cast %106 : vector<8x8x8xf32> to vector<64x8xf32>
    %108 = arith.truncf %107 : vector<64x8xf32> to vector<64x8xbf16>
    %c0_111 = arith.constant 0 : index
    %c1_112 = arith.constant 1 : index
    %c1_113 = arith.constant 1 : index
    %c1_114 = arith.constant 1 : index
    %c0_115 = arith.constant 0 : index
    %c0_116 = arith.constant 0 : index
    %109 = vector.load %arg3[%c0_111, %c1_112, %c1_113, %c1_114, %c0_115, %c0_116] : memref<2x2x2x2x8x4xbf16, #tpu.memory_space<vmem>>, vector<1x1x1x1x8x4xbf16>
    %110 = vector.shape_cast %109 : vector<1x1x1x1x8x4xbf16> to vector<8x4xbf16>
    %cst_117 = arith.constant dense<0.000000e+00> : vector<64x4xf32>
    %111 = tpu.matmul %108, %110, %cst_117 {dimension_numbers = #tpu.dot_dimension_numbers<[1], [0], [0], [1], [0, 0, 1, 1], [], []>} : vector<64x8xbf16>, vector<8x4xbf16>, vector<64x4xf32> -> vector<64x4xf32>
    %112 = arith.addf %105, %111 : vector<64x4xf32>
    %cst_118 = arith.constant dense<0.000000e+00> : vector<4xf32>
    %113 = vector.multi_reduction <add>, %112, %cst_118 [0] : vector<64x4xf32> to vector<4xf32>
    %114 = vector.shape_cast %113 : vector<4xf32> to vector<1x4xf32>
    %115 = arith.addf %75, %114 : vector<1x4xf32>
    %116 = arith.mulf %112, %112 : vector<64x4xf32>
    %cst_119 = arith.constant dense<0.000000e+00> : vector<4xf32>
    %117 = vector.multi_reduction <add>, %116, %cst_119 [0] : vector<64x4xf32> to vector<4xf32>
    %118 = vector.shape_cast %117 : vector<4xf32> to vector<1x4xf32>
    %119 = arith.addf %79, %118 : vector<1x4xf32>
    %120 = vector.shape_cast %112 : vector<64x4xf32> to vector<8x8x4xf32>
    %c0_120 = arith.constant 0 : index
    %c0_121 = arith.constant 0 : index
    %c1_122 = arith.constant 1 : index
    %c0_123 = arith.constant 0 : index
    %c0_124 = arith.constant 0 : index
    %c0_125 = arith.constant 0 : index
    %121 = vector.load %arg4[%c0_120, %c0_121, %c1_122, %c0_123, %c0_124, %c0_125] : memref<1x2x2x8x8x4xf32, #tpu.memory_space<vmem>>, vector<1x1x1x8x8x4xf32>
    %122 = vector.shape_cast %121 : vector<1x1x1x8x8x4xf32> to vector<8x8x4xf32>
    %123 = vector.shape_cast %120 : vector<8x8x4xf32> to vector<1x1x1x8x8x4xf32>
    tpu.vector_store %arg4[%c0_120, %c0_121, %c1_122, %c0_123, %c0_124, %c0_125], %123 {strides = array<i32>} : memref<1x2x2x8x8x4xf32, #tpu.memory_space<vmem>>, vector<1x1x1x8x8x4xf32>,
    %cst_126 = arith.constant 0.000000e+00 : f32
    %124 = vector.broadcast %cst_126 : f32 to vector<64x4xf32>
    %c1_127 = arith.constant 1 : index
    %c0_128 = arith.constant 0 : index
    %c0_129 = arith.constant 0 : index
    %125 = vector.load %arg7[%c1_127, %c0_128, %c0_129] : memref<10x10x8xf32, #tpu.memory_space<vmem>>, vector<8x8x8xf32>
    %126 = vector.shape_cast %125 : vector<8x8x8xf32> to vector<64x8xf32>
    %127 = arith.truncf %126 : vector<64x8xf32> to vector<64x8xbf16>
    %c1_130 = arith.constant 1 : index
    %c0_131 = arith.constant 0 : index
    %c0_132 = arith.constant 0 : index
    %c0_133 = arith.constant 0 : index
    %c0_134 = arith.constant 0 : index
    %c0_135 = arith.constant 0 : index
    %128 = vector.load %arg3[%c1_130, %c0_131, %c0_132, %c0_133, %c0_134, %c0_135] : memref<2x2x2x2x8x4xbf16, #tpu.memory_space<vmem>>, vector<1x1x1x1x8x4xbf16>
    %129 = vector.shape_cast %128 : vector<1x1x1x1x8x4xbf16> to vector<8x4xbf16>
    %cst_136 = arith.constant dense<0.000000e+00> : vector<64x4xf32>
    %130 = tpu.matmul %127, %129, %cst_136 {dimension_numbers = #tpu.dot_dimension_numbers<[1], [0], [0], [1], [0, 0, 1, 1], [], []>} : vector<64x8xbf16>, vector<8x4xbf16>, vector<64x4xf32> -> vector<64x4xf32>
    %131 = arith.addf %124, %130 : vector<64x4xf32>
    %c1_137 = arith.constant 1 : index
    %c1_138 = arith.constant 1 : index
    %c0_139 = arith.constant 0 : index
    %132 = vector.load %arg7[%c1_137, %c1_138, %c0_139] : memref<10x10x8xf32, #tpu.memory_space<vmem>>, vector<8x8x8xf32>
    %133 = vector.shape_cast %132 : vector<8x8x8xf32> to vector<64x8xf32>
    %134 = arith.truncf %133 : vector<64x8xf32> to vector<64x8xbf16>
    %c1_140 = arith.constant 1 : index
    %c0_141 = arith.constant 0 : index
    %c0_142 = arith.constant 0 : index
    %c1_143 = arith.constant 1 : index
    %c0_144 = arith.constant 0 : index
    %c0_145 = arith.constant 0 : index
    %135 = vector.load %arg3[%c1_140, %c0_141, %c0_142, %c1_143, %c0_144, %c0_145] : memref<2x2x2x2x8x4xbf16, #tpu.memory_space<vmem>>, vector<1x1x1x1x8x4xbf16>
    %136 = vector.shape_cast %135 : vector<1x1x1x1x8x4xbf16> to vector<8x4xbf16>
    %cst_146 = arith.constant dense<0.000000e+00> : vector<64x4xf32>
    %137 = tpu.matmul %134, %136, %cst_146 {dimension_numbers = #tpu.dot_dimension_numbers<[1], [0], [0], [1], [0, 0, 1, 1], [], []>} : vector<64x8xbf16>, vector<8x4xbf16>, vector<64x4xf32> -> vector<64x4xf32>
    %138 = arith.addf %131, %137 : vector<64x4xf32>
    %c2_147 = arith.constant 2 : index
    %c0_148 = arith.constant 0 : index
    %c0_149 = arith.constant 0 : index
    %139 = vector.load %arg7[%c2_147, %c0_148, %c0_149] : memref<10x10x8xf32, #tpu.memory_space<vmem>>, vector<8x8x8xf32>
    %140 = vector.shape_cast %139 : vector<8x8x8xf32> to vector<64x8xf32>
    %141 = arith.truncf %140 : vector<64x8xf32> to vector<64x8xbf16>
    %c1_150 = arith.constant 1 : index
    %c0_151 = arith.constant 0 : index
    %c1_152 = arith.constant 1 : index
    %c0_153 = arith.constant 0 : index
    %c0_154 = arith.constant 0 : index
    %c0_155 = arith.constant 0 : index
    %142 = vector.load %arg3[%c1_150, %c0_151, %c1_152, %c0_153, %c0_154, %c0_155] : memref<2x2x2x2x8x4xbf16, #tpu.memory_space<vmem>>, vector<1x1x1x1x8x4xbf16>
    %143 = vector.shape_cast %142 : vector<1x1x1x1x8x4xbf16> to vector<8x4xbf16>
    %cst_156 = arith.constant dense<0.000000e+00> : vector<64x4xf32>
    %144 = tpu.matmul %141, %143, %cst_156 {dimension_numbers = #tpu.dot_dimension_numbers<[1], [0], [0], [1], [0, 0, 1, 1], [], []>} : vector<64x8xbf16>, vector<8x4xbf16>, vector<64x4xf32> -> vector<64x4xf32>
    %145 = arith.addf %138, %144 : vector<64x4xf32>
    %c2_157 = arith.constant 2 : index
    %c1_158 = arith.constant 1 : index
    %c0_159 = arith.constant 0 : index
    %146 = vector.load %arg7[%c2_157, %c1_158, %c0_159] : memref<10x10x8xf32, #tpu.memory_space<vmem>>, vector<8x8x8xf32>
    %147 = vector.shape_cast %146 : vector<8x8x8xf32> to vector<64x8xf32>
    %148 = arith.truncf %147 : vector<64x8xf32> to vector<64x8xbf16>
    %c1_160 = arith.constant 1 : index
    %c0_161 = arith.constant 0 : index
    %c1_162 = arith.constant 1 : index
    %c1_163 = arith.constant 1 : index
    %c0_164 = arith.constant 0 : index
    %c0_165 = arith.constant 0 : index
    %149 = vector.load %arg3[%c1_160, %c0_161, %c1_162, %c1_163, %c0_164, %c0_165] : memref<2x2x2x2x8x4xbf16, #tpu.memory_space<vmem>>, vector<1x1x1x1x8x4xbf16>
    %150 = vector.shape_cast %149 : vector<1x1x1x1x8x4xbf16> to vector<8x4xbf16>
    %cst_166 = arith.constant dense<0.000000e+00> : vector<64x4xf32>
    %151 = tpu.matmul %148, %150, %cst_166 {dimension_numbers = #tpu.dot_dimension_numbers<[1], [0], [0], [1], [0, 0, 1, 1], [], []>} : vector<64x8xbf16>, vector<8x4xbf16>, vector<64x4xf32> -> vector<64x4xf32>
    %152 = arith.addf %145, %151 : vector<64x4xf32>
    %cst_167 = arith.constant dense<0.000000e+00> : vector<4xf32>
    %153 = vector.multi_reduction <add>, %152, %cst_167 [0] : vector<64x4xf32> to vector<4xf32>
    %154 = vector.shape_cast %153 : vector<4xf32> to vector<1x4xf32>
    %155 = arith.addf %115, %154 : vector<1x4xf32>
    %156 = arith.mulf %152, %152 : vector<64x4xf32>
    %cst_168 = arith.constant dense<0.000000e+00> : vector<4xf32>
    %157 = vector.multi_reduction <add>, %156, %cst_168 [0] : vector<64x4xf32> to vector<4xf32>
    %158 = vector.shape_cast %157 : vector<4xf32> to vector<1x4xf32>
    %159 = arith.addf %119, %158 : vector<1x4xf32>
    %160 = vector.shape_cast %152 : vector<64x4xf32> to vector<8x8x4xf32>
    %c0_169 = arith.constant 0 : index
    %c1_170 = arith.constant 1 : index
    %c0_171 = arith.constant 0 : index
    %c0_172 = arith.constant 0 : index
    %c0_173 = arith.constant 0 : index
    %c0_174 = arith.constant 0 : index
    %161 = vector.load %arg4[%c0_169, %c1_170, %c0_171, %c0_172, %c0_173, %c0_174] : memref<1x2x2x8x8x4xf32, #tpu.memory_space<vmem>>, vector<1x1x1x8x8x4xf32>
    %162 = vector.shape_cast %161 : vector<1x1x1x8x8x4xf32> to vector<8x8x4xf32>
    %163 = vector.shape_cast %160 : vector<8x8x4xf32> to vector<1x1x1x8x8x4xf32>
    tpu.vector_store %arg4[%c0_169, %c1_170, %c0_171, %c0_172, %c0_173, %c0_174], %163 {strides = array<i32>} : memref<1x2x2x8x8x4xf32, #tpu.memory_space<vmem>>, vector<1x1x1x8x8x4xf32>,
    %cst_175 = arith.constant 0.000000e+00 : f32
    %164 = vector.broadcast %cst_175 : f32 to vector<64x4xf32>
    %c1_176 = arith.constant 1 : index
    %c1_177 = arith.constant 1 : index
    %c0_178 = arith.constant 0 : index
    %165 = vector.load %arg7[%c1_176, %c1_177, %c0_178] : memref<10x10x8xf32, #tpu.memory_space<vmem>>, vector<8x8x8xf32>
    %166 = vector.shape_cast %165 : vector<8x8x8xf32> to vector<64x8xf32>
    %167 = arith.truncf %166 : vector<64x8xf32> to vector<64x8xbf16>
    %c1_179 = arith.constant 1 : index
    %c1_180 = arith.constant 1 : index
    %c0_181 = arith.constant 0 : index
    %c0_182 = arith.constant 0 : index
    %c0_183 = arith.constant 0 : index
    %c0_184 = arith.constant 0 : index
    %168 = vector.load %arg3[%c1_179, %c1_180, %c0_181, %c0_182, %c0_183, %c0_184] : memref<2x2x2x2x8x4xbf16, #tpu.memory_space<vmem>>, vector<1x1x1x1x8x4xbf16>
    %169 = vector.shape_cast %168 : vector<1x1x1x1x8x4xbf16> to vector<8x4xbf16>
    %cst_185 = arith.constant dense<0.000000e+00> : vector<64x4xf32>
    %170 = tpu.matmul %167, %169, %cst_185 {dimension_numbers = #tpu.dot_dimension_numbers<[1], [0], [0], [1], [0, 0, 1, 1], [], []>} : vector<64x8xbf16>, vector<8x4xbf16>, vector<64x4xf32> -> vector<64x4xf32>
    %171 = arith.addf %164, %170 : vector<64x4xf32>
    %c1_186 = arith.constant 1 : index
    %c2_187 = arith.constant 2 : index
    %c0_188 = arith.constant 0 : index
    %172 = vector.load %arg7[%c1_186, %c2_187, %c0_188] : memref<10x10x8xf32, #tpu.memory_space<vmem>>, vector<8x8x8xf32>
    %173 = vector.shape_cast %172 : vector<8x8x8xf32> to vector<64x8xf32>
    %174 = arith.truncf %173 : vector<64x8xf32> to vector<64x8xbf16>
    %c1_189 = arith.constant 1 : index
    %c1_190 = arith.constant 1 : index
    %c0_191 = arith.constant 0 : index
    %c1_192 = arith.constant 1 : index
    %c0_193 = arith.constant 0 : index
    %c0_194 = arith.constant 0 : index
    %175 = vector.load %arg3[%c1_189, %c1_190, %c0_191, %c1_192, %c0_193, %c0_194] : memref<2x2x2x2x8x4xbf16, #tpu.memory_space<vmem>>, vector<1x1x1x1x8x4xbf16>
    %176 = vector.shape_cast %175 : vector<1x1x1x1x8x4xbf16> to vector<8x4xbf16>
    %cst_195 = arith.constant dense<0.000000e+00> : vector<64x4xf32>
    %177 = tpu.matmul %174, %176, %cst_195 {dimension_numbers = #tpu.dot_dimension_numbers<[1], [0], [0], [1], [0, 0, 1, 1], [], []>} : vector<64x8xbf16>, vector<8x4xbf16>, vector<64x4xf32> -> vector<64x4xf32>
    %178 = arith.addf %171, %177 : vector<64x4xf32>
    %c2_196 = arith.constant 2 : index
    %c1_197 = arith.constant 1 : index
    %c0_198 = arith.constant 0 : index
    %179 = vector.load %arg7[%c2_196, %c1_197, %c0_198] : memref<10x10x8xf32, #tpu.memory_space<vmem>>, vector<8x8x8xf32>
    %180 = vector.shape_cast %179 : vector<8x8x8xf32> to vector<64x8xf32>
    %181 = arith.truncf %180 : vector<64x8xf32> to vector<64x8xbf16>
    %c1_199 = arith.constant 1 : index
    %c1_200 = arith.constant 1 : index
    %c1_201 = arith.constant 1 : index
    %c0_202 = arith.constant 0 : index
    %c0_203 = arith.constant 0 : index
    %c0_204 = arith.constant 0 : index
    %182 = vector.load %arg3[%c1_199, %c1_200, %c1_201, %c0_202, %c0_203, %c0_204] : memref<2x2x2x2x8x4xbf16, #tpu.memory_space<vmem>>, vector<1x1x1x1x8x4xbf16>
    %183 = vector.shape_cast %182 : vector<1x1x1x1x8x4xbf16> to vector<8x4xbf16>
    %cst_205 = arith.constant dense<0.000000e+00> : vector<64x4xf32>
    %184 = tpu.matmul %181, %183, %cst_205 {dimension_numbers = #tpu.dot_dimension_numbers<[1], [0], [0], [1], [0, 0, 1, 1], [], []>} : vector<64x8xbf16>, vector<8x4xbf16>, vector<64x4xf32> -> vector<64x4xf32>
    %185 = arith.addf %178, %184 : vector<64x4xf32>
    %c2_206 = arith.constant 2 : index
    %c2_207 = arith.constant 2 : index
    %c0_208 = arith.constant 0 : index
    %186 = vector.load %arg7[%c2_206, %c2_207, %c0_208] : memref<10x10x8xf32, #tpu.memory_space<vmem>>, vector<8x8x8xf32>
    %187 = vector.shape_cast %186 : vector<8x8x8xf32> to vector<64x8xf32>
    %188 = arith.truncf %187 : vector<64x8xf32> to vector<64x8xbf16>
    %c1_209 = arith.constant 1 : index
    %c1_210 = arith.constant 1 : index
    %c1_211 = arith.constant 1 : index
    %c1_212 = arith.constant 1 : index
    %c0_213 = arith.constant 0 : index
    %c0_214 = arith.constant 0 : index
    %189 = vector.load %arg3[%c1_209, %c1_210, %c1_211, %c1_212, %c0_213, %c0_214] : memref<2x2x2x2x8x4xbf16, #tpu.memory_space<vmem>>, vector<1x1x1x1x8x4xbf16>
    %190 = vector.shape_cast %189 : vector<1x1x1x1x8x4xbf16> to vector<8x4xbf16>
    %cst_215 = arith.constant dense<0.000000e+00> : vector<64x4xf32>
    %191 = tpu.matmul %188, %190, %cst_215 {dimension_numbers = #tpu.dot_dimension_numbers<[1], [0], [0], [1], [0, 0, 1, 1], [], []>} : vector<64x8xbf16>, vector<8x4xbf16>, vector<64x4xf32> -> vector<64x4xf32>
    %192 = arith.addf %185, %191 : vector<64x4xf32>
    %cst_216 = arith.constant dense<0.000000e+00> : vector<4xf32>
    %193 = vector.multi_reduction <add>, %192, %cst_216 [0] : vector<64x4xf32> to vector<4xf32>
    %194 = vector.shape_cast %193 : vector<4xf32> to vector<1x4xf32>
    %195 = arith.addf %155, %194 : vector<1x4xf32>
    %196 = arith.mulf %192, %192 : vector<64x4xf32>
    %cst_217 = arith.constant dense<0.000000e+00> : vector<4xf32>
    %197 = vector.multi_reduction <add>, %196, %cst_217 [0] : vector<64x4xf32> to vector<4xf32>
    %198 = vector.shape_cast %197 : vector<4xf32> to vector<1x4xf32>
    %199 = arith.addf %159, %198 : vector<1x4xf32>
    %200 = vector.shape_cast %192 : vector<64x4xf32> to vector<8x8x4xf32>
    %c0_218 = arith.constant 0 : index
    %c1_219 = arith.constant 1 : index
    %c1_220 = arith.constant 1 : index
    %c0_221 = arith.constant 0 : index
    %c0_222 = arith.constant 0 : index
    %c0_223 = arith.constant 0 : index
    %201 = vector.load %arg4[%c0_218, %c1_219, %c1_220, %c0_221, %c0_222, %c0_223] : memref<1x2x2x8x8x4xf32, #tpu.memory_space<vmem>>, vector<1x1x1x8x8x4xf32>
    %202 = vector.shape_cast %201 : vector<1x1x1x8x8x4xf32> to vector<8x8x4xf32>
    %203 = vector.shape_cast %200 : vector<8x8x4xf32> to vector<1x1x1x8x8x4xf32>
    tpu.vector_store %arg4[%c0_218, %c1_219, %c1_220, %c0_221, %c0_222, %c0_223], %203 {strides = array<i32>} : memref<1x2x2x8x8x4xf32, #tpu.memory_space<vmem>>, vector<1x1x1x8x8x4xf32>,
    %c0_224 = arith.constant 0 : index
    %c0_225 = arith.constant 0 : index
    %c0_226 = arith.constant 0 : index
    %204 = vector.load %arg5[%c0_224, %c0_225, %c0_226] : memref<1x1x4xf32, #tpu.memory_space<vmem>>, vector<1x1x4xf32>
    %205 = vector.shape_cast %204 : vector<1x1x4xf32> to vector<1x4xf32>
    %206 = vector.shape_cast %195 : vector<1x4xf32> to vector<1x1x4xf32>
    tpu.vector_store %arg5[%c0_224, %c0_225, %c0_226], %206 {strides = array<i32>} : memref<1x1x4xf32, #tpu.memory_space<vmem>>, vector<1x1x4xf32>,
    %c0_227 = arith.constant 0 : index
    %c0_228 = arith.constant 0 : index
    %c0_229 = arith.constant 0 : index
    %207 = vector.load %arg6[%c0_227, %c0_228, %c0_229] : memref<1x1x4xf32, #tpu.memory_space<vmem>>, vector<1x1x4xf32>
    %208 = vector.shape_cast %207 : vector<1x1x4xf32> to vector<1x4xf32>
    %209 = vector.shape_cast %199 : vector<1x4xf32> to vector<1x1x4xf32>
    tpu.vector_store %arg6[%c0_227, %c0_228, %c0_229], %209 {strides = array<i32>} : memref<1x1x4xf32, #tpu.memory_space<vmem>>, vector<1x1x4xf32>,
    return
  }
  func.func @transform_0(%arg0: i32) -> (i32, i32, i32, i32) {
    %c0_i32 = arith.constant 0 : i32
    %c0_i32_0 = arith.constant 0 : i32
    %c0_i32_1 = arith.constant 0 : i32
    %c0_i32_2 = arith.constant 0 : i32
    return %arg0, %c0_i32, %c0_i32_0, %c0_i32_1 : i32, i32, i32, i32
  }
  func.func @transform_1(%arg0: i32) -> (i32, i32, i32) {
    %c0_i32 = arith.constant 0 : i32
    %c0_i32_0 = arith.constant 0 : i32
    %c0_i32_1 = arith.constant 0 : i32
    %c0_i32_2 = arith.constant 0 : i32
    return %c0_i32, %c0_i32_0, %c0_i32_1 : i32, i32, i32
  }
  func.func @transform_2(%arg0: i32) -> (i32, i32, i32, i32, i32, i32) {
    %c0_i32 = arith.constant 0 : i32
    %c0_i32_0 = arith.constant 0 : i32
    %c0_i32_1 = arith.constant 0 : i32
    %c0_i32_2 = arith.constant 0 : i32
    %c0_i32_3 = arith.constant 0 : i32
    %c0_i32_4 = arith.constant 0 : i32
    %c0_i32_5 = arith.constant 0 : i32
    return %c0_i32, %c0_i32_0, %c0_i32_1, %c0_i32_2, %c0_i32_3, %c0_i32_4 : i32, i32, i32, i32, i32, i32
  }
  func.func @transform_3(%arg0: i32) -> (i32, i32, i32, i32, i32, i32) {
    %c0_i32 = arith.constant 0 : i32
    %c0_i32_0 = arith.constant 0 : i32
    %c0_i32_1 = arith.constant 0 : i32
    %c0_i32_2 = arith.constant 0 : i32
    %c0_i32_3 = arith.constant 0 : i32
    %c0_i32_4 = arith.constant 0 : i32
    return %arg0, %c0_i32, %c0_i32_0, %c0_i32_1, %c0_i32_2, %c0_i32_3 : i32, i32, i32, i32, i32, i32
  }
  func.func @transform_4(%arg0: i32) -> (i32, i32, i32) {
    %c0_i32 = arith.constant 0 : i32
    %c0_i32_0 = arith.constant 0 : i32
    %c0_i32_1 = arith.constant 0 : i32
    return %arg0, %c0_i32, %c0_i32_0 : i32, i32, i32
  }
  func.func @transform_5(%arg0: i32) -> (i32, i32, i32) {
    %c0_i32 = arith.constant 0 : i32
    %c0_i32_0 = arith.constant 0 : i32
    %c0_i32_1 = arith.constant 0 : i32
    return %arg0, %c0_i32, %c0_i32_0 : i32, i32, i32
  }
}

module attributes {stable_mosaic.version = 11 : i64} {
  func.func @_bn_concat_kernel(%arg0: i32, %arg1: memref<1x16x16x4xf32, #tpu.memory_space<vmem>>, %arg2: memref<1x16x16x4xf32, #tpu.memory_space<vmem>>, %arg3: memref<1x1x1x4xf32, #tpu.memory_space<vmem>>, %arg4: memref<1x1x1x4xf32, #tpu.memory_space<vmem>>, %arg5: memref<1x2x16x16x4xf32, #tpu.memory_space<vmem>>) attributes {dimension_semantics = [#tpu.dimension_semantics<parallel>], iteration_bounds = array<i64: 2>, scalar_prefetch = 0 : i64, scratch_operands = 0 : i64, tpu.core_type = #tpu.core_type<tc>, window_params = [{transform_indices = @transform_0, window_bounds = array<i64: 1, 16, 16, 4>}, {transform_indices = @transform_1, window_bounds = array<i64: 1, 16, 16, 4>}, {pipeline_mode = #tpu.pipeline_mode<synchronous>, transform_indices = @transform_2, window_bounds = array<i64: 1, 1, 1, 4>}, {pipeline_mode = #tpu.pipeline_mode<synchronous>, transform_indices = @transform_3, window_bounds = array<i64: 1, 1, 1, 4>}, {transform_indices = @transform_4, window_bounds = array<i64: 1, 2, 16, 16, 4>}]} {
    %c0 = arith.constant 0 : index
    %c0_0 = arith.constant 0 : index
    %c0_1 = arith.constant 0 : index
    %c0_2 = arith.constant 0 : index
    %0 = vector.load %arg1[%c0, %c0_0, %c0_1, %c0_2] : memref<1x16x16x4xf32, #tpu.memory_space<vmem>>, vector<1x16x16x4xf32>
    %1 = vector.shape_cast %0 : vector<1x16x16x4xf32> to vector<16x16x4xf32>
    %c0_3 = arith.constant 0 : index
    %c0_4 = arith.constant 0 : index
    %c0_5 = arith.constant 0 : index
    %c0_6 = arith.constant 0 : index
    %c0_7 = arith.constant 0 : index
    %2 = vector.load %arg5[%c0_3, %c0_4, %c0_5, %c0_6, %c0_7] : memref<1x2x16x16x4xf32, #tpu.memory_space<vmem>>, vector<1x1x16x16x4xf32>
    %3 = vector.shape_cast %2 : vector<1x1x16x16x4xf32> to vector<16x16x4xf32>
    %4 = vector.shape_cast %1 : vector<16x16x4xf32> to vector<1x1x16x16x4xf32>
    tpu.vector_store %arg5[%c0_3, %c0_4, %c0_5, %c0_6, %c0_7], %4 {strides = array<i32>} : memref<1x2x16x16x4xf32, #tpu.memory_space<vmem>>, vector<1x1x16x16x4xf32>,
    %c0_8 = arith.constant 0 : index
    %c0_9 = arith.constant 0 : index
    %c0_10 = arith.constant 0 : index
    %c0_11 = arith.constant 0 : index
    %5 = vector.load %arg2[%c0_8, %c0_9, %c0_10, %c0_11] : memref<1x16x16x4xf32, #tpu.memory_space<vmem>>, vector<1x16x16x4xf32>
    %6 = vector.shape_cast %5 : vector<1x16x16x4xf32> to vector<16x16x4xf32>
    %c0_12 = arith.constant 0 : index
    %c0_13 = arith.constant 0 : index
    %c0_14 = arith.constant 0 : index
    %c0_15 = arith.constant 0 : index
    %7 = vector.load %arg3[%c0_12, %c0_13, %c0_14, %c0_15] : memref<1x1x1x4xf32, #tpu.memory_space<vmem>>, vector<1x1x1x4xf32>
    %8 = vector.shape_cast %7 : vector<1x1x1x4xf32> to vector<1x1x4xf32>
    %9 = vector.broadcast %8 : vector<1x1x4xf32> to vector<16x16x4xf32>
    %10 = arith.mulf %6, %9 : vector<16x16x4xf32>
    %c0_16 = arith.constant 0 : index
    %c0_17 = arith.constant 0 : index
    %c0_18 = arith.constant 0 : index
    %c0_19 = arith.constant 0 : index
    %11 = vector.load %arg4[%c0_16, %c0_17, %c0_18, %c0_19] : memref<1x1x1x4xf32, #tpu.memory_space<vmem>>, vector<1x1x1x4xf32>
    %12 = vector.shape_cast %11 : vector<1x1x1x4xf32> to vector<1x1x4xf32>
    %13 = vector.broadcast %12 : vector<1x1x4xf32> to vector<16x16x4xf32>
    %14 = arith.addf %10, %13 : vector<16x16x4xf32>
    %c0_20 = arith.constant 0 : index
    %c1 = arith.constant 1 : index
    %c0_21 = arith.constant 0 : index
    %c0_22 = arith.constant 0 : index
    %c0_23 = arith.constant 0 : index
    %15 = vector.load %arg5[%c0_20, %c1, %c0_21, %c0_22, %c0_23] : memref<1x2x16x16x4xf32, #tpu.memory_space<vmem>>, vector<1x1x16x16x4xf32>
    %16 = vector.shape_cast %15 : vector<1x1x16x16x4xf32> to vector<16x16x4xf32>
    %17 = vector.shape_cast %14 : vector<16x16x4xf32> to vector<1x1x16x16x4xf32>
    tpu.vector_store %arg5[%c0_20, %c1, %c0_21, %c0_22, %c0_23], %17 {strides = array<i32>} : memref<1x2x16x16x4xf32, #tpu.memory_space<vmem>>, vector<1x1x16x16x4xf32>,
    return
  }
  func.func @transform_0(%arg0: i32) -> (i32, i32, i32, i32) {
    %c0_i32 = arith.constant 0 : i32
    %c0_i32_0 = arith.constant 0 : i32
    %c0_i32_1 = arith.constant 0 : i32
    %c0_i32_2 = arith.constant 0 : i32
    return %arg0, %c0_i32, %c0_i32_0, %c0_i32_1 : i32, i32, i32, i32
  }
  func.func @transform_1(%arg0: i32) -> (i32, i32, i32, i32) {
    %c0_i32 = arith.constant 0 : i32
    %c0_i32_0 = arith.constant 0 : i32
    %c0_i32_1 = arith.constant 0 : i32
    %c0_i32_2 = arith.constant 0 : i32
    return %arg0, %c0_i32, %c0_i32_0, %c0_i32_1 : i32, i32, i32, i32
  }
  func.func @transform_2(%arg0: i32) -> (i32, i32, i32, i32) {
    %c0_i32 = arith.constant 0 : i32
    %c0_i32_0 = arith.constant 0 : i32
    %c0_i32_1 = arith.constant 0 : i32
    %c0_i32_2 = arith.constant 0 : i32
    %c0_i32_3 = arith.constant 0 : i32
    return %c0_i32, %c0_i32_0, %c0_i32_1, %c0_i32_2 : i32, i32, i32, i32
  }
  func.func @transform_3(%arg0: i32) -> (i32, i32, i32, i32) {
    %c0_i32 = arith.constant 0 : i32
    %c0_i32_0 = arith.constant 0 : i32
    %c0_i32_1 = arith.constant 0 : i32
    %c0_i32_2 = arith.constant 0 : i32
    %c0_i32_3 = arith.constant 0 : i32
    return %c0_i32, %c0_i32_0, %c0_i32_1, %c0_i32_2 : i32, i32, i32, i32
  }
  func.func @transform_4(%arg0: i32) -> (i32, i32, i32, i32, i32) {
    %c0_i32 = arith.constant 0 : i32
    %c0_i32_0 = arith.constant 0 : i32
    %c0_i32_1 = arith.constant 0 : i32
    %c0_i32_2 = arith.constant 0 : i32
    %c0_i32_3 = arith.constant 0 : i32
    return %arg0, %c0_i32, %c0_i32_0, %c0_i32_1, %c0_i32_2 : i32, i32, i32, i32, i32
  }
}

</mosaic_0001>

<llo_original>
// kernel: unet_block_innermost_forward.3
$region0: #{unet_block_innermost_forward.3}
  #allocation0 [shape = 'u32[]', space=smem, size = 0x4, offset = 0x4, fixed_abs, tag = 'smem constant byte address 0x4 - core index']
  #allocation1 [shape = 'u32[144,128]{1,0:T(1,128)}', space=vmem, size = 0x12000, scoped, tag = 'internal scratch']
  %s0 = inlined_call_operand.vmem [shape: f32[2,16,16,4], index: 0, kind: input, shape index: {}]
  %s1 = inlined_call_operand.vmem [shape: f32[2,16,16,4], index: 1, kind: input, shape index: {}]
  %s2 = inlined_call_operand.vmem [shape: f32[1,1,1,4], index: 2, kind: input, shape index: {}]
  %s3 = inlined_call_operand.vmem [shape: f32[1,1,1,4], index: 3, kind: input, shape index: {}]
  %s4 = inlined_call_operand.vmem [shape: f32[2,2,16,16,4], index: 4, kind: output, shape index: {}]
  %s5 = sld [smem:[#allocation0]]
  $region49: #{unet_block_innermost_forward.3} parent=0
    _
  %s7 = ssub.s32 1, %s5
  %s8 = scalar_select 0, %s7, %s5
  loop: start=0, step=1, limit=4
  $region2: #{unet_block_innermost_forward.3} parent=0 // loop_pre_header
    _
  $region3: #{unet_block_innermost_forward.3} parent=0 // loop_header
    %s10 = sphi 0, %s14
    %p11 = scmp.ge.s32.totalorder %s10, 4
    %s20 = sphi 0, %s22
    %s23 = sphi 0, %s20
    %s24 = sphi 0, %s23
    %s40 = sphi 0, %s24
    %s46 = sphi 0, %s48
    %s49 = sphi 0, %s46
    %s50 = sphi 0, %s49
    %s66 = sphi 0, %s50
    %s70 = sphi 0, %s70
    %s72 = sphi 0, %s70
    %s73 = sphi 0, %s72
    %s87 = sphi 0, %s73
    %s91 = sphi 0, %s91
    %s93 = sphi 0, %s91
    %s94 = sphi 0, %s93
    %s108 = sphi 0, %s94
    %s114 = sphi 0, %s116
    %s117 = sphi 0, %s114
    %s118 = sphi 0, %s117
    %s134 = sphi 0, %s118
  $region4: #{unet_block_innermost_forward.3} parent=0 // loop_header_branch
    %13 = sbr.rel (%p11) target = $region8
  $region5: #{unet_block_innermost_forward.3} parent=0 // loop_body
    %s15 = ssub.s32 %s10, 1
    %s16 = ssub.s32 %s10, 2
    %s17 = sadd.s32 %s10, 1
    %s18 = ssub.s32 %s10, %s17
    %p19 = scmp.eq.s32.totalorder %s18, 0
    %s21 = sadd.s32 %s20, 1
    %s22 = scalar_select %p19, %s20, %s21
    %p25 = pneg %p19
    %p26 = scmp.eq.s32.totalorder %s10, 1
    %p27 = por %p25, %p26
    %p28 = scmp.ne.s32.totalorder %s20, %s23
    %p29 = scmp.eq.s32.totalorder %s10, 0
    %p30 = por %p28, %p29
    %p31 = scmp.ne.s32.totalorder %s20, %s23
    %p32 = scmp.eq.s32.totalorder %s15, 1
    %p33 = por %p31, %p32
    %p34 = scmp.ne.s32.totalorder %s23, %s24
    %p35 = scmp.eq.s32.totalorder %s15, 0
    %p36 = por %p34, %p35
    %p37 = scmp.ne.s32.totalorder %s23, %s24
    %p38 = scmp.eq.s32.totalorder %s16, 1
    %p39 = por %p37, %p38
    %p41 = scmp.ne.s32.totalorder %s24, %s40
    %p42 = scmp.eq.s32.totalorder %s16, 0
    %p43 = por %p41, %p42
    %s44 = ssub.s32 %s10, %s17
    %p45 = scmp.eq.s32.totalorder %s44, 0
    %s47 = sadd.s32 %s46, 1
    %s48 = scalar_select %p45, %s46, %s47
    %p51 = pneg %p45
    %p52 = scmp.eq.s32.totalorder %s10, 1
    %p53 = por %p51, %p52
    %p54 = scmp.ne.s32.totalorder %s46, %s49
    %p55 = scmp.eq.s32.totalorder %s10, 0
    %p56 = por %p54, %p55
    %p57 = scmp.ne.s32.totalorder %s46, %s49
    %p58 = scmp.eq.s32.totalorder %s15, 1
    %p59 = por %p57, %p58
    %p60 = scmp.ne.s32.totalorder %s49, %s50
    %p61 = scmp.eq.s32.totalorder %s15, 0
    %p62 = por %p60, %p61
    %p63 = scmp.ne.s32.totalorder %s49, %s50
    %p64 = scmp.eq.s32.totalorder %s16, 1
    %p65 = por %p63, %p64
    %p67 = scmp.ne.s32.totalorder %s50, %s66
    %p68 = scmp.eq.s32.totalorder %s16, 0
    %p69 = por %p67, %p68
    %s71 = sadd.s32 %s70, 1
    %p74 = scmp.eq.s32.totalorder %s10, 1
    %p75 = scmp.ne.s32.totalorder %s70, %s72
    %p76 = scmp.eq.s32.totalorder %s10, 0
    %p77 = por %p75, %p76
    %p78 = scmp.ne.s32.totalorder %s70, %s72
    %p79 = scmp.eq.s32.totalorder %s15, 1
    %p80 = por %p78, %p79
    %p81 = scmp.ne.s32.totalorder %s72, %s73
    %p82 = scmp.eq.s32.totalorder %s15, 0
    %p83 = por %p81, %p82
    %p84 = scmp.ne.s32.totalorder %s72, %s73
    %p85 = scmp.eq.s32.totalorder %s16, 1
    %p86 = por %p84, %p85
    %p88 = scmp.ne.s32.totalorder %s73, %s87
    %p89 = scmp.eq.s32.totalorder %s16, 0
    %p90 = por %p88, %p89
    %s92 = sadd.s32 %s91, 1
    %p95 = scmp.eq.s32.totalorder %s10, 1
    %p96 = scmp.ne.s32.totalorder %s91, %s93
    %p97 = scmp.eq.s32.totalorder %s10, 0
    %p98 = por %p96, %p97
    %p99 = scmp.ne.s32.totalorder %s91, %s93
    %p100 = scmp.eq.s32.totalorder %s15, 1
    %p101 = por %p99, %p100
    %p102 = scmp.ne.s32.totalorder %s93, %s94
    %p103 = scmp.eq.s32.totalorder %s15, 0
    %p104 = por %p102, %p103
    %p105 = scmp.ne.s32.totalorder %s93, %s94
    %p106 = scmp.eq.s32.totalorder %s16, 1
    %p107 = por %p105, %p106
    %p109 = scmp.ne.s32.totalorder %s94, %s108
    %p110 = scmp.eq.s32.totalorder %s16, 0
    %p111 = por %p109, %p110
    %s112 = ssub.s32 %s10, %s17
    %p113 = scmp.eq.s32.totalorder %s112, 0
    %s115 = sadd.s32 %s114, 1
    %s116 = scalar_select %p113, %s114, %s115
    %p119 = pneg %p113
    %p120 = scmp.eq.s32.totalorder %s10, 1
    %p121 = por %p119, %p120
    %p122 = scmp.ne.s32.totalorder %s114, %s117
    %p123 = scmp.eq.s32.totalorder %s10, 0
    %p124 = por %p122, %p123
    %p125 = scmp.ne.s32.totalorder %s114, %s117
    %p126 = scmp.eq.s32.totalorder %s15, 1
    %p127 = por %p125, %p126
    %p128 = scmp.ne.s32.totalorder %s117, %s118
    %p129 = scmp.eq.s32.totalorder %s15, 0
    %p130 = por %p128, %p129
    %p131 = scmp.ne.s32.totalorder %s117, %s118
    %p132 = scmp.eq.s32.totalorder %s16, 1
    %p133 = por %p131, %p132
    %p135 = scmp.ne.s32.totalorder %s118, %s134
    %p136 = scmp.eq.s32.totalorder %s16, 0
    %p137 = por %p135, %p136
    %p138 = scmp.le.s32.totalorder 1, %s10
    %p139 = scmp.lt.s32.totalorder %s10, 3
    %p140 = pnand %p138, %p139
    %p141 = pneg %p140
    // Predicated region
    $region9: #{unet_block_innermost_forward.3} parent=5 // pred_check
      _
    $region10: #{unet_block_innermost_forward.3} parent=5 // pred_check_branch
      %143 = sbr.rel (%p140) target = $region12
    $region11: #{unet_block_innermost_forward.3} parent=5 // pred_region
      %s144 = ssub.s32 %s10, 1
      // Predicated region
      $region13: #{unet_block_innermost_forward.3} parent=11 // pred_check
        %p145 = pneg %p83
      $region14: #{unet_block_innermost_forward.3} parent=11 // pred_check_branch
        %147 = sbr.rel (%p145) target = $region16
      $region15: #{unet_block_innermost_forward.3} parent=11 // pred_region
        _
      $region16: #{unet_block_innermost_forward.3} parent=11 // pred_fallthru
        _
      // Predicated region
      $region17: #{unet_block_innermost_forward.3} parent=11 // pred_check
        %p148 = pneg %p104
      $region18: #{unet_block_innermost_forward.3} parent=11 // pred_check_branch
        %150 = sbr.rel (%p148) target = $region20
      $region19: #{unet_block_innermost_forward.3} parent=11 // pred_region
        _
      $region20: #{unet_block_innermost_forward.3} parent=11 // pred_fallthru
        _
    $region12: #{unet_block_innermost_forward.3} parent=5 // pred_fallthru
      _
    %p151 = scmp.lt.s32.totalorder %s10, 2
    // Predicated region
    $region21: #{unet_block_innermost_forward.3} parent=5 // pred_check
      %p152 = pneg %p151
    $region22: #{unet_block_innermost_forward.3} parent=5 // pred_check_branch
      %154 = sbr.rel (%p152) target = $region24
    $region23: #{unet_block_innermost_forward.3} parent=5 // pred_region
      // Predicated region
      $region25: #{unet_block_innermost_forward.3} parent=23 // pred_check
        %p155 = pneg %p30
      $region26: #{unet_block_innermost_forward.3} parent=23 // pred_check_branch
        %157 = sbr.rel (%p155) target = $region28
      $region27: #{unet_block_innermost_forward.3} parent=23 // pred_region
        %p158 = scmp.lt.s32.totalorder %s10, 1
        %s159 = scalar_select %p158, %s10, 1
        %s160 = smul.addr %s159, 32
        %s161 = smul.addr %s160, 8
        %s162 = scalar_lea.vmem %s0, %s161
      $region28: #{unet_block_innermost_forward.3} parent=23 // pred_fallthru
        _
      // Predicated region
      $region29: #{unet_block_innermost_forward.3} parent=23 // pred_check
        %p163 = pneg %p56
      $region30: #{unet_block_innermost_forward.3} parent=23 // pred_check_branch
        %165 = sbr.rel (%p163) target = $region32
      $region31: #{unet_block_innermost_forward.3} parent=23 // pred_region
        %p166 = scmp.lt.s32.totalorder %s10, 1
        %s167 = scalar_select %p166, %s10, 1
        %s168 = smul.addr %s167, 32
        %s169 = smul.addr %s168, 8
        %s170 = scalar_lea.vmem %s1, %s169
      $region32: #{unet_block_innermost_forward.3} parent=23 // pred_fallthru
        _
    $region24: #{unet_block_innermost_forward.3} parent=5 // pred_fallthru
      _
    %p171 = scmp.le.s32.totalorder 1, %s10
    %p172 = scmp.lt.s32.totalorder %s10, 3
    %p173 = pnand %p171, %p172
    %p174 = pneg %p173
    // Predicated region
    $region33: #{unet_block_innermost_forward.3} parent=5 // pred_check
      _
    $region34: #{unet_block_innermost_forward.3} parent=5 // pred_check_branch
      %176 = sbr.rel (%p173) target = $region36
    $region35: #{unet_block_innermost_forward.3} parent=5 // pred_region
      %s177 = ssub.s32 %s10, 1
      %p178 = scmp.lt.s32.totalorder %s15, 1
      %s179 = scalar_select %p178, %s15, 1
      %s180 = smul.addr %s179, 32
      %s181 = smul.addr %s180, 8
      %s182 = scalar_lea.vmem %s0, %s181
      %p183 = pneg %p36
      %p184 = pneg %p33
      %p185 = scmp.lt.s32.totalorder %s15, 1
      %s186 = scalar_select %p185, %s15, 1
      %s187 = smul.addr %s186, 32
      %s188 = smul.addr %s187, 8
      %s189 = scalar_lea.vmem %s1, %s188
      %p190 = pneg %p62
      %p191 = pneg %p59
      %p192 = pneg %p83
      %p193 = pneg %p80
      %p194 = pneg %p104
      %p195 = pneg %p101
      %p196 = pneg %p130
      %p197 = pneg %p127
      %p198 = scmp.lt.s32.totalorder %s15, 1
      %s199 = scalar_select %p198, %s15, 1
      %s200 = smul.addr %s199, 64
      %s201 = smul.addr %s200, 8
      %s202 = scalar_lea.vmem %s4, %s201
      %p203 = scmp.lt.s32.totalorder %s15, 1
      %s204 = scalar_select %p203, %s15, 1
      %s205 = smul.addr %s204, 32
      %s206 = smul.addr %s205, 8
      %s207 = scalar_lea.vmem %s0, %s206
      %p208 = scmp.lt.s32.totalorder %s15, 1
      %s209 = scalar_select %p208, %s15, 1
      %s210 = smul.addr %s209, 32
      %s211 = smul.addr %s210, 8
      %s212 = scalar_lea.vmem %s1, %s211
      %p213 = scmp.lt.s32.totalorder %s15, 1
      %s214 = scalar_select %p213, %s15, 1
      %s215 = smul.addr %s214, 64
      %s216 = smul.addr %s215, 8
      %s217 = scalar_lea.vmem %s4, %s216
      %v218 = vld [vmem:[%s207] sm:$0xff]
      %v219 = vld [vmem:[%s207 + $0x8] sm:$0xff]
      %v220 = vld [vmem:[%s207 + $0x10] sm:$0xff]
      %v221 = vld [vmem:[%s207 + $0x18] sm:$0xff]
      %v222 = vld [vmem:[%s207 + $0x20] sm:$0xff]
      %v223 = vld [vmem:[%s207 + $0x28] sm:$0xff]
      %v224 = vld [vmem:[%s207 + $0x30] sm:$0xff]
      %v225 = vld [vmem:[%s207 + $0x38] sm:$0xff]
      %v226 = vld [vmem:[%s207 + $0x40] sm:$0xff]
      %v227 = vld [vmem:[%s207 + $0x48] sm:$0xff]
      %v228 = vld [vmem:[%s207 + $0x50] sm:$0xff]
      %v229 = vld [vmem:[%s207 + $0x58] sm:$0xff]
      %v230 = vld [vmem:[%s207 + $0x60] sm:$0xff]
      %v231 = vld [vmem:[%s207 + $0x68] sm:$0xff]
      %v232 = vld [vmem:[%s207 + $0x70] sm:$0xff]
      %v233 = vld [vmem:[%s207 + $0x78] sm:$0xff]
      %v234 = vld [vmem:[%s207 + $0x80] sm:$0xff]
      %v235 = vld [vmem:[%s207 + $0x88] sm:$0xff]
      %v236 = vld [vmem:[%s207 + $0x90] sm:$0xff]
      %v237 = vld [vmem:[%s207 + $0x98] sm:$0xff]
      %v238 = vld [vmem:[%s207 + $0xa0] sm:$0xff]
      %v239 = vld [vmem:[%s207 + $0xa8] sm:$0xff]
      %v240 = vld [vmem:[%s207 + $0xb0] sm:$0xff]
      %v241 = vld [vmem:[%s207 + $0xb8] sm:$0xff]
      %v242 = vld [vmem:[%s207 + $0xc0] sm:$0xff]
      %v243 = vld [vmem:[%s207 + $0xc8] sm:$0xff]
      %v244 = vld [vmem:[%s207 + $0xd0] sm:$0xff]
      %v245 = vld [vmem:[%s207 + $0xd8] sm:$0xff]
      %v246 = vld [vmem:[%s207 + $0xe0] sm:$0xff]
      %v247 = vld [vmem:[%s207 + $0xe8] sm:$0xff]
      %v248 = vld [vmem:[%s207 + $0xf0] sm:$0xff]
      %v249 = vld [vmem:[%s207 + $0xf8] sm:$0xff]
      %vm250 = vcmask 31744
      %251 = vst.msk [vmem:[%s217] sm:$0xff] %vm250, %v218
      %252 = vst.msk [vmem:[%s217 + $0x8] sm:$0xff] %vm250, %v219
      %253 = vst.msk [vmem:[%s217 + $0x10] sm:$0xff] %vm250, %v220
      %254 = vst.msk [vmem:[%s217 + $0x18] sm:$0xff] %vm250, %v221
      %255 = vst.msk [vmem:[%s217 + $0x20] sm:$0xff] %vm250, %v222
      %256 = vst.msk [vmem:[%s217 + $0x28] sm:$0xff] %vm250, %v223
      %257 = vst.msk [vmem:[%s217 + $0x30] sm:$0xff] %vm250, %v224
      %258 = vst.msk [vmem:[%s217 + $0x38] sm:$0xff] %vm250, %v225
      %259 = vst.msk [vmem:[%s217 + $0x40] sm:$0xff] %vm250, %v226
      %260 = vst.msk [vmem:[%s217 + $0x48] sm:$0xff] %vm250, %v227
      %261 = vst.msk [vmem:[%s217 + $0x50] sm:$0xff] %vm250, %v228
      %262 = vst.msk [vmem:[%s217 + $0x58] sm:$0xff] %vm250, %v229
      %263 = vst.msk [vmem:[%s217 + $0x60] sm:$0xff] %vm250, %v230
      %264 = vst.msk [vmem:[%s217 + $0x68] sm:$0xff] %vm250, %v231
      %265 = vst.msk [vmem:[%s217 + $0x70] sm:$0xff] %vm250, %v232
      %266 = vst.msk [vmem:[%s217 + $0x78] sm:$0xff] %vm250, %v233
      %267 = vst.msk [vmem:[%s217 + $0x80] sm:$0xff] %vm250, %v234
      %268 = vst.msk [vmem:[%s217 + $0x88] sm:$0xff] %vm250, %v235
      %269 = vst.msk [vmem:[%s217 + $0x90] sm:$0xff] %vm250, %v236
      %270 = vst.msk [vmem:[%s217 + $0x98] sm:$0xff] %vm250, %v237
      %271 = vst.msk [vmem:[%s217 + $0xa0] sm:$0xff] %vm250, %v238
      %272 = vst.msk [vmem:[%s217 + $0xa8] sm:$0xff] %vm250, %v239
      %273 = vst.msk [vmem:[%s217 + $0xb0] sm:$0xff] %vm250, %v240
      %274 = vst.msk [vmem:[%s217 + $0xb8] sm:$0xff] %vm250, %v241
      %275 = vst.msk [vmem:[%s217 + $0xc0] sm:$0xff] %vm250, %v242
      %276 = vst.msk [vmem:[%s217 + $0xc8] sm:$0xff] %vm250, %v243
      %277 = vst.msk [vmem:[%s217 + $0xd0] sm:$0xff] %vm250, %v244
      %278 = vst.msk [vmem:[%s217 + $0xd8] sm:$0xff] %vm250, %v245
      %279 = vst.msk [vmem:[%s217 + $0xe0] sm:$0xff] %vm250, %v246
      %280 = vst.msk [vmem:[%s217 + $0xe8] sm:$0xff] %vm250, %v247
      %281 = vst.msk [vmem:[%s217 + $0xf0] sm:$0xff] %vm250, %v248
      %282 = vst.msk [vmem:[%s217 + $0xf8] sm:$0xff] %vm250, %v249
      %v283 = vld [vmem:[%s212] sm:$0xff]
      %v284 = vld [vmem:[%s212 + $0x8] sm:$0xff]
      %v285 = vld [vmem:[%s212 + $0x10] sm:$0xff]
      %v286 = vld [vmem:[%s212 + $0x18] sm:$0xff]
      %v287 = vld [vmem:[%s212 + $0x20] sm:$0xff]
      %v288 = vld [vmem:[%s212 + $0x28] sm:$0xff]
      %v289 = vld [vmem:[%s212 + $0x30] sm:$0xff]
      %v290 = vld [vmem:[%s212 + $0x38] sm:$0xff]
      %v291 = vld [vmem:[%s212 + $0x40] sm:$0xff]
      %v292 = vld [vmem:[%s212 + $0x48] sm:$0xff]
      %v293 = vld [vmem:[%s212 + $0x50] sm:$0xff]
      %v294 = vld [vmem:[%s212 + $0x58] sm:$0xff]
      %v295 = vld [vmem:[%s212 + $0x60] sm:$0xff]
      %v296 = vld [vmem:[%s212 + $0x68] sm:$0xff]
      %v297 = vld [vmem:[%s212 + $0x70] sm:$0xff]
      %v298 = vld [vmem:[%s212 + $0x78] sm:$0xff]
      %v299 = vld [vmem:[%s212 + $0x80] sm:$0xff]
      %v300 = vld [vmem:[%s212 + $0x88] sm:$0xff]
      %v301 = vld [vmem:[%s212 + $0x90] sm:$0xff]
      %v302 = vld [vmem:[%s212 + $0x98] sm:$0xff]
      %v303 = vld [vmem:[%s212 + $0xa0] sm:$0xff]
      %v304 = vld [vmem:[%s212 + $0xa8] sm:$0xff]
      %v305 = vld [vmem:[%s212 + $0xb0] sm:$0xff]
      %v306 = vld [vmem:[%s212 + $0xb8] sm:$0xff]
      %v307 = vld [vmem:[%s212 + $0xc0] sm:$0xff]
      %v308 = vld [vmem:[%s212 + $0xc8] sm:$0xff]
      %v309 = vld [vmem:[%s212 + $0xd0] sm:$0xff]
      %v310 = vld [vmem:[%s212 + $0xd8] sm:$0xff]
      %v311 = vld [vmem:[%s212 + $0xe0] sm:$0xff]
      %v312 = vld [vmem:[%s212 + $0xe8] sm:$0xff]
      %v313 = vld [vmem:[%s212 + $0xf0] sm:$0xff]
      %v314 = vld [vmem:[%s212 + $0xf8] sm:$0xff]
      %v315 = vld [vmem:[%s2] sm:$0x1]
      %v317 = vlaneseq
      %v318 = vshrl.u32 %v317, 7
      %v319 = vsub.s32 0, %v318
      %v320 = vrot.slane %v315, %v319
      %v322 = vmul.f32 %v283, %v320
      %v323 = vmul.f32 %v284, %v320
      %v324 = vmul.f32 %v285, %v320
      %v325 = vmul.f32 %v286, %v320
      %v326 = vmul.f32 %v287, %v320
      %v327 = vmul.f32 %v288, %v320
      %v328 = vmul.f32 %v289, %v320
      %v329 = vmul.f32 %v290, %v320
      %v330 = vmul.f32 %v291, %v320
      %v331 = vmul.f32 %v292, %v320
      %v332 = vmul.f32 %v293, %v320
      %v333 = vmul.f32 %v294, %v320
      %v334 = vmul.f32 %v295, %v320
      %v335 = vmul.f32 %v296, %v320
      %v336 = vmul.f32 %v297, %v320
      %v337 = vmul.f32 %v298, %v320
      %v338 = vmul.f32 %v299, %v320
      %v339 = vmul.f32 %v300, %v320
      %v340 = vmul.f32 %v301, %v320
      %v341 = vmul.f32 %v302, %v320
      %v342 = vmul.f32 %v303, %v320
      %v343 = vmul.f32 %v304, %v320
      %v344 = vmul.f32 %v305, %v320
      %v345 = vmul.f32 %v306, %v320
      %v346 = vmul.f32 %v307, %v320
      %v347 = vmul.f32 %v308, %v320
      %v348 = vmul.f32 %v309, %v320
      %v349 = vmul.f32 %v310, %v320
      %v350 = vmul.f32 %v311, %v320
      %v351 = vmul.f32 %v312, %v320
      %v352 = vmul.f32 %v313, %v320
      %v353 = vmul.f32 %v314, %v320
      %v354 = vld [vmem:[%s3] sm:$0x1]
      %v356 = vlaneseq
      %v357 = vshrl.u32 %v356, 7
      %v358 = vsub.s32 0, %v357
      %v359 = vrot.slane %v354, %v358
      %v361 = vadd.f32 %v322, %v359
      %v362 = vadd.f32 %v323, %v359
      %v363 = vadd.f32 %v324, %v359
      %v364 = vadd.f32 %v325, %v359
      %v365 = vadd.f32 %v326, %v359
      %v366 = vadd.f32 %v327, %v359
      %v367 = vadd.f32 %v328, %v359
      %v368 = vadd.f32 %v329, %v359
      %v369 = vadd.f32 %v330, %v359
      %v370 = vadd.f32 %v331, %v359
      %v371 = vadd.f32 %v332, %v359
      %v372 = vadd.f32 %v333, %v359
      %v373 = vadd.f32 %v334, %v359
      %v374 = vadd.f32 %v335, %v359
      %v375 = vadd.f32 %v336, %v359
      %v376 = vadd.f32 %v337, %v359
      %v377 = vadd.f32 %v338, %v359
      %v378 = vadd.f32 %v339, %v359
      %v379 = vadd.f32 %v340, %v359
      %v380 = vadd.f32 %v341, %v359
      %v381 = vadd.f32 %v342, %v359
      %v382 = vadd.f32 %v343, %v359
      %v383 = vadd.f32 %v344, %v359
      %v384 = vadd.f32 %v345, %v359
      %v385 = vadd.f32 %v346, %v359
      %v386 = vadd.f32 %v347, %v359
      %v387 = vadd.f32 %v348, %v359
      %v388 = vadd.f32 %v349, %v359
      %v389 = vadd.f32 %v350, %v359
      %v390 = vadd.f32 %v351, %v359
      %v391 = vadd.f32 %v352, %v359
      %v392 = vadd.f32 %v353, %v359
      %s393 = scalar_lea.vmem %s217, 256
      %394 = vst.msk [vmem:[%s393] sm:$0xff] %vm250, %v361
      %395 = vst.msk [vmem:[%s393 + $0x8] sm:$0xff] %vm250, %v362
      %396 = vst.msk [vmem:[%s393 + $0x10] sm:$0xff] %vm250, %v363
      %397 = vst.msk [vmem:[%s393 + $0x18] sm:$0xff] %vm250, %v364
      %398 = vst.msk [vmem:[%s393 + $0x20] sm:$0xff] %vm250, %v365
      %399 = vst.msk [vmem:[%s393 + $0x28] sm:$0xff] %vm250, %v366
      %400 = vst.msk [vmem:[%s393 + $0x30] sm:$0xff] %vm250, %v367
      %401 = vst.msk [vmem:[%s393 + $0x38] sm:$0xff] %vm250, %v368
      %402 = vst.msk [vmem:[%s393 + $0x40] sm:$0xff] %vm250, %v369
      %403 = vst.msk [vmem:[%s393 + $0x48] sm:$0xff] %vm250, %v370
      %404 = vst.msk [vmem:[%s393 + $0x50] sm:$0xff] %vm250, %v371
      %405 = vst.msk [vmem:[%s393 + $0x58] sm:$0xff] %vm250, %v372
      %406 = vst.msk [vmem:[%s393 + $0x60] sm:$0xff] %vm250, %v373
      %407 = vst.msk [vmem:[%s393 + $0x68] sm:$0xff] %vm250, %v374
      %408 = vst.msk [vmem:[%s393 + $0x70] sm:$0xff] %vm250, %v375
      %409 = vst.msk [vmem:[%s393 + $0x78] sm:$0xff] %vm250, %v376
      %410 = vst.msk [vmem:[%s393 + $0x80] sm:$0xff] %vm250, %v377
      %411 = vst.msk [vmem:[%s393 + $0x88] sm:$0xff] %vm250, %v378
      %412 = vst.msk [vmem:[%s393 + $0x90] sm:$0xff] %vm250, %v379
      %413 = vst.msk [vmem:[%s393 + $0x98] sm:$0xff] %vm250, %v380
      %414 = vst.msk [vmem:[%s393 + $0xa0] sm:$0xff] %vm250, %v381
      %415 = vst.msk [vmem:[%s393 + $0xa8] sm:$0xff] %vm250, %v382
      %416 = vst.msk [vmem:[%s393 + $0xb0] sm:$0xff] %vm250, %v383
      %417 = vst.msk [vmem:[%s393 + $0xb8] sm:$0xff] %vm250, %v384
      %418 = vst.msk [vmem:[%s393 + $0xc0] sm:$0xff] %vm250, %v385
      %419 = vst.msk [vmem:[%s393 + $0xc8] sm:$0xff] %vm250, %v386
      %420 = vst.msk [vmem:[%s393 + $0xd0] sm:$0xff] %vm250, %v387
      %421 = vst.msk [vmem:[%s393 + $0xd8] sm:$0xff] %vm250, %v388
      %422 = vst.msk [vmem:[%s393 + $0xe0] sm:$0xff] %vm250, %v389
      %423 = vst.msk [vmem:[%s393 + $0xe8] sm:$0xff] %vm250, %v390
      %424 = vst.msk [vmem:[%s393 + $0xf0] sm:$0xff] %vm250, %v391
      %425 = vst.msk [vmem:[%s393 + $0xf8] sm:$0xff] %vm250, %v392
      %p426 = scmp.lt.s32.totalorder %s15, 1
      %s427 = scalar_select %p426, %s15, 1
      %s428 = smul.addr %s427, 64
      %s429 = smul.addr %s428, 8
      %s430 = scalar_lea.vmem %s4, %s429
      // Predicated region
      $region37: #{unet_block_innermost_forward.3} parent=35 // pred_check
        %p431 = pneg %p127
      $region38: #{unet_block_innermost_forward.3} parent=35 // pred_check_branch
        %433 = sbr.rel (%p431) target = $region40
      $region39: #{unet_block_innermost_forward.3} parent=35 // pred_region
        _
      $region40: #{unet_block_innermost_forward.3} parent=35 // pred_fallthru
        _
    $region36: #{unet_block_innermost_forward.3} parent=5 // pred_fallthru
      _
    %p434 = scmp.le.s32.totalorder 2, %s10
    // Predicated region
    $region41: #{unet_block_innermost_forward.3} parent=5 // pred_check
      %p435 = pneg %p434
    $region42: #{unet_block_innermost_forward.3} parent=5 // pred_check_branch
      %437 = sbr.rel (%p435) target = $region44
    $region43: #{unet_block_innermost_forward.3} parent=5 // pred_region
      %s438 = ssub.s32 %s10, 2
      // Predicated region
      $region45: #{unet_block_innermost_forward.3} parent=43 // pred_check
        %p439 = pneg %p133
      $region46: #{unet_block_innermost_forward.3} parent=43 // pred_check_branch
        %441 = sbr.rel (%p439) target = $region48
      $region47: #{unet_block_innermost_forward.3} parent=43 // pred_region
        %p442 = scmp.lt.s32.totalorder %s16, 1
        %s443 = scalar_select %p442, %s16, 1
        %s444 = smul.addr %s443, 64
        %s445 = smul.addr %s444, 8
        %s446 = scalar_lea.vmem %s4, %s445
      $region48: #{unet_block_innermost_forward.3} parent=43 // pred_fallthru
        _
    $region44: #{unet_block_innermost_forward.3} parent=5 // pred_fallthru
      _
  $region6: #{unet_block_innermost_forward.3} parent=0 // loop_footer
    %s14 = sadd.s32 1, %s10
  $region7: #{unet_block_innermost_forward.3} parent=0 // loop_footer_branch
    %9 = sbr.rel target = $region3
  $region8: #{unet_block_innermost_forward.3} parent=0 // loop_exit
    _

// kernel: unet_block_innermost_forward.2
$region0: #{unet_block_innermost_forward.2}
  #allocation0 [shape = 'u32[]', space=smem, size = 0x4, offset = 0x4, fixed_abs, tag = 'smem constant byte address 0x4 - core index']
  #allocation1 [shape = 'u32[144,128]{1,0:T(1,128)}', space=vmem, size = 0x12000, scoped, tag = 'internal scratch']
  #allocation2 [shape = 'f32[10,10,8]{2,1,0:T(8,128)}', space=vmem, size = 0x14000, scoped, tag = 'scratch operand']
  %s0 = inlined_call_operand.vmem [shape: f32[2,9,9,16], index: 0, kind: input, shape index: {}]
  %s1 = inlined_call_operand.vmem [shape: bf16[4,16,8], index: 1, kind: input, shape index: {}]
  %s2 = inlined_call_operand.vmem [shape: bf16[2,2,2,2,8,4], index: 2, kind: input, shape index: {}]
  %s3 = inlined_call_operand.vmem [shape: f32[2,2,2,8,8,4], index: 3, kind: output, shape index: {0}]
  %s4 = inlined_call_operand.vmem [shape: f32[2,1,4], index: 4, kind: output, shape index: {1}]
  %s5 = inlined_call_operand.vmem [shape: f32[2,1,4], index: 5, kind: output, shape index: {2}]
  %6 = xla_tuple %s3, %s4, %s5
  %s7 = sld [smem:[#allocation0]]
  $region61: #{unet_block_innermost_forward.2} parent=0
    _
  %s9 = ssub.s32 1, %s7
  %s10 = scalar_select 0, %s9, %s7
  loop: start=0, step=1, limit=4
  $region2: #{unet_block_innermost_forward.2} parent=0 // loop_pre_header
    _
  $region3: #{unet_block_innermost_forward.2} parent=0 // loop_header
    %s12 = sphi 0, %s16
    %p13 = scmp.ge.s32.totalorder %s12, 4
    %s22 = sphi 0, %s24
    %s25 = sphi 0, %s22
    %s26 = sphi 0, %s25
    %s42 = sphi 0, %s26
    %s46 = sphi 0, %s46
    %s48 = sphi 0, %s46
    %s49 = sphi 0, %s48
    %s63 = sphi 0, %s49
    %s67 = sphi 0, %s67
    %s69 = sphi 0, %s67
    %s70 = sphi 0, %s69
    %s84 = sphi 0, %s70
    %s90 = sphi 0, %s92
    %s93 = sphi 0, %s90
    %s94 = sphi 0, %s93
    %s110 = sphi 0, %s94
    %s116 = sphi 0, %s118
    %s119 = sphi 0, %s116
    %s120 = sphi 0, %s119
    %s136 = sphi 0, %s120
    %s142 = sphi 0, %s144
    %s145 = sphi 0, %s142
    %s146 = sphi 0, %s145
    %s162 = sphi 0, %s146
  $region4: #{unet_block_innermost_forward.2} parent=0 // loop_header_branch
    %15 = sbr.rel (%p13) target = $region8
  $region5: #{unet_block_innermost_forward.2} parent=0 // loop_body
    %s17 = ssub.s32 %s12, 1
    %s18 = ssub.s32 %s12, 2
    %s19 = sadd.s32 %s12, 1
    %s20 = ssub.s32 %s12, %s19
    %p21 = scmp.eq.s32.totalorder %s20, 0
    %s23 = sadd.s32 %s22, 1
    %s24 = scalar_select %p21, %s22, %s23
    %p27 = pneg %p21
    %p28 = scmp.eq.s32.totalorder %s12, 1
    %p29 = por %p27, %p28
    %p30 = scmp.ne.s32.totalorder %s22, %s25
    %p31 = scmp.eq.s32.totalorder %s12, 0
    %p32 = por %p30, %p31
    %p33 = scmp.ne.s32.totalorder %s22, %s25
    %p34 = scmp.eq.s32.totalorder %s17, 1
    %p35 = por %p33, %p34
    %p36 = scmp.ne.s32.totalorder %s25, %s26
    %p37 = scmp.eq.s32.totalorder %s17, 0
    %p38 = por %p36, %p37
    %p39 = scmp.ne.s32.totalorder %s25, %s26
    %p40 = scmp.eq.s32.totalorder %s18, 1
    %p41 = por %p39, %p40
    %p43 = scmp.ne.s32.totalorder %s26, %s42
    %p44 = scmp.eq.s32.totalorder %s18, 0
    %p45 = por %p43, %p44
    %s47 = sadd.s32 %s46, 1
    %p50 = scmp.eq.s32.totalorder %s12, 1
    %p51 = scmp.ne.s32.totalorder %s46, %s48
    %p52 = scmp.eq.s32.totalorder %s12, 0
    %p53 = por %p51, %p52
    %p54 = scmp.ne.s32.totalorder %s46, %s48
    %p55 = scmp.eq.s32.totalorder %s17, 1
    %p56 = por %p54, %p55
    %p57 = scmp.ne.s32.totalorder %s48, %s49
    %p58 = scmp.eq.s32.totalorder %s17, 0
    %p59 = por %p57, %p58
    %p60 = scmp.ne.s32.totalorder %s48, %s49
    %p61 = scmp.eq.s32.totalorder %s18, 1
    %p62 = por %p60, %p61
    %p64 = scmp.ne.s32.totalorder %s49, %s63
    %p65 = scmp.eq.s32.totalorder %s18, 0
    %p66 = por %p64, %p65
    %s68 = sadd.s32 %s67, 1
    %p71 = scmp.eq.s32.totalorder %s12, 1
    %p72 = scmp.ne.s32.totalorder %s67, %s69
    %p73 = scmp.eq.s32.totalorder %s12, 0
    %p74 = por %p72, %p73
    %p75 = scmp.ne.s32.totalorder %s67, %s69
    %p76 = scmp.eq.s32.totalorder %s17, 1
    %p77 = por %p75, %p76
    %p78 = scmp.ne.s32.totalorder %s69, %s70
    %p79 = scmp.eq.s32.totalorder %s17, 0
    %p80 = por %p78, %p79
    %p81 = scmp.ne.s32.totalorder %s69, %s70
    %p82 = scmp.eq.s32.totalorder %s18, 1
    %p83 = por %p81, %p82
    %p85 = scmp.ne.s32.totalorder %s70, %s84
    %p86 = scmp.eq.s32.totalorder %s18, 0
    %p87 = por %p85, %p86
    %s88 = ssub.s32 %s12, %s19
    %p89 = scmp.eq.s32.totalorder %s88, 0
    %s91 = sadd.s32 %s90, 1
    %s92 = scalar_select %p89, %s90, %s91
    %p95 = pneg %p89
    %p96 = scmp.eq.s32.totalorder %s12, 1
    %p97 = por %p95, %p96
    %p98 = scmp.ne.s32.totalorder %s90, %s93
    %p99 = scmp.eq.s32.totalorder %s12, 0
    %p100 = por %p98, %p99
    %p101 = scmp.ne.s32.totalorder %s90, %s93
    %p102 = scmp.eq.s32.totalorder %s17, 1
    %p103 = por %p101, %p102
    %p104 = scmp.ne.s32.totalorder %s93, %s94
    %p105 = scmp.eq.s32.totalorder %s17, 0
    %p106 = por %p104, %p105
    %p107 = scmp.ne.s32.totalorder %s93, %s94
    %p108 = scmp.eq.s32.totalorder %s18, 1
    %p109 = por %p107, %p108
    %p111 = scmp.ne.s32.totalorder %s94, %s110
    %p112 = scmp.eq.s32.totalorder %s18, 0
    %p113 = por %p111, %p112
    %s114 = ssub.s32 %s12, %s19
    %p115 = scmp.eq.s32.totalorder %s114, 0
    %s117 = sadd.s32 %s116, 1
    %s118 = scalar_select %p115, %s116, %s117
    %p121 = pneg %p115
    %p122 = scmp.eq.s32.totalorder %s12, 1
    %p123 = por %p121, %p122
    %p124 = scmp.ne.s32.totalorder %s116, %s119
    %p125 = scmp.eq.s32.totalorder %s12, 0
    %p126 = por %p124, %p125
    %p127 = scmp.ne.s32.totalorder %s116, %s119
    %p128 = scmp.eq.s32.totalorder %s17, 1
    %p129 = por %p127, %p128
    %p130 = scmp.ne.s32.totalorder %s119, %s120
    %p131 = scmp.eq.s32.totalorder %s17, 0
    %p132 = por %p130, %p131
    %p133 = scmp.ne.s32.totalorder %s119, %s120
    %p134 = scmp.eq.s32.totalorder %s18, 1
    %p135 = por %p133, %p134
    %p137 = scmp.ne.s32.totalorder %s120, %s136
    %p138 = scmp.eq.s32.totalorder %s18, 0
    %p139 = por %p137, %p138
    %s140 = ssub.s32 %s12, %s19
    %p141 = scmp.eq.s32.totalorder %s140, 0
    %s143 = sadd.s32 %s142, 1
    %s144 = scalar_select %p141, %s142, %s143
    %p147 = pneg %p141
    %p148 = scmp.eq.s32.totalorder %s12, 1
    %p149 = por %p147, %p148
    %p150 = scmp.ne.s32.totalorder %s142, %s145
    %p151 = scmp.eq.s32.totalorder %s12, 0
    %p152 = por %p150, %p151
    %p153 = scmp.ne.s32.totalorder %s142, %s145
    %p154 = scmp.eq.s32.totalorder %s17, 1
    %p155 = por %p153, %p154
    %p156 = scmp.ne.s32.totalorder %s145, %s146
    %p157 = scmp.eq.s32.totalorder %s17, 0
    %p158 = por %p156, %p157
    %p159 = scmp.ne.s32.totalorder %s145, %s146
    %p160 = scmp.eq.s32.totalorder %s18, 1
    %p161 = por %p159, %p160
    %p163 = scmp.ne.s32.totalorder %s146, %s162
    %p164 = scmp.eq.s32.totalorder %s18, 0
    %p165 = por %p163, %p164
    %p166 = scmp.le.s32.totalorder 1, %s12
    %p167 = scmp.lt.s32.totalorder %s12, 3
    %p168 = pnand %p166, %p167
    %p169 = pneg %p168
    // Predicated region
    $region9: #{unet_block_innermost_forward.2} parent=5 // pred_check
      _
    $region10: #{unet_block_innermost_forward.2} parent=5 // pred_check_branch
      %171 = sbr.rel (%p168) target = $region12
    $region11: #{unet_block_innermost_forward.2} parent=5 // pred_region
      %s172 = ssub.s32 %s12, 1
      // Predicated region
      $region13: #{unet_block_innermost_forward.2} parent=11 // pred_check
        %p173 = pneg %p59
      $region14: #{unet_block_innermost_forward.2} parent=11 // pred_check_branch
        %175 = sbr.rel (%p173) target = $region16
      $region15: #{unet_block_innermost_forward.2} parent=11 // pred_region
        _
      $region16: #{unet_block_innermost_forward.2} parent=11 // pred_fallthru
        _
      // Predicated region
      $region17: #{unet_block_innermost_forward.2} parent=11 // pred_check
        %p176 = pneg %p80
      $region18: #{unet_block_innermost_forward.2} parent=11 // pred_check_branch
        %178 = sbr.rel (%p176) target = $region20
      $region19: #{unet_block_innermost_forward.2} parent=11 // pred_region
        _
      $region20: #{unet_block_innermost_forward.2} parent=11 // pred_fallthru
        _
    $region12: #{unet_block_innermost_forward.2} parent=5 // pred_fallthru
      _
    %p179 = scmp.lt.s32.totalorder %s12, 2
    // Predicated region
    $region21: #{unet_block_innermost_forward.2} parent=5 // pred_check
      %p180 = pneg %p179
    $region22: #{unet_block_innermost_forward.2} parent=5 // pred_check_branch
      %182 = sbr.rel (%p180) target = $region24
    $region23: #{unet_block_innermost_forward.2} parent=5 // pred_region
      // Predicated region
      $region25: #{unet_block_innermost_forward.2} parent=23 // pred_check
        %p183 = pneg %p32
      $region26: #{unet_block_innermost_forward.2} parent=23 // pred_check_branch
        %185 = sbr.rel (%p183) target = $region28
      $region27: #{unet_block_innermost_forward.2} parent=23 // pred_region
        %p186 = scmp.lt.s32.totalorder %s12, 1
        %s187 = scalar_select %p186, %s12, 1
        %s188 = smul.addr %s187, 18
        %s189 = smul.addr %s188, 8
        %s190 = scalar_lea.vmem %s0, %s189
      $region28: #{unet_block_innermost_forward.2} parent=23 // pred_fallthru
        _
    $region24: #{unet_block_innermost_forward.2} parent=5 // pred_fallthru
      _
    %p191 = scmp.le.s32.totalorder 1, %s12
    %p192 = scmp.lt.s32.totalorder %s12, 3
    %p193 = pnand %p191, %p192
    %p194 = pneg %p193
    // Predicated region
    $region29: #{unet_block_innermost_forward.2} parent=5 // pred_check
      _
    $region30: #{unet_block_innermost_forward.2} parent=5 // pred_check_branch
      %196 = sbr.rel (%p193) target = $region32
    $region31: #{unet_block_innermost_forward.2} parent=5 // pred_region
      %s197 = ssub.s32 %s12, 1
      %p198 = scmp.lt.s32.totalorder %s17, 1
      %s199 = scalar_select %p198, %s17, 1
      %s200 = smul.addr %s199, 18
      %s201 = smul.addr %s200, 8
      %s202 = scalar_lea.vmem %s0, %s201
      %p203 = pneg %p38
      %p204 = pneg %p35
      %p205 = pneg %p59
      %p206 = pneg %p56
      %p207 = pneg %p80
      %p208 = pneg %p77
      %p209 = pneg %p106
      %p210 = pneg %p103
      %p211 = scmp.lt.s32.totalorder %s17, 1
      %s212 = scalar_select %p211, %s17, 1
      %s213 = smul.addr %s212, 32
      %s214 = smul.addr %s213, 8
      %s215 = scalar_lea.vmem %s3, %s214
      %p216 = pneg %p132
      %p217 = pneg %p129
      %p218 = scmp.lt.s32.totalorder %s17, 1
      %s219 = scalar_select %p218, %s17, 1
      %s220 = scalar_lea.vmem %s4, %s219
      %p221 = pneg %p158
      %p222 = pneg %p155
      %p223 = scmp.lt.s32.totalorder %s17, 1
      %s224 = scalar_select %p223, %s17, 1
      %s225 = scalar_lea.vmem %s5, %s224
      %p226 = scmp.lt.s32.totalorder %s17, 1
      %s227 = scalar_select %p226, %s17, 1
      %s228 = smul.addr %s227, 18
      %s229 = smul.addr %s228, 8
      %s230 = scalar_lea.vmem %s0, %s229
      %p231 = scmp.lt.s32.totalorder %s17, 1
      %s232 = scalar_select %p231, %s17, 1
      %s233 = smul.addr %s232, 32
      %s234 = smul.addr %s233, 8
      %s235 = scalar_lea.vmem %s3, %s234
      %p236 = scmp.lt.s32.totalorder %s17, 1
      %s237 = scalar_select %p236, %s17, 1
      %s238 = scalar_lea.vmem %s4, %s237
      %p239 = scmp.lt.s32.totalorder %s17, 1
      %s240 = scalar_select %p239, %s17, 1
      %s241 = scalar_lea.vmem %s5, %s240
      %v243 = vld [vmem:[%s230] sm:$0xff]
      %v244 = vld [vmem:[%s230 + $0x8] sm:$0x1]
      %v245 = vld [vmem:[%s230 + $0x10] sm:$0xff]
      %v246 = vld [vmem:[%s230 + $0x18] sm:$0x1]
      %v247 = vld [vmem:[%s230 + $0x20] sm:$0xff]
      %v248 = vld [vmem:[%s230 + $0x28] sm:$0x1]
      %v249 = vld [vmem:[%s230 + $0x30] sm:$0xff]
      %v250 = vld [vmem:[%s230 + $0x38] sm:$0x1]
      %v251 = vld [vmem:[%s230 + $0x40] sm:$0xff]
      %v252 = vld [vmem:[%s230 + $0x48] sm:$0x1]
      %v253 = vld [vmem:[%s230 + $0x50] sm:$0xff]
      %v254 = vld [vmem:[%s230 + $0x58] sm:$0x1]
      %v255 = vld [vmem:[%s230 + $0x60] sm:$0xff]
      %v256 = vld [vmem:[%s230 + $0x68] sm:$0x1]
      %v257 = vld [vmem:[%s230 + $0x70] sm:$0xff]
      %v258 = vld [vmem:[%s230 + $0x78] sm:$0x1]
      %v259 = vld [vmem:[%s230 + $0x80] sm:$0xff]
      %v260 = vld [vmem:[%s230 + $0x88] sm:$0x1]
      %vm261 = vcmp.ge.f32.partialorder %v243, 0.0
      %vm262 = vcmp.ge.f32.partialorder %v244, 0.0
      %vm263 = vcmp.ge.f32.partialorder %v245, 0.0
      %vm264 = vcmp.ge.f32.partialorder %v246, 0.0
      %vm265 = vcmp.ge.f32.partialorder %v247, 0.0
      %vm266 = vcmp.ge.f32.partialorder %v248, 0.0
      %vm267 = vcmp.ge.f32.partialorder %v249, 0.0
      %vm268 = vcmp.ge.f32.partialorder %v250, 0.0
      %vm269 = vcmp.ge.f32.partialorder %v251, 0.0
      %vm270 = vcmp.ge.f32.partialorder %v252, 0.0
      %vm271 = vcmp.ge.f32.partialorder %v253, 0.0
      %vm272 = vcmp.ge.f32.partialorder %v254, 0.0
      %vm273 = vcmp.ge.f32.partialorder %v255, 0.0
      %vm274 = vcmp.ge.f32.partialorder %v256, 0.0
      %vm275 = vcmp.ge.f32.partialorder %v257, 0.0
      %vm276 = vcmp.ge.f32.partialorder %v258, 0.0
      %vm277 = vcmp.ge.f32.partialorder %v259, 0.0
      %vm278 = vcmp.ge.f32.partialorder %v260, 0.0
      %v279 = vmul.f32 %v243, 0.2
      %v280 = vmul.f32 %v244, 0.2
      %v281 = vmul.f32 %v245, 0.2
      %v282 = vmul.f32 %v246, 0.2
      %v283 = vmul.f32 %v247, 0.2
      %v284 = vmul.f32 %v248, 0.2
      %v285 = vmul.f32 %v249, 0.2
      %v286 = vmul.f32 %v250, 0.2
      %v287 = vmul.f32 %v251, 0.2
      %v288 = vmul.f32 %v252, 0.2
      %v289 = vmul.f32 %v253, 0.2
      %v290 = vmul.f32 %v254, 0.2
      %v291 = vmul.f32 %v255, 0.2
      %v292 = vmul.f32 %v256, 0.2
      %v293 = vmul.f32 %v257, 0.2
      %v294 = vmul.f32 %v258, 0.2
      %v295 = vmul.f32 %v259, 0.2
      %v296 = vmul.f32 %v260, 0.2
      %v297 = vsel %vm261, %v243, %v279
      %v298 = vsel %vm262, %v244, %v280
      %v299 = vsel %vm263, %v245, %v281
      %v300 = vsel %vm264, %v246, %v282
      %v301 = vsel %vm265, %v247, %v283
      %v302 = vsel %vm266, %v248, %v284
      %v303 = vsel %vm267, %v249, %v285
      %v304 = vsel %vm268, %v250, %v286
      %v305 = vsel %vm269, %v251, %v287
      %v306 = vsel %vm270, %v252, %v288
      %v307 = vsel %vm271, %v253, %v289
      %v308 = vsel %vm272, %v254, %v290
      %v309 = vsel %vm273, %v255, %v291
      %v310 = vsel %vm274, %v256, %v292
      %v311 = vsel %vm275, %v257, %v293
      %v312 = vsel %vm276, %v258, %v294
      %v313 = vsel %vm277, %v259, %v295
      %v314 = vsel %vm278, %v260, %v296
      %v315 = vpack.c.bf16 %v299, %v297
      %v316 = vpack.c.bf16 %v303, %v301
      %v317 = vpack.c.bf16 %v307, %v305
      %v318 = vpack.c.bf16 %v311, %v309
      %v319 = vld [vmem:[%s1] sm:$0xf]
      %v320 = vld [vmem:[%s1 + $0x4] sm:$0xf]
      %vm337 = vcmask 1046528
      %v338 = vrot.slane %v297, 1
      %v339 = vrot.slane %v298, 1
      %v340 = vsel %vm337, %v338, %v339
      %v341 = vrot.slane %v299, 1
      %v342 = vrot.slane %v300, 1
      %v343 = vsel %vm337, %v341, %v342
      %v344 = vrot.slane %v301, 1
      %v345 = vrot.slane %v302, 1
      %v346 = vsel %vm337, %v344, %v345
      %v347 = vrot.slane %v303, 1
      %v348 = vrot.slane %v304, 1
      %v349 = vsel %vm337, %v347, %v348
      %v350 = vrot.slane %v305, 1
      %v351 = vrot.slane %v306, 1
      %v352 = vsel %vm337, %v350, %v351
      %v353 = vrot.slane %v307, 1
      %v354 = vrot.slane %v308, 1
      %v355 = vsel %vm337, %v353, %v354
      %v356 = vrot.slane %v309, 1
      %v357 = vrot.slane %v310, 1
      %v358 = vsel %vm337, %v356, %v357
      %v359 = vrot.slane %v311, 1
      %v360 = vrot.slane %v312, 1
      %v361 = vsel %vm337, %v359, %v360
      %v370 = vpack.c.bf16 %v343, %v340
      %v371 = vpack.c.bf16 %v349, %v346
      %v372 = vpack.c.bf16 %v355, %v352
      %v373 = vpack.c.bf16 %v361, %v358
      %s374 = scalar_lea.vmem %s1, 8
      %v375 = vld [vmem:[%s374] sm:$0xf]
      %v376 = vld [vmem:[%s374 + $0x4] sm:$0xf]
      %v379 = vunpack.c.l.b16 %v375
      %v380 = vunpack.c.l.b16 %v376
      %v381 = vpack.c.b16 %v380, %v379
      %vm383 = vcmask 130048
      %v385 = vsel %vm383, %v370, 0
      %v388 = vsel %vm383, %v371, 0
      %v391 = vsel %vm383, %v372, 0
      %v394 = vsel %vm383, %v373, 0
      %396 = vmatprep.subr.bf16.mxu0 0
      %397 = vmatpush1.bf16.msra.mxu0 0
      %398 = vmatprep.subr.bf16.mxu0 0
      %399 = vmatpush1.bf16.msra.mxu0 0
      %400 = vmatprep.subr.bf16.mxu0 0
      %401 = vmatpush1.bf16.msra.mxu0 0
      %402 = vmatprep.subr.bf16.mxu0 0
      %403 = vmatpush1.bf16.msra.mxu0 0
      %404 = vmatprep.subr.bf16.mxu0 0
      %405 = vmatpush1.bf16.msra.mxu0 0
      %406 = vmatprep.subr.bf16.mxu0 0
      %407 = vmatpush1.bf16.msra.mxu0 0
      %408 = vmatprep.subr.bf16.mxu0 0
      %409 = vmatpush1.bf16.msra.mxu0 0
      %410 = vmatprep.subr.bf16.mxu0 0
      %411 = vmatpush1.bf16.msra.mxu0 %v381
      %412 = vmatprep.subr.bf16.mxu0 0
      %413 = vmatpush2.bf16.msra.mxu0 0
      %414 = vmatprep.subr.bf16.mxu0 0
      %415 = vmatpush2.bf16.msra.mxu0 0
      %416 = vmatprep.subr.bf16.mxu0 0
      %417 = vmatpush2.bf16.msra.mxu0 0
      %418 = vmatprep.subr.bf16.mxu0 0
      %419 = vmatpush2.bf16.msra.mxu0 0
      %420 = vmatprep.subr.bf16.mxu0 0
      %421 = vmatpush2.bf16.msra.mxu0 0
      %422 = vmatprep.subr.bf16.mxu0 0
      %423 = vmatpush2.bf16.msra.mxu0 0
      %424 = vmatprep.subr.bf16.mxu0 0
      %425 = vmatpush2.bf16.msra.mxu0 0
      %426 = vmatprep.subr.bf16.mxu0 0
      %427 = vmatpush2.bf16.msra.mxu0 0
      %428 = vmatprep.mubr.bf16.mxu0 0
      %429 = vmatmul.mubr.bf16.gmra.mxu0 %v385
      %v430 = vpop.f32.mrf.mxu0
      %v431 = vadd.f32 0.0, %v430
      %v432 = vpop.f32.mrf.mxu0
      %v433 = vpop.f32.mrf.mxu0
      %v434 = vadd.f32 0.0, %v433
      %v435 = vpop.f32.mrf.mxu0
      %436 = vmatprep.mubr.bf16.mxu0 0
      %437 = vmatmul.mubr.bf16.gmra.mxu0 %v388
      %v438 = vpop.f32.mrf.mxu0
      %v439 = vadd.f32 0.0, %v438
      %v440 = vpop.f32.mrf.mxu0
      %v441 = vpop.f32.mrf.mxu0
      %v442 = vadd.f32 0.0, %v441
      %v443 = vpop.f32.mrf.mxu0
      %444 = vmatprep.mubr.bf16.mxu0 0
      %445 = vmatmul.mubr.bf16.gmra.mxu0 %v391
      %v446 = vpop.f32.mrf.mxu0
      %v447 = vadd.f32 0.0, %v446
      %v448 = vpop.f32.mrf.mxu0
      %v449 = vpop.f32.mrf.mxu0
      %v450 = vadd.f32 0.0, %v449
      %v451 = vpop.f32.mrf.mxu0
      %452 = vmatprep.mubr.bf16.mxu0 0
      %453 = vmatmul.mubr.bf16.gmra.mxu0 %v394
      %v454 = vpop.f32.mrf.mxu0
      %v455 = vadd.f32 0.0, %v454
      %v456 = vpop.f32.mrf.mxu0
      %v457 = vpop.f32.mrf.mxu0
      %v458 = vadd.f32 0.0, %v457
      %v459 = vpop.f32.mrf.mxu0
      %460 = vdwg.mxu0
      %v463 = vunpack.c.l.b16 %v319
      %v464 = vunpack.c.l.b16 %v320
      %v465 = vpack.c.b16 %v464, %v463
      %v468 = vsel %vm383, %v315, 0
      %v471 = vsel %vm383, %v316, 0
      %v474 = vsel %vm383, %v317, 0
      %v477 = vsel %vm383, %v318, 0
      %479 = vmatprep.subr.bf16.mxu0 0
      %480 = vmatpush1.bf16.msra.mxu0 0
      %481 = vmatprep.subr.bf16.mxu0 0
      %482 = vmatpush1.bf16.msra.mxu0 0
      %483 = vmatprep.subr.bf16.mxu0 0
      %484 = vmatpush1.bf16.msra.mxu0 0
      %485 = vmatprep.subr.bf16.mxu0 0
      %486 = vmatpush1.bf16.msra.mxu0 0
      %487 = vmatprep.subr.bf16.mxu0 0
      %488 = vmatpush1.bf16.msra.mxu0 0
      %489 = vmatprep.subr.bf16.mxu0 0
      %490 = vmatpush1.bf16.msra.mxu0 0
      %491 = vmatprep.subr.bf16.mxu0 0
      %492 = vmatpush1.bf16.msra.mxu0 0
      %493 = vmatprep.subr.bf16.mxu0 0
      %494 = vmatpush1.bf16.msra.mxu0 %v465
      %495 = vmatprep.subr.bf16.mxu0 0
      %496 = vmatpush2.bf16.msra.mxu0 0
      %497 = vmatprep.subr.bf16.mxu0 0
      %498 = vmatpush2.bf16.msra.mxu0 0
      %499 = vmatprep.subr.bf16.mxu0 0
      %500 = vmatpush2.bf16.msra.mxu0 0
      %501 = vmatprep.subr.bf16.mxu0 0
      %502 = vmatpush2.bf16.msra.mxu0 0
      %503 = vmatprep.subr.bf16.mxu0 0
      %504 = vmatpush2.bf16.msra.mxu0 0
      %505 = vmatprep.subr.bf16.mxu0 0
      %506 = vmatpush2.bf16.msra.mxu0 0
      %507 = vmatprep.subr.bf16.mxu0 0
      %508 = vmatpush2.bf16.msra.mxu0 0
      %509 = vmatprep.subr.bf16.mxu0 0
      %510 = vmatpush2.bf16.msra.mxu0 0
      %511 = vmatprep.mubr.bf16.mxu0 0
      %512 = vmatmul.mubr.bf16.gmra.mxu0 %v468
      %v513 = vpop.f32.mrf.mxu0
      %v514 = vadd.f32 %v431, %v513
      %v515 = vpop.f32.mrf.mxu0
      %v516 = vpop.f32.mrf.mxu0
      %v517 = vadd.f32 %v434, %v516
      %v518 = vpop.f32.mrf.mxu0
      %519 = vmatprep.mubr.bf16.mxu0 0
      %520 = vmatmul.mubr.bf16.gmra.mxu0 %v471
      %v521 = vpop.f32.mrf.mxu0
      %v522 = vadd.f32 %v439, %v521
      %v523 = vpop.f32.mrf.mxu0
      %v524 = vpop.f32.mrf.mxu0
      %v525 = vadd.f32 %v442, %v524
      %v526 = vpop.f32.mrf.mxu0
      %527 = vmatprep.mubr.bf16.mxu0 0
      %528 = vmatmul.mubr.bf16.gmra.mxu0 %v474
      %v529 = vpop.f32.mrf.mxu0
      %v530 = vadd.f32 %v447, %v529
      %v531 = vpop.f32.mrf.mxu0
      %v532 = vpop.f32.mrf.mxu0
      %v533 = vadd.f32 %v450, %v532
      %v534 = vpop.f32.mrf.mxu0
      %535 = vmatprep.mubr.bf16.mxu0 0
      %536 = vmatmul.mubr.bf16.gmra.mxu0 %v477
      %v537 = vpop.f32.mrf.mxu0
      %v538 = vadd.f32 %v455, %v537
      %v539 = vpop.f32.mrf.mxu0
      %v540 = vpop.f32.mrf.mxu0
      %v541 = vadd.f32 %v458, %v540
      %v542 = vpop.f32.mrf.mxu0
      %543 = vdwg.mxu0
      %v544 = vpack.c.bf16 %v301, %v299
      %v545 = vpack.c.bf16 %v305, %v303
      %v546 = vpack.c.bf16 %v309, %v307
      %v547 = vpack.c.bf16 %v313, %v311
      %s548 = scalar_lea.vmem %s1, 16
      %v549 = vld [vmem:[%s548] sm:$0xf]
      %v550 = vld [vmem:[%s548 + $0x4] sm:$0xf]
      %v553 = vunpack.c.l.b16 %v549
      %v554 = vunpack.c.l.b16 %v550
      %v555 = vpack.c.b16 %v554, %v553
      %v558 = vsel %vm383, %v544, 0
      %v561 = vsel %vm383, %v545, 0
      %v564 = vsel %vm383, %v546, 0
      %v567 = vsel %vm383, %v547, 0
      %569 = vmatprep.subr.bf16.mxu0 0
      %570 = vmatpush1.bf16.msra.mxu0 0
      %571 = vmatprep.subr.bf16.mxu0 0
      %572 = vmatpush1.bf16.msra.mxu0 0
      %573 = vmatprep.subr.bf16.mxu0 0
      %574 = vmatpush1.bf16.msra.mxu0 0
      %575 = vmatprep.subr.bf16.mxu0 0
      %576 = vmatpush1.bf16.msra.mxu0 0
      %577 = vmatprep.subr.bf16.mxu0 0
      %578 = vmatpush1.bf16.msra.mxu0 0
      %579 = vmatprep.subr.bf16.mxu0 0
      %580 = vmatpush1.bf16.msra.mxu0 0
      %581 = vmatprep.subr.bf16.mxu0 0
      %582 = vmatpush1.bf16.msra.mxu0 0
      %583 = vmatprep.subr.bf16.mxu0 0
      %584 = vmatpush1.bf16.msra.mxu0 %v555
      %585 = vmatprep.subr.bf16.mxu0 0
      %586 = vmatpush2.bf16.msra.mxu0 0
      %587 = vmatprep.subr.bf16.mxu0 0
      %588 = vmatpush2.bf16.msra.mxu0 0
      %589 = vmatprep.subr.bf16.mxu0 0
      %590 = vmatpush2.bf16.msra.mxu0 0
      %591 = vmatprep.subr.bf16.mxu0 0
      %592 = vmatpush2.bf16.msra.mxu0 0
      %593 = vmatprep.subr.bf16.mxu0 0
      %594 = vmatpush2.bf16.msra.mxu0 0
      %595 = vmatprep.subr.bf16.mxu0 0
      %596 = vmatpush2.bf16.msra.mxu0 0
      %597 = vmatprep.subr.bf16.mxu0 0
      %598 = vmatpush2.bf16.msra.mxu0 0
      %599 = vmatprep.subr.bf16.mxu0 0
      %600 = vmatpush2.bf16.msra.mxu0 0
      %601 = vmatprep.mubr.bf16.mxu0 0
      %602 = vmatmul.mubr.bf16.gmra.mxu0 %v558
      %v603 = vpop.f32.mrf.mxu0
      %v604 = vadd.f32 0.0, %v603
      %v605 = vpop.f32.mrf.mxu0
      %v606 = vpop.f32.mrf.mxu0
      %v607 = vadd.f32 0.0, %v606
      %v608 = vpop.f32.mrf.mxu0
      %609 = vmatprep.mubr.bf16.mxu0 0
      %610 = vmatmul.mubr.bf16.gmra.mxu0 %v561
      %v611 = vpop.f32.mrf.mxu0
      %v612 = vadd.f32 0.0, %v611
      %v613 = vpop.f32.mrf.mxu0
      %v614 = vpop.f32.mrf.mxu0
      %v615 = vadd.f32 0.0, %v614
      %v616 = vpop.f32.mrf.mxu0
      %617 = vmatprep.mubr.bf16.mxu0 0
      %618 = vmatmul.mubr.bf16.gmra.mxu0 %v564
      %v619 = vpop.f32.mrf.mxu0
      %v620 = vadd.f32 0.0, %v619
      %v621 = vpop.f32.mrf.mxu0
      %v622 = vpop.f32.mrf.mxu0
      %v623 = vadd.f32 0.0, %v622
      %v624 = vpop.f32.mrf.mxu0
      %625 = vmatprep.mubr.bf16.mxu0 0
      %626 = vmatmul.mubr.bf16.gmra.mxu0 %v567
      %v627 = vpop.f32.mrf.mxu0
      %v628 = vadd.f32 0.0, %v627
      %v629 = vpop.f32.mrf.mxu0
      %v630 = vpop.f32.mrf.mxu0
      %v631 = vadd.f32 0.0, %v630
      %v632 = vpop.f32.mrf.mxu0
      %633 = vdwg.mxu0
      %v634 = vadd.f32 %v514, %v604
      %v635 = vadd.f32 %v517, %v607
      %v636 = vadd.f32 %v522, %v612
      %v637 = vadd.f32 %v525, %v615
      %v638 = vadd.f32 %v530, %v620
      %v639 = vadd.f32 %v533, %v623
      %v640 = vadd.f32 %v538, %v628
      %v641 = vadd.f32 %v541, %v631
      %v644 = vrot.slane %v313, 1
      %v645 = vrot.slane %v314, 1
      %v646 = vsel %vm337, %v644, %v645
      %v648 = vpack.c.bf16 %v346, %v343
      %v649 = vpack.c.bf16 %v352, %v349
      %v650 = vpack.c.bf16 %v358, %v355
      %v651 = vpack.c.bf16 %v646, %v361
      %s652 = scalar_lea.vmem %s1, 24
      %v653 = vld [vmem:[%s652] sm:$0xf]
      %v654 = vld [vmem:[%s652 + $0x4] sm:$0xf]
      %v657 = vunpack.c.l.b16 %v653
      %v658 = vunpack.c.l.b16 %v654
      %v659 = vpack.c.b16 %v658, %v657
      %v662 = vsel %vm383, %v648, 0
      %v665 = vsel %vm383, %v649, 0
      %v668 = vsel %vm383, %v650, 0
      %v671 = vsel %vm383, %v651, 0
      %673 = vmatprep.subr.bf16.mxu0 0
      %674 = vmatpush1.bf16.msra.mxu0 0
      %675 = vmatprep.subr.bf16.mxu0 0
      %676 = vmatpush1.bf16.msra.mxu0 0
      %677 = vmatprep.subr.bf16.mxu0 0
      %678 = vmatpush1.bf16.msra.mxu0 0
      %679 = vmatprep.subr.bf16.mxu0 0
      %680 = vmatpush1.bf16.msra.mxu0 0
      %681 = vmatprep.subr.bf16.mxu0 0
      %682 = vmatpush1.bf16.msra.mxu0 0
      %683 = vmatprep.subr.bf16.mxu0 0
      %684 = vmatpush1.bf16.msra.mxu0 0
      %685 = vmatprep.subr.bf16.mxu0 0
      %686 = vmatpush1.bf16.msra.mxu0 0
      %687 = vmatprep.subr.bf16.mxu0 0
      %688 = vmatpush1.bf16.msra.mxu0 %v659
      %689 = vmatprep.subr.bf16.mxu0 0
      %690 = vmatpush2.bf16.msra.mxu0 0
      %691 = vmatprep.subr.bf16.mxu0 0
      %692 = vmatpush2.bf16.msra.mxu0 0
      %693 = vmatprep.subr.bf16.mxu0 0
      %694 = vmatpush2.bf16.msra.mxu0 0
      %695 = vmatprep.subr.bf16.mxu0 0
      %696 = vmatpush2.bf16.msra.mxu0 0
      %697 = vmatprep.subr.bf16.mxu0 0
      %698 = vmatpush2.bf16.msra.mxu0 0
      %699 = vmatprep.subr.bf16.mxu0 0
      %700 = vmatpush2.bf16.msra.mxu0 0
      %701 = vmatprep.subr.bf16.mxu0 0
      %702 = vmatpush2.bf16.msra.mxu0 0
      %703 = vmatprep.subr.bf16.mxu0 0
      %704 = vmatpush2.bf16.msra.mxu0 0
      %705 = vmatprep.mubr.bf16.mxu0 0
      %706 = vmatmul.mubr.bf16.gmra.mxu0 %v662
      %v707 = vpop.f32.mrf.mxu0
      %v708 = vadd.f32 0.0, %v707
      %v709 = vpop.f32.mrf.mxu0
      %v710 = vpop.f32.mrf.mxu0
      %v711 = vadd.f32 0.0, %v710
      %v712 = vpop.f32.mrf.mxu0
      %713 = vmatprep.mubr.bf16.mxu0 0
      %714 = vmatmul.mubr.bf16.gmra.mxu0 %v665
      %v715 = vpop.f32.mrf.mxu0
      %v716 = vadd.f32 0.0, %v715
      %v717 = vpop.f32.mrf.mxu0
      %v718 = vpop.f32.mrf.mxu0
      %v719 = vadd.f32 0.0, %v718
      %v720 = vpop.f32.mrf.mxu0
      %721 = vmatprep.mubr.bf16.mxu0 0
      %722 = vmatmul.mubr.bf16.gmra.mxu0 %v668
      %v723 = vpop.f32.mrf.mxu0
      %v724 = vadd.f32 0.0, %v723
      %v725 = vpop.f32.mrf.mxu0
      %v726 = vpop.f32.mrf.mxu0
      %v727 = vadd.f32 0.0, %v726
      %v728 = vpop.f32.mrf.mxu0
      %729 = vmatprep.mubr.bf16.mxu0 0
      %730 = vmatmul.mubr.bf16.gmra.mxu0 %v671
      %v731 = vpop.f32.mrf.mxu0
      %v732 = vadd.f32 0.0, %v731
      %v733 = vpop.f32.mrf.mxu0
      %v734 = vpop.f32.mrf.mxu0
      %v735 = vadd.f32 0.0, %v734
      %v736 = vpop.f32.mrf.mxu0
      %737 = vdwg.mxu0
      %v738 = vadd.f32 %v634, %v708
      %v739 = vadd.f32 %v635, %v711
      %v740 = vadd.f32 %v636, %v716
      %v741 = vadd.f32 %v637, %v719
      %v742 = vadd.f32 %v638, %v724
      %v743 = vadd.f32 %v639, %v727
      %v744 = vadd.f32 %v640, %v732
      %v745 = vadd.f32 %v641, %v735
      %v746 = vmax.f32 %v738, 0.0
      %v747 = vmax.f32 %v739, 0.0
      %v748 = vmax.f32 %v740, 0.0
      %v749 = vmax.f32 %v741, 0.0
      %v750 = vmax.f32 %v742, 0.0
      %v751 = vmax.f32 %v743, 0.0
      %v752 = vmax.f32 %v744, 0.0
      %v753 = vmax.f32 %v745, 0.0
      %vm754 = vcmask 64512
      %755 = vst.msk [vmem:[#allocation2] sm:$0xff] %vm754, 0.0
      %vm756 = vcmask 58368
      %757 = vst.msk [vmem:[#allocation2 + $0x8] sm:$0x3] %vm756, 0.0
      %758 = vst.msk [vmem:[#allocation2 + $0x10] sm:$0xff] %vm754, 0.0
      %759 = vst.msk [vmem:[#allocation2 + $0x18] sm:$0x3] %vm756, 0.0
      %760 = vst.msk [vmem:[#allocation2 + $0x20] sm:$0xff] %vm754, 0.0
      %761 = vst.msk [vmem:[#allocation2 + $0x28] sm:$0x3] %vm756, 0.0
      %762 = vst.msk [vmem:[#allocation2 + $0x30] sm:$0xff] %vm754, 0.0
      %763 = vst.msk [vmem:[#allocation2 + $0x38] sm:$0x3] %vm756, 0.0
      %764 = vst.msk [vmem:[#allocation2 + $0x40] sm:$0xff] %vm754, 0.0
      %765 = vst.msk [vmem:[#allocation2 + $0x48] sm:$0x3] %vm756, 0.0
      %766 = vst.msk [vmem:[#allocation2 + $0x50] sm:$0xff] %vm754, 0.0
      %767 = vst.msk [vmem:[#allocation2 + $0x58] sm:$0x3] %vm756, 0.0
      %768 = vst.msk [vmem:[#allocation2 + $0x60] sm:$0xff] %vm754, 0.0
      %769 = vst.msk [vmem:[#allocation2 + $0x68] sm:$0x3] %vm756, 0.0
      %770 = vst.msk [vmem:[#allocation2 + $0x70] sm:$0xff] %vm754, 0.0
      %771 = vst.msk [vmem:[#allocation2 + $0x78] sm:$0x3] %vm756, 0.0
      %772 = vst.msk [vmem:[#allocation2 + $0x80] sm:$0xff] %vm754, 0.0
      %773 = vst.msk [vmem:[#allocation2 + $0x88] sm:$0x3] %vm756, 0.0
      %774 = vst.msk [vmem:[#allocation2 + $0x90] sm:$0xff] %vm754, 0.0
      %775 = vst.msk [vmem:[#allocation2 + $0x98] sm:$0x3] %vm756, 0.0
      %s776 = scalar_lea.vmem [#allocation2], 16
      %777 = vst.msk [vmem:[%s776 + $0x1] sm:$0xff] %vm754, %v746
      %778 = vst.msk [vmem:[%s776 + $0x11] sm:$0xff] %vm754, %v747
      %779 = vst.msk [vmem:[%s776 + $0x21] sm:$0xff] %vm754, %v748
      %780 = vst.msk [vmem:[%s776 + $0x31] sm:$0xff] %vm754, %v749
      %781 = vst.msk [vmem:[%s776 + $0x41] sm:$0xff] %vm754, %v750
      %782 = vst.msk [vmem:[%s776 + $0x51] sm:$0xff] %vm754, %v751
      %783 = vst.msk [vmem:[%s776 + $0x61] sm:$0xff] %vm754, %v752
      %784 = vst.msk [vmem:[%s776 + $0x71] sm:$0xff] %vm754, %v753
      %v785 = vld [vmem:[#allocation2] sm:$0xff]
      %v786 = vld [vmem:[#allocation2 + $0x10] sm:$0xff]
      %v787 = vld [vmem:[#allocation2 + $0x20] sm:$0xff]
      %v788 = vld [vmem:[#allocation2 + $0x30] sm:$0xff]
      %v789 = vld [vmem:[#allocation2 + $0x40] sm:$0xff]
      %v790 = vld [vmem:[#allocation2 + $0x50] sm:$0xff]
      %v791 = vld [vmem:[#allocation2 + $0x60] sm:$0xff]
      %v792 = vld [vmem:[#allocation2 + $0x70] sm:$0xff]
      %v793 = vpack.c.bf16 %v786, %v785
      %v794 = vpack.c.bf16 %v788, %v787
      %v795 = vpack.c.bf16 %v790, %v789
      %v796 = vpack.c.bf16 %v792, %v791
      %v797 = vld [vmem:[%s2] sm:$0xf]
      %v798 = vld [vmem:[#allocation2 + $0x1] sm:$0xff]
      %v799 = vld [vmem:[#allocation2 + $0x11] sm:$0xff]
      %v800 = vld [vmem:[#allocation2 + $0x21] sm:$0xff]
      %v801 = vld [vmem:[#allocation2 + $0x31] sm:$0xff]
      %v802 = vld [vmem:[#allocation2 + $0x41] sm:$0xff]
      %v803 = vld [vmem:[#allocation2 + $0x51] sm:$0xff]
      %v804 = vld [vmem:[#allocation2 + $0x61] sm:$0xff]
      %v805 = vld [vmem:[#allocation2 + $0x71] sm:$0xff]
      %v806 = vpack.c.bf16 %v799, %v798
      %v807 = vpack.c.bf16 %v801, %v800
      %v808 = vpack.c.bf16 %v803, %v802
      %v809 = vpack.c.bf16 %v805, %v804
      %s810 = scalar_lea.vmem %s2, 4
      %v811 = vld [vmem:[%s810] sm:$0xf]
      %v813 = vsel %vm754, %v806, 0
      %v816 = vsel %vm754, %v807, 0
      %v819 = vsel %vm754, %v808, 0
      %v822 = vsel %vm754, %v809, 0
      %vm824 = vcmask 1043456
      %v826 = vsel %vm824, %v811, 0
      %828 = vmatprep.subr.bf16.mxu0 0
      %829 = vmatpush1.bf16.msra.mxu0 0
      %830 = vmatprep.subr.bf16.mxu0 0
      %831 = vmatpush1.bf16.msra.mxu0 0
      %832 = vmatprep.subr.bf16.mxu0 0
      %833 = vmatpush1.bf16.msra.mxu0 0
      %834 = vmatprep.subr.bf16.mxu0 0
      %835 = vmatpush1.bf16.msra.mxu0 0
      %836 = vmatprep.subr.bf16.mxu0 0
      %837 = vmatpush1.bf16.msra.mxu0 0
      %838 = vmatprep.subr.bf16.mxu0 0
      %839 = vmatpush1.bf16.msra.mxu0 0
      %840 = vmatprep.subr.bf16.mxu0 0
      %841 = vmatpush1.bf16.msra.mxu0 0
      %842 = vmatprep.subr.bf16.mxu0 0
      %843 = vmatpush1.bf16.msra.mxu0 %v826
      %844 = vmatprep.subr.bf16.mxu0 0
      %845 = vmatpush2.bf16.msra.mxu0 0
      %846 = vmatprep.subr.bf16.mxu0 0
      %847 = vmatpush2.bf16.msra.mxu0 0
      %848 = vmatprep.subr.bf16.mxu0 0
      %849 = vmatpush2.bf16.msra.mxu0 0
      %850 = vmatprep.subr.bf16.mxu0 0
      %851 = vmatpush2.bf16.msra.mxu0 0
      %852 = vmatprep.subr.bf16.mxu0 0
      %853 = vmatpush2.bf16.msra.mxu0 0
      %854 = vmatprep.subr.bf16.mxu0 0
      %855 = vmatpush2.bf16.msra.mxu0 0
      %856 = vmatprep.subr.bf16.mxu0 0
      %857 = vmatpush2.bf16.msra.mxu0 0
      %858 = vmatprep.subr.bf16.mxu0 0
      %859 = vmatpush2.bf16.msra.mxu0 0
      %860 = vmatprep.mubr.bf16.mxu0 0
      %861 = vmatmul.mubr.bf16.gmra.mxu0 %v813
      %v862 = vpop.f32.mrf.mxu0
      %v863 = vadd.f32 0.0, %v862
      %v864 = vpop.f32.mrf.mxu0
      %v865 = vpop.f32.mrf.mxu0
      %v866 = vadd.f32 0.0, %v865
      %v867 = vpop.f32.mrf.mxu0
      %868 = vmatprep.mubr.bf16.mxu0 0
      %869 = vmatmul.mubr.bf16.gmra.mxu0 %v816
      %v870 = vpop.f32.mrf.mxu0
      %v871 = vadd.f32 0.0, %v870
      %v872 = vpop.f32.mrf.mxu0
      %v873 = vpop.f32.mrf.mxu0
      %v874 = vadd.f32 0.0, %v873
      %v875 = vpop.f32.mrf.mxu0
      %876 = vmatprep.mubr.bf16.mxu0 0
      %877 = vmatmul.mubr.bf16.gmra.mxu0 %v819
      %v878 = vpop.f32.mrf.mxu0
      %v879 = vadd.f32 0.0, %v878
      %v880 = vpop.f32.mrf.mxu0
      %v881 = vpop.f32.mrf.mxu0
      %v882 = vadd.f32 0.0, %v881
      %v883 = vpop.f32.mrf.mxu0
      %884 = vmatprep.mubr.bf16.mxu0 0
      %885 = vmatmul.mubr.bf16.gmra.mxu0 %v822
      %v886 = vpop.f32.mrf.mxu0
      %v887 = vadd.f32 0.0, %v886
      %v888 = vpop.f32.mrf.mxu0
      %v889 = vpop.f32.mrf.mxu0
      %v890 = vadd.f32 0.0, %v889
      %v891 = vpop.f32.mrf.mxu0
      %892 = vdwg.mxu0
      %v894 = vsel %vm754, %v793, 0
      %v897 = vsel %vm754, %v794, 0
      %v900 = vsel %vm754, %v795, 0
      %v903 = vsel %vm754, %v796, 0
      %v906 = vsel %vm824, %v797, 0
      %908 = vmatprep.subr.bf16.mxu0 0
      %909 = vmatpush1.bf16.msra.mxu0 0
      %910 = vmatprep.subr.bf16.mxu0 0
      %911 = vmatpush1.bf16.msra.mxu0 0
      %912 = vmatprep.subr.bf16.mxu0 0
      %913 = vmatpush1.bf16.msra.mxu0 0
      %914 = vmatprep.subr.bf16.mxu0 0
      %915 = vmatpush1.bf16.msra.mxu0 0
      %916 = vmatprep.subr.bf16.mxu0 0
      %917 = vmatpush1.bf16.msra.mxu0 0
      %918 = vmatprep.subr.bf16.mxu0 0
      %919 = vmatpush1.bf16.msra.mxu0 0
      %920 = vmatprep.subr.bf16.mxu0 0
      %921 = vmatpush1.bf16.msra.mxu0 0
      %922 = vmatprep.subr.bf16.mxu0 0
      %923 = vmatpush1.bf16.msra.mxu0 %v906
      %924 = vmatprep.subr.bf16.mxu0 0
      %925 = vmatpush2.bf16.msra.mxu0 0
      %926 = vmatprep.subr.bf16.mxu0 0
      %927 = vmatpush2.bf16.msra.mxu0 0
      %928 = vmatprep.subr.bf16.mxu0 0
      %929 = vmatpush2.bf16.msra.mxu0 0
      %930 = vmatprep.subr.bf16.mxu0 0
      %931 = vmatpush2.bf16.msra.mxu0 0
      %932 = vmatprep.subr.bf16.mxu0 0
      %933 = vmatpush2.bf16.msra.mxu0 0
      %934 = vmatprep.subr.bf16.mxu0 0
      %935 = vmatpush2.bf16.msra.mxu0 0
      %936 = vmatprep.subr.bf16.mxu0 0
      %937 = vmatpush2.bf16.msra.mxu0 0
      %938 = vmatprep.subr.bf16.mxu0 0
      %939 = vmatpush2.bf16.msra.mxu0 0
      %940 = vmatprep.mubr.bf16.mxu0 0
      %941 = vmatmul.mubr.bf16.gmra.mxu0 %v894
      %v942 = vpop.f32.mrf.mxu0
      %v943 = vadd.f32 %v863, %v942
      %v944 = vpop.f32.mrf.mxu0
      %v945 = vpop.f32.mrf.mxu0
      %v946 = vadd.f32 %v866, %v945
      %v947 = vpop.f32.mrf.mxu0
      %948 = vmatprep.mubr.bf16.mxu0 0
      %949 = vmatmul.mubr.bf16.gmra.mxu0 %v897
      %v950 = vpop.f32.mrf.mxu0
      %v951 = vadd.f32 %v871, %v950
      %v952 = vpop.f32.mrf.mxu0
      %v953 = vpop.f32.mrf.mxu0
      %v954 = vadd.f32 %v874, %v953
      %v955 = vpop.f32.mrf.mxu0
      %956 = vmatprep.mubr.bf16.mxu0 0
      %957 = vmatmul.mubr.bf16.gmra.mxu0 %v900
      %v958 = vpop.f32.mrf.mxu0
      %v959 = vadd.f32 %v879, %v958
      %v960 = vpop.f32.mrf.mxu0
      %v961 = vpop.f32.mrf.mxu0
      %v962 = vadd.f32 %v882, %v961
      %v963 = vpop.f32.mrf.mxu0
      %964 = vmatprep.mubr.bf16.mxu0 0
      %965 = vmatmul.mubr.bf16.gmra.mxu0 %v903
      %v966 = vpop.f32.mrf.mxu0
      %v967 = vadd.f32 %v887, %v966
      %v968 = vpop.f32.mrf.mxu0
      %v969 = vpop.f32.mrf.mxu0
      %v970 = vadd.f32 %v890, %v969
      %v971 = vpop.f32.mrf.mxu0
      %972 = vdwg.mxu0
      %v973 = vld [vmem:[%s776] sm:$0xff]
      %v974 = vld [vmem:[%s776 + $0x10] sm:$0xff]
      %v975 = vld [vmem:[%s776 + $0x20] sm:$0xff]
      %v976 = vld [vmem:[%s776 + $0x30] sm:$0xff]
      %v977 = vld [vmem:[%s776 + $0x40] sm:$0xff]
      %v978 = vld [vmem:[%s776 + $0x50] sm:$0xff]
      %v979 = vld [vmem:[%s776 + $0x60] sm:$0xff]
      %v980 = vld [vmem:[%s776 + $0x70] sm:$0xff]
      %v981 = vpack.c.bf16 %v974, %v973
      %v982 = vpack.c.bf16 %v976, %v975
      %v983 = vpack.c.bf16 %v978, %v977
      %v984 = vpack.c.bf16 %v980, %v979
      %s985 = scalar_lea.vmem %s2, 8
      %v986 = vld [vmem:[%s985] sm:$0xf]
      %v988 = vsel %vm754, %v981, 0
      %v991 = vsel %vm754, %v982, 0
      %v994 = vsel %vm754, %v983, 0
      %v997 = vsel %vm754, %v984, 0
      %v1000 = vsel %vm824, %v986, 0
      %1002 = vmatprep.subr.bf16.mxu0 0
      %1003 = vmatpush1.bf16.msra.mxu0 0
      %1004 = vmatprep.subr.bf16.mxu0 0
      %1005 = vmatpush1.bf16.msra.mxu0 0
      %1006 = vmatprep.subr.bf16.mxu0 0
      %1007 = vmatpush1.bf16.msra.mxu0 0
      %1008 = vmatprep.subr.bf16.mxu0 0
      %1009 = vmatpush1.bf16.msra.mxu0 0
      %1010 = vmatprep.subr.bf16.mxu0 0
      %1011 = vmatpush1.bf16.msra.mxu0 0
      %1012 = vmatprep.subr.bf16.mxu0 0
      %1013 = vmatpush1.bf16.msra.mxu0 0
      %1014 = vmatprep.subr.bf16.mxu0 0
      %1015 = vmatpush1.bf16.msra.mxu0 0
      %1016 = vmatprep.subr.bf16.mxu0 0
      %1017 = vmatpush1.bf16.msra.mxu0 %v1000
      %1018 = vmatprep.subr.bf16.mxu0 0
      %1019 = vmatpush2.bf16.msra.mxu0 0
      %1020 = vmatprep.subr.bf16.mxu0 0
      %1021 = vmatpush2.bf16.msra.mxu0 0
      %1022 = vmatprep.subr.bf16.mxu0 0
      %1023 = vmatpush2.bf16.msra.mxu0 0
      %1024 = vmatprep.subr.bf16.mxu0 0
      %1025 = vmatpush2.bf16.msra.mxu0 0
      %1026 = vmatprep.subr.bf16.mxu0 0
      %1027 = vmatpush2.bf16.msra.mxu0 0
      %1028 = vmatprep.subr.bf16.mxu0 0
      %1029 = vmatpush2.bf16.msra.mxu0 0
      %1030 = vmatprep.subr.bf16.mxu0 0
      %1031 = vmatpush2.bf16.msra.mxu0 0
      %1032 = vmatprep.subr.bf16.mxu0 0
      %1033 = vmatpush2.bf16.msra.mxu0 0
      %1034 = vmatprep.mubr.bf16.mxu0 0
      %1035 = vmatmul.mubr.bf16.gmra.mxu0 %v988
      %v1036 = vpop.f32.mrf.mxu0
      %v1037 = vadd.f32 0.0, %v1036
      %v1038 = vpop.f32.mrf.mxu0
      %v1039 = vpop.f32.mrf.mxu0
      %v1040 = vadd.f32 0.0, %v1039
      %v1041 = vpop.f32.mrf.mxu0
      %1042 = vmatprep.mubr.bf16.mxu0 0
      %1043 = vmatmul.mubr.bf16.gmra.mxu0 %v991
      %v1044 = vpop.f32.mrf.mxu0
      %v1045 = vadd.f32 0.0, %v1044
      %v1046 = vpop.f32.mrf.mxu0
      %v1047 = vpop.f32.mrf.mxu0
      %v1048 = vadd.f32 0.0, %v1047
      %v1049 = vpop.f32.mrf.mxu0
      %1050 = vmatprep.mubr.bf16.mxu0 0
      %1051 = vmatmul.mubr.bf16.gmra.mxu0 %v994
      %v1052 = vpop.f32.mrf.mxu0
      %v1053 = vadd.f32 0.0, %v1052
      %v1054 = vpop.f32.mrf.mxu0
      %v1055 = vpop.f32.mrf.mxu0
      %v1056 = vadd.f32 0.0, %v1055
      %v1057 = vpop.f32.mrf.mxu0
      %1058 = vmatprep.mubr.bf16.mxu0 0
      %1059 = vmatmul.mubr.bf16.gmra.mxu0 %v997
      %v1060 = vpop.f32.mrf.mxu0
      %v1061 = vadd.f32 0.0, %v1060
      %v1062 = vpop.f32.mrf.mxu0
      %v1063 = vpop.f32.mrf.mxu0
      %v1064 = vadd.f32 0.0, %v1063
      %v1065 = vpop.f32.mrf.mxu0
      %1066 = vdwg.mxu0
      %v1067 = vadd.f32 %v943, %v1037
      %v1068 = vadd.f32 %v946, %v1040
      %v1069 = vadd.f32 %v951, %v1045
      %v1070 = vadd.f32 %v954, %v1048
      %v1071 = vadd.f32 %v959, %v1053
      %v1072 = vadd.f32 %v962, %v1056
      %v1073 = vadd.f32 %v967, %v1061
      %v1074 = vadd.f32 %v970, %v1064
      %v1075 = vld [vmem:[%s776 + $0x1] sm:$0xff]
      %v1076 = vld [vmem:[%s776 + $0x11] sm:$0xff]
      %v1077 = vld [vmem:[%s776 + $0x21] sm:$0xff]
      %v1078 = vld [vmem:[%s776 + $0x31] sm:$0xff]
      %v1079 = vld [vmem:[%s776 + $0x41] sm:$0xff]
      %v1080 = vld [vmem:[%s776 + $0x51] sm:$0xff]
      %v1081 = vld [vmem:[%s776 + $0x61] sm:$0xff]
      %v1082 = vld [vmem:[%s776 + $0x71] sm:$0xff]
      %v1083 = vpack.c.bf16 %v1076, %v1075
      %v1084 = vpack.c.bf16 %v1078, %v1077
      %v1085 = vpack.c.bf16 %v1080, %v1079
      %v1086 = vpack.c.bf16 %v1082, %v1081
      %s1087 = scalar_lea.vmem %s2, 12
      %v1088 = vld [vmem:[%s1087] sm:$0xf]
      %v1090 = vsel %vm754, %v1083, 0
      %v1093 = vsel %vm754, %v1084, 0
      %v1096 = vsel %vm754, %v1085, 0
      %v1099 = vsel %vm754, %v1086, 0
      %v1102 = vsel %vm824, %v1088, 0
      %1104 = vmatprep.subr.bf16.mxu0 0
      %1105 = vmatpush1.bf16.msra.mxu0 0
      %1106 = vmatprep.subr.bf16.mxu0 0
      %1107 = vmatpush1.bf16.msra.mxu0 0
      %1108 = vmatprep.subr.bf16.mxu0 0
      %1109 = vmatpush1.bf16.msra.mxu0 0
      %1110 = vmatprep.subr.bf16.mxu0 0
      %1111 = vmatpush1.bf16.msra.mxu0 0
      %1112 = vmatprep.subr.bf16.mxu0 0
      %1113 = vmatpush1.bf16.msra.mxu0 0
      %1114 = vmatprep.subr.bf16.mxu0 0
      %1115 = vmatpush1.bf16.msra.mxu0 0
      %1116 = vmatprep.subr.bf16.mxu0 0
      %1117 = vmatpush1.bf16.msra.mxu0 0
      %1118 = vmatprep.subr.bf16.mxu0 0
      %1119 = vmatpush1.bf16.msra.mxu0 %v1102
      %1120 = vmatprep.subr.bf16.mxu0 0
      %1121 = vmatpush2.bf16.msra.mxu0 0
      %1122 = vmatprep.subr.bf16.mxu0 0
      %1123 = vmatpush2.bf16.msra.mxu0 0
      %1124 = vmatprep.subr.bf16.mxu0 0
      %1125 = vmatpush2.bf16.msra.mxu0 0
      %1126 = vmatprep.subr.bf16.mxu0 0
      %1127 = vmatpush2.bf16.msra.mxu0 0
      %1128 = vmatprep.subr.bf16.mxu0 0
      %1129 = vmatpush2.bf16.msra.mxu0 0
      %1130 = vmatprep.subr.bf16.mxu0 0
      %1131 = vmatpush2.bf16.msra.mxu0 0
      %1132 = vmatprep.subr.bf16.mxu0 0
      %1133 = vmatpush2.bf16.msra.mxu0 0
      %1134 = vmatprep.subr.bf16.mxu0 0
      %1135 = vmatpush2.bf16.msra.mxu0 0
      %1136 = vmatprep.mubr.bf16.mxu0 0
      %1137 = vmatmul.mubr.bf16.gmra.mxu0 %v1090
      %v1138 = vpop.f32.mrf.mxu0
      %v1139 = vadd.f32 0.0, %v1138
      %v1140 = vpop.f32.mrf.mxu0
      %v1141 = vpop.f32.mrf.mxu0
      %v1142 = vadd.f32 0.0, %v1141
      %v1143 = vpop.f32.mrf.mxu0
      %1144 = vmatprep.mubr.bf16.mxu0 0
      %1145 = vmatmul.mubr.bf16.gmra.mxu0 %v1093
      %v1146 = vpop.f32.mrf.mxu0
      %v1147 = vadd.f32 0.0, %v1146
      %v1148 = vpop.f32.mrf.mxu0
      %v1149 = vpop.f32.mrf.mxu0
      %v1150 = vadd.f32 0.0, %v1149
      %v1151 = vpop.f32.mrf.mxu0
      %1152 = vmatprep.mubr.bf16.mxu0 0
      %1153 = vmatmul.mubr.bf16.gmra.mxu0 %v1096
      %v1154 = vpop.f32.mrf.mxu0
      %v1155 = vadd.f32 0.0, %v1154
      %v1156 = vpop.f32.mrf.mxu0
      %v1157 = vpop.f32.mrf.mxu0
      %v1158 = vadd.f32 0.0, %v1157
      %v1159 = vpop.f32.mrf.mxu0
      %1160 = vmatprep.mubr.bf16.mxu0 0
      %1161 = vmatmul.mubr.bf16.gmra.mxu0 %v1099
      %v1162 = vpop.f32.mrf.mxu0
      %v1163 = vadd.f32 0.0, %v1162
      %v1164 = vpop.f32.mrf.mxu0
      %v1165 = vpop.f32.mrf.mxu0
      %v1166 = vadd.f32 0.0, %v1165
      %v1167 = vpop.f32.mrf.mxu0
      %1168 = vdwg.mxu0
      %v1169 = vadd.f32 %v1067, %v1139
      %v1170 = vadd.f32 %v1068, %v1142
      %v1171 = vadd.f32 %v1069, %v1147
      %v1172 = vadd.f32 %v1070, %v1150
      %v1173 = vadd.f32 %v1071, %v1155
      %v1174 = vadd.f32 %v1072, %v1158
      %v1175 = vadd.f32 %v1073, %v1163
      %v1176 = vadd.f32 %v1074, %v1166
      %vm1177 = vcmask 31744
      %v1178 = vsel %vm1177, %v1169, 0.0
      %v1179 = vsel %vm1177, %v1170, 0.0
      %v1180 = vadd.f32 %v1178, %v1179
      %v1181 = vsel %vm1177, %v1171, 0.0
      %v1182 = vadd.f32 %v1180, %v1181
      %v1183 = vsel %vm1177, %v1172, 0.0
      %v1184 = vadd.f32 %v1182, %v1183
      %v1185 = vsel %vm1177, %v1173, 0.0
      %v1186 = vadd.f32 %v1184, %v1185
      %v1187 = vsel %vm1177, %v1174, 0.0
      %v1188 = vadd.f32 %v1186, %v1187
      %v1189 = vsel %vm1177, %v1175, 0.0
      %v1190 = vadd.f32 %v1188, %v1189
      %v1191 = vsel %vm1177, %v1176, 0.0
      %v1192 = vadd.f32 %v1190, %v1191
      %v1193 = vrot.slane %v1192, 4
      %v1194 = vadd.f32 %v1192, %v1193
      %v1195 = vrot.slane %v1194, 2
      %v1196 = vadd.f32 %v1194, %v1195
      %v1197 = vrot.slane %v1196, 1
      %v1198 = vadd.f32 %v1196, %v1197
      %v1199 = vadd.f32 %v1198, 0.0
      %v1200 = vmul.f32 %v1169, %v1169
      %v1201 = vmul.f32 %v1170, %v1170
      %v1202 = vmul.f32 %v1171, %v1171
      %v1203 = vmul.f32 %v1172, %v1172
      %v1204 = vmul.f32 %v1173, %v1173
      %v1205 = vmul.f32 %v1174, %v1174
      %v1206 = vmul.f32 %v1175, %v1175
      %v1207 = vmul.f32 %v1176, %v1176
      %v1208 = vsel %vm1177, %v1200, 0.0
      %v1209 = vsel %vm1177, %v1201, 0.0
      %v1210 = vadd.f32 %v1208, %v1209
      %v1211 = vsel %vm1177, %v1202, 0.0
      %v1212 = vadd.f32 %v1210, %v1211
      %v1213 = vsel %vm1177, %v1203, 0.0
      %v1214 = vadd.f32 %v1212, %v1213
      %v1215 = vsel %vm1177, %v1204, 0.0
      %v1216 = vadd.f32 %v1214, %v1215
      %v1217 = vsel %vm1177, %v1205, 0.0
      %v1218 = vadd.f32 %v1216, %v1217
      %v1219 = vsel %vm1177, %v1206, 0.0
      %v1220 = vadd.f32 %v1218, %v1219
      %v1221 = vsel %vm1177, %v1207, 0.0
      %v1222 = vadd.f32 %v1220, %v1221
      %v1223 = vrot.slane %v1222, 4
      %v1224 = vadd.f32 %v1222, %v1223
      %v1225 = vrot.slane %v1224, 2
      %v1226 = vadd.f32 %v1224, %v1225
      %v1227 = vrot.slane %v1226, 1
      %v1228 = vadd.f32 %v1226, %v1227
      %v1229 = vadd.f32 %v1228, 0.0
      %1230 = vst.msk [vmem:[%s235] sm:$0xff] %vm1177, %v1169
      %1231 = vst.msk [vmem:[%s235 + $0x8] sm:$0xff] %vm1177, %v1170
      %1232 = vst.msk [vmem:[%s235 + $0x10] sm:$0xff] %vm1177, %v1171
      %1233 = vst.msk [vmem:[%s235 + $0x18] sm:$0xff] %vm1177, %v1172
      %1234 = vst.msk [vmem:[%s235 + $0x20] sm:$0xff] %vm1177, %v1173
      %1235 = vst.msk [vmem:[%s235 + $0x28] sm:$0xff] %vm1177, %v1174
      %1236 = vst.msk [vmem:[%s235 + $0x30] sm:$0xff] %vm1177, %v1175
      %1237 = vst.msk [vmem:[%s235 + $0x38] sm:$0xff] %vm1177, %v1176
      %v1238 = vld [vmem:[#allocation2 + $0x1] sm:$0xff]
      %v1239 = vld [vmem:[#allocation2 + $0x11] sm:$0xff]
      %v1240 = vld [vmem:[#allocation2 + $0x21] sm:$0xff]
      %v1241 = vld [vmem:[#allocation2 + $0x31] sm:$0xff]
      %v1242 = vld [vmem:[#allocation2 + $0x41] sm:$0xff]
      %v1243 = vld [vmem:[#allocation2 + $0x51] sm:$0xff]
      %v1244 = vld [vmem:[#allocation2 + $0x61] sm:$0xff]
      %v1245 = vld [vmem:[#allocation2 + $0x71] sm:$0xff]
      %v1246 = vpack.c.bf16 %v1239, %v1238
      %v1247 = vpack.c.bf16 %v1241, %v1240
      %v1248 = vpack.c.bf16 %v1243, %v1242
      %v1249 = vpack.c.bf16 %v1245, %v1244
      %s1250 = scalar_lea.vmem %s2, 16
      %v1251 = vld [vmem:[%s1250] sm:$0xf]
      %v1252 = vld [vmem:[#allocation2 + $0x2] sm:$0xff]
      %v1253 = vld [vmem:[#allocation2 + $0x12] sm:$0xff]
      %v1254 = vld [vmem:[#allocation2 + $0x22] sm:$0xff]
      %v1255 = vld [vmem:[#allocation2 + $0x32] sm:$0xff]
      %v1256 = vld [vmem:[#allocation2 + $0x42] sm:$0xff]
      %v1257 = vld [vmem:[#allocation2 + $0x52] sm:$0xff]
      %v1258 = vld [vmem:[#allocation2 + $0x62] sm:$0xff]
      %v1259 = vld [vmem:[#allocation2 + $0x72] sm:$0xff]
      %v1260 = vpack.c.bf16 %v1253, %v1252
      %v1261 = vpack.c.bf16 %v1255, %v1254
      %v1262 = vpack.c.bf16 %v1257, %v1256
      %v1263 = vpack.c.bf16 %v1259, %v1258
      %s1264 = scalar_lea.vmem %s2, 20
      %v1265 = vld [vmem:[%s1264] sm:$0xf]
      %v1267 = vsel %vm754, %v1260, 0
      %v1270 = vsel %vm754, %v1261, 0
      %v1273 = vsel %vm754, %v1262, 0
      %v1276 = vsel %vm754, %v1263, 0
      %v1279 = vsel %vm824, %v1265, 0
      %1281 = vmatprep.subr.bf16.mxu0 0
      %1282 = vmatpush1.bf16.msra.mxu0 0
      %1283 = vmatprep.subr.bf16.mxu0 0
      %1284 = vmatpush1.bf16.msra.mxu0 0
      %1285 = vmatprep.subr.bf16.mxu0 0
      %1286 = vmatpush1.bf16.msra.mxu0 0
      %1287 = vmatprep.subr.bf16.mxu0 0
      %1288 = vmatpush1.bf16.msra.mxu0 0
      %1289 = vmatprep.subr.bf16.mxu0 0
      %1290 = vmatpush1.bf16.msra.mxu0 0
      %1291 = vmatprep.subr.bf16.mxu0 0
      %1292 = vmatpush1.bf16.msra.mxu0 0
      %1293 = vmatprep.subr.bf16.mxu0 0
      %1294 = vmatpush1.bf16.msra.mxu0 0
      %1295 = vmatprep.subr.bf16.mxu0 0
      %1296 = vmatpush1.bf16.msra.mxu0 %v1279
      %1297 = vmatprep.subr.bf16.mxu0 0
      %1298 = vmatpush2.bf16.msra.mxu0 0
      %1299 = vmatprep.subr.bf16.mxu0 0
      %1300 = vmatpush2.bf16.msra.mxu0 0
      %1301 = vmatprep.subr.bf16.mxu0 0
      %1302 = vmatpush2.bf16.msra.mxu0 0
      %1303 = vmatprep.subr.bf16.mxu0 0
      %1304 = vmatpush2.bf16.msra.mxu0 0
      %1305 = vmatprep.subr.bf16.mxu0 0
      %1306 = vmatpush2.bf16.msra.mxu0 0
      %1307 = vmatprep.subr.bf16.mxu0 0
      %1308 = vmatpush2.bf16.msra.mxu0 0
      %1309 = vmatprep.subr.bf16.mxu0 0
      %1310 = vmatpush2.bf16.msra.mxu0 0
      %1311 = vmatprep.subr.bf16.mxu0 0
      %1312 = vmatpush2.bf16.msra.mxu0 0
      %1313 = vmatprep.mubr.bf16.mxu0 0
      %1314 = vmatmul.mubr.bf16.gmra.mxu0 %v1267
      %v1315 = vpop.f32.mrf.mxu0
      %v1316 = vadd.f32 0.0, %v1315
      %v1317 = vpop.f32.mrf.mxu0
      %v1318 = vpop.f32.mrf.mxu0
      %v1319 = vadd.f32 0.0, %v1318
      %v1320 = vpop.f32.mrf.mxu0
      %1321 = vmatprep.mubr.bf16.mxu0 0
      %1322 = vmatmul.mubr.bf16.gmra.mxu0 %v1270
      %v1323 = vpop.f32.mrf.mxu0
      %v1324 = vadd.f32 0.0, %v1323
      %v1325 = vpop.f32.mrf.mxu0
      %v1326 = vpop.f32.mrf.mxu0
      %v1327 = vadd.f32 0.0, %v1326
      %v1328 = vpop.f32.mrf.mxu0
      %1329 = vmatprep.mubr.bf16.mxu0 0
      %1330 = vmatmul.mubr.bf16.gmra.mxu0 %v1273
      %v1331 = vpop.f32.mrf.mxu0
      %v1332 = vadd.f32 0.0, %v1331
      %v1333 = vpop.f32.mrf.mxu0
      %v1334 = vpop.f32.mrf.mxu0
      %v1335 = vadd.f32 0.0, %v1334
      %v1336 = vpop.f32.mrf.mxu0
      %1337 = vmatprep.mubr.bf16.mxu0 0
      %1338 = vmatmul.mubr.bf16.gmra.mxu0 %v1276
      %v1339 = vpop.f32.mrf.mxu0
      %v1340 = vadd.f32 0.0, %v1339
      %v1341 = vpop.f32.mrf.mxu0
      %v1342 = vpop.f32.mrf.mxu0
      %v1343 = vadd.f32 0.0, %v1342
      %v1344 = vpop.f32.mrf.mxu0
      %1345 = vdwg.mxu0
      %v1347 = vsel %vm754, %v1246, 0
      %v1350 = vsel %vm754, %v1247, 0
      %v1353 = vsel %vm754, %v1248, 0
      %v1356 = vsel %vm754, %v1249, 0
      %v1359 = vsel %vm824, %v1251, 0
      %1361 = vmatprep.subr.bf16.mxu0 0
      %1362 = vmatpush1.bf16.msra.mxu0 0
      %1363 = vmatprep.subr.bf16.mxu0 0
      %1364 = vmatpush1.bf16.msra.mxu0 0
      %1365 = vmatprep.subr.bf16.mxu0 0
      %1366 = vmatpush1.bf16.msra.mxu0 0
      %1367 = vmatprep.subr.bf16.mxu0 0
      %1368 = vmatpush1.bf16.msra.mxu0 0
      %1369 = vmatprep.subr.bf16.mxu0 0
      %1370 = vmatpush1.bf16.msra.mxu0 0
      %1371 = vmatprep.subr.bf16.mxu0 0
      %1372 = vmatpush1.bf16.msra.mxu0 0
      %1373 = vmatprep.subr.bf16.mxu0 0
      %1374 = vmatpush1.bf16.msra.mxu0 0
      %1375 = vmatprep.subr.bf16.mxu0 0
      %1376 = vmatpush1.bf16.msra.mxu0 %v1359
      %1377 = vmatprep.subr.bf16.mxu0 0
      %1378 = vmatpush2.bf16.msra.mxu0 0
      %1379 = vmatprep.subr.bf16.mxu0 0
      %1380 = vmatpush2.bf16.msra.mxu0 0
      %1381 = vmatprep.subr.bf16.mxu0 0
      %1382 = vmatpush2.bf16.msra.mxu0 0
      %1383 = vmatprep.subr.bf16.mxu0 0
      %1384 = vmatpush2.bf16.msra.mxu0 0
      %1385 = vmatprep.subr.bf16.mxu0 0
      %1386 = vmatpush2.bf16.msra.mxu0 0
      %1387 = vmatprep.subr.bf16.mxu0 0
      %1388 = vmatpush2.bf16.msra.mxu0 0
      %1389 = vmatprep.subr.bf16.mxu0 0
      %1390 = vmatpush2.bf16.msra.mxu0 0
      %1391 = vmatprep.subr.bf16.mxu0 0
      %1392 = vmatpush2.bf16.msra.mxu0 0
      %1393 = vmatprep.mubr.bf16.mxu0 0
      %1394 = vmatmul.mubr.bf16.gmra.mxu0 %v1347
      %v1395 = vpop.f32.mrf.mxu0
      %v1396 = vadd.f32 %v1316, %v1395
      %v1397 = vpop.f32.mrf.mxu0
      %v1398 = vpop.f32.mrf.mxu0
      %v1399 = vadd.f32 %v1319, %v1398
      %v1400 = vpop.f32.mrf.mxu0
      %1401 = vmatprep.mubr.bf16.mxu0 0
      %1402 = vmatmul.mubr.bf16.gmra.mxu0 %v1350
      %v1403 = vpop.f32.mrf.mxu0
      %v1404 = vadd.f32 %v1324, %v1403
      %v1405 = vpop.f32.mrf.mxu0
      %v1406 = vpop.f32.mrf.mxu0
      %v1407 = vadd.f32 %v1327, %v1406
      %v1408 = vpop.f32.mrf.mxu0
      %1409 = vmatprep.mubr.bf16.mxu0 0
      %1410 = vmatmul.mubr.bf16.gmra.mxu0 %v1353
      %v1411 = vpop.f32.mrf.mxu0
      %v1412 = vadd.f32 %v1332, %v1411
      %v1413 = vpop.f32.mrf.mxu0
      %v1414 = vpop.f32.mrf.mxu0
      %v1415 = vadd.f32 %v1335, %v1414
      %v1416 = vpop.f32.mrf.mxu0
      %1417 = vmatprep.mubr.bf16.mxu0 0
      %1418 = vmatmul.mubr.bf16.gmra.mxu0 %v1356
      %v1419 = vpop.f32.mrf.mxu0
      %v1420 = vadd.f32 %v1340, %v1419
      %v1421 = vpop.f32.mrf.mxu0
      %v1422 = vpop.f32.mrf.mxu0
      %v1423 = vadd.f32 %v1343, %v1422
      %v1424 = vpop.f32.mrf.mxu0
      %1425 = vdwg.mxu0
      %v1426 = vld [vmem:[%s776 + $0x1] sm:$0xff]
      %v1427 = vld [vmem:[%s776 + $0x11] sm:$0xff]
      %v1428 = vld [vmem:[%s776 + $0x21] sm:$0xff]
      %v1429 = vld [vmem:[%s776 + $0x31] sm:$0xff]
      %v1430 = vld [vmem:[%s776 + $0x41] sm:$0xff]
      %v1431 = vld [vmem:[%s776 + $0x51] sm:$0xff]
      %v1432 = vld [vmem:[%s776 + $0x61] sm:$0xff]
      %v1433 = vld [vmem:[%s776 + $0x71] sm:$0xff]
      %v1434 = vpack.c.bf16 %v1427, %v1426
      %v1435 = vpack.c.bf16 %v1429, %v1428
      %v1436 = vpack.c.bf16 %v1431, %v1430
      %v1437 = vpack.c.bf16 %v1433, %v1432
      %s1438 = scalar_lea.vmem %s2, 24
      %v1439 = vld [vmem:[%s1438] sm:$0xf]
      %v1441 = vsel %vm754, %v1434, 0
      %v1444 = vsel %vm754, %v1435, 0
      %v1447 = vsel %vm754, %v1436, 0
      %v1450 = vsel %vm754, %v1437, 0
      %v1453 = vsel %vm824, %v1439, 0
      %1455 = vmatprep.subr.bf16.mxu0 0
      %1456 = vmatpush1.bf16.msra.mxu0 0
      %1457 = vmatprep.subr.bf16.mxu0 0
      %1458 = vmatpush1.bf16.msra.mxu0 0
      %1459 = vmatprep.subr.bf16.mxu0 0
      %1460 = vmatpush1.bf16.msra.mxu0 0
      %1461 = vmatprep.subr.bf16.mxu0 0
      %1462 = vmatpush1.bf16.msra.mxu0 0
      %1463 = vmatprep.subr.bf16.mxu0 0
      %1464 = vmatpush1.bf16.msra.mxu0 0
      %1465 = vmatprep.subr.bf16.mxu0 0
      %1466 = vmatpush1.bf16.msra.mxu0 0
      %1467 = vmatprep.subr.bf16.mxu0 0
      %1468 = vmatpush1.bf16.msra.mxu0 0
      %1469 = vmatprep.subr.bf16.mxu0 0
      %1470 = vmatpush1.bf16.msra.mxu0 %v1453
      %1471 = vmatprep.subr.bf16.mxu0 0
      %1472 = vmatpush2.bf16.msra.mxu0 0
      %1473 = vmatprep.subr.bf16.mxu0 0
      %1474 = vmatpush2.bf16.msra.mxu0 0
      %1475 = vmatprep.subr.bf16.mxu0 0
      %1476 = vmatpush2.bf16.msra.mxu0 0
      %1477 = vmatprep.subr.bf16.mxu0 0
      %1478 = vmatpush2.bf16.msra.mxu0 0
      %1479 = vmatprep.subr.bf16.mxu0 0
      %1480 = vmatpush2.bf16.msra.mxu0 0
      %1481 = vmatprep.subr.bf16.mxu0 0
      %1482 = vmatpush2.bf16.msra.mxu0 0
      %1483 = vmatprep.subr.bf16.mxu0 0
      %1484 = vmatpush2.bf16.msra.mxu0 0
      %1485 = vmatprep.subr.bf16.mxu0 0
      %1486 = vmatpush2.bf16.msra.mxu0 0
      %1487 = vmatprep.mubr.bf16.mxu0 0
      %1488 = vmatmul.mubr.bf16.gmra.mxu0 %v1441
      %v1489 = vpop.f32.mrf.mxu0
      %v1490 = vadd.f32 0.0, %v1489
      %v1491 = vpop.f32.mrf.mxu0
      %v1492 = vpop.f32.mrf.mxu0
      %v1493 = vadd.f32 0.0, %v1492
      %v1494 = vpop.f32.mrf.mxu0
      %1495 = vmatprep.mubr.bf16.mxu0 0
      %1496 = vmatmul.mubr.bf16.gmra.mxu0 %v1444
      %v1497 = vpop.f32.mrf.mxu0
      %v1498 = vadd.f32 0.0, %v1497
      %v1499 = vpop.f32.mrf.mxu0
      %v1500 = vpop.f32.mrf.mxu0
      %v1501 = vadd.f32 0.0, %v1500
      %v1502 = vpop.f32.mrf.mxu0
      %1503 = vmatprep.mubr.bf16.mxu0 0
      %1504 = vmatmul.mubr.bf16.gmra.mxu0 %v1447
      %v1505 = vpop.f32.mrf.mxu0
      %v1506 = vadd.f32 0.0, %v1505
      %v1507 = vpop.f32.mrf.mxu0
      %v1508 = vpop.f32.mrf.mxu0
      %v1509 = vadd.f32 0.0, %v1508
      %v1510 = vpop.f32.mrf.mxu0
      %1511 = vmatprep.mubr.bf16.mxu0 0
      %1512 = vmatmul.mubr.bf16.gmra.mxu0 %v1450
      %v1513 = vpop.f32.mrf.mxu0
      %v1514 = vadd.f32 0.0, %v1513
      %v1515 = vpop.f32.mrf.mxu0
      %v1516 = vpop.f32.mrf.mxu0
      %v1517 = vadd.f32 0.0, %v1516
      %v1518 = vpop.f32.mrf.mxu0
      %1519 = vdwg.mxu0
      %v1520 = vadd.f32 %v1396, %v1490
      %v1521 = vadd.f32 %v1399, %v1493
      %v1522 = vadd.f32 %v1404, %v1498
      %v1523 = vadd.f32 %v1407, %v1501
      %v1524 = vadd.f32 %v1412, %v1506
      %v1525 = vadd.f32 %v1415, %v1509
      %v1526 = vadd.f32 %v1420, %v1514
      %v1527 = vadd.f32 %v1423, %v1517
      %v1528 = vld [vmem:[%s776 + $0x2] sm:$0xff]
      %v1529 = vld [vmem:[%s776 + $0x12] sm:$0xff]
      %v1530 = vld [vmem:[%s776 + $0x22] sm:$0xff]
      %v1531 = vld [vmem:[%s776 + $0x32] sm:$0xff]
      %v1532 = vld [vmem:[%s776 + $0x42] sm:$0xff]
      %v1533 = vld [vmem:[%s776 + $0x52] sm:$0xff]
      %v1534 = vld [vmem:[%s776 + $0x62] sm:$0xff]
      %v1535 = vld [vmem:[%s776 + $0x72] sm:$0xff]
      %v1536 = vpack.c.bf16 %v1529, %v1528
      %v1537 = vpack.c.bf16 %v1531, %v1530
      %v1538 = vpack.c.bf16 %v1533, %v1532
      %v1539 = vpack.c.bf16 %v1535, %v1534
      %s1540 = scalar_lea.vmem %s2, 28
      %v1541 = vld [vmem:[%s1540] sm:$0xf]
      %v1543 = vsel %vm754, %v1536, 0
      %v1546 = vsel %vm754, %v1537, 0
      %v1549 = vsel %vm754, %v1538, 0
      %v1552 = vsel %vm754, %v1539, 0
      %v1555 = vsel %vm824, %v1541, 0
      %1557 = vmatprep.subr.bf16.mxu0 0
      %1558 = vmatpush1.bf16.msra.mxu0 0
      %1559 = vmatprep.subr.bf16.mxu0 0
      %1560 = vmatpush1.bf16.msra.mxu0 0
      %1561 = vmatprep.subr.bf16.mxu0 0
      %1562 = vmatpush1.bf16.msra.mxu0 0
      %1563 = vmatprep.subr.bf16.mxu0 0
      %1564 = vmatpush1.bf16.msra.mxu0 0
      %1565 = vmatprep.subr.bf16.mxu0 0
      %1566 = vmatpush1.bf16.msra.mxu0 0
      %1567 = vmatprep.subr.bf16.mxu0 0
      %1568 = vmatpush1.bf16.msra.mxu0 0
      %1569 = vmatprep.subr.bf16.mxu0 0
      %1570 = vmatpush1.bf16.msra.mxu0 0
      %1571 = vmatprep.subr.bf16.mxu0 0
      %1572 = vmatpush1.bf16.msra.mxu0 %v1555
      %1573 = vmatprep.subr.bf16.mxu0 0
      %1574 = vmatpush2.bf16.msra.mxu0 0
      %1575 = vmatprep.subr.bf16.mxu0 0
      %1576 = vmatpush2.bf16.msra.mxu0 0
      %1577 = vmatprep.subr.bf16.mxu0 0
      %1578 = vmatpush2.bf16.msra.mxu0 0
      %1579 = vmatprep.subr.bf16.mxu0 0
      %1580 = vmatpush2.bf16.msra.mxu0 0
      %1581 = vmatprep.subr.bf16.mxu0 0
      %1582 = vmatpush2.bf16.msra.mxu0 0
      %1583 = vmatprep.subr.bf16.mxu0 0
      %1584 = vmatpush2.bf16.msra.mxu0 0
      %1585 = vmatprep.subr.bf16.mxu0 0
      %1586 = vmatpush2.bf16.msra.mxu0 0
      %1587 = vmatprep.subr.bf16.mxu0 0
      %1588 = vmatpush2.bf16.msra.mxu0 0
      %1589 = vmatprep.mubr.bf16.mxu0 0
      %1590 = vmatmul.mubr.bf16.gmra.mxu0 %v1543
      %v1591 = vpop.f32.mrf.mxu0
      %v1592 = vadd.f32 0.0, %v1591
      %v1593 = vpop.f32.mrf.mxu0
      %v1594 = vpop.f32.mrf.mxu0
      %v1595 = vadd.f32 0.0, %v1594
      %v1596 = vpop.f32.mrf.mxu0
      %1597 = vmatprep.mubr.bf16.mxu0 0
      %1598 = vmatmul.mubr.bf16.gmra.mxu0 %v1546
      %v1599 = vpop.f32.mrf.mxu0
      %v1600 = vadd.f32 0.0, %v1599
      %v1601 = vpop.f32.mrf.mxu0
      %v1602 = vpop.f32.mrf.mxu0
      %v1603 = vadd.f32 0.0, %v1602
      %v1604 = vpop.f32.mrf.mxu0
      %1605 = vmatprep.mubr.bf16.mxu0 0
      %1606 = vmatmul.mubr.bf16.gmra.mxu0 %v1549
      %v1607 = vpop.f32.mrf.mxu0
      %v1608 = vadd.f32 0.0, %v1607
      %v1609 = vpop.f32.mrf.mxu0
      %v1610 = vpop.f32.mrf.mxu0
      %v1611 = vadd.f32 0.0, %v1610
      %v1612 = vpop.f32.mrf.mxu0
      %1613 = vmatprep.mubr.bf16.mxu0 0
      %1614 = vmatmul.mubr.bf16.gmra.mxu0 %v1552
      %v1615 = vpop.f32.mrf.mxu0
      %v1616 = vadd.f32 0.0, %v1615
      %v1617 = vpop.f32.mrf.mxu0
      %v1618 = vpop.f32.mrf.mxu0
      %v1619 = vadd.f32 0.0, %v1618
      %v1620 = vpop.f32.mrf.mxu0
      %1621 = vdwg.mxu0
      %v1622 = vadd.f32 %v1520, %v1592
      %v1623 = vadd.f32 %v1521, %v1595
      %v1624 = vadd.f32 %v1522, %v1600
      %v1625 = vadd.f32 %v1523, %v1603
      %v1626 = vadd.f32 %v1524, %v1608
      %v1627 = vadd.f32 %v1525, %v1611
      %v1628 = vadd.f32 %v1526, %v1616
      %v1629 = vadd.f32 %v1527, %v1619
      %v1630 = vsel %vm1177, %v1622, 0.0
      %v1631 = vsel %vm1177, %v1623, 0.0
      %v1632 = vadd.f32 %v1630, %v1631
      %v1633 = vsel %vm1177, %v1624, 0.0
      %v1634 = vadd.f32 %v1632, %v1633
      %v1635 = vsel %vm1177, %v1625, 0.0
      %v1636 = vadd.f32 %v1634, %v1635
      %v1637 = vsel %vm1177, %v1626, 0.0
      %v1638 = vadd.f32 %v1636, %v1637
      %v1639 = vsel %vm1177, %v1627, 0.0
      %v1640 = vadd.f32 %v1638, %v1639
      %v1641 = vsel %vm1177, %v1628, 0.0
      %v1642 = vadd.f32 %v1640, %v1641
      %v1643 = vsel %vm1177, %v1629, 0.0
      %v1644 = vadd.f32 %v1642, %v1643
      %v1645 = vrot.slane %v1644, 4
      %v1646 = vadd.f32 %v1644, %v1645
      %v1647 = vrot.slane %v1646, 2
      %v1648 = vadd.f32 %v1646, %v1647
      %v1649 = vrot.slane %v1648, 1
      %v1650 = vadd.f32 %v1648, %v1649
      %v1651 = vadd.f32 %v1199, %v1650
      %v1652 = vmul.f32 %v1622, %v1622
      %v1653 = vmul.f32 %v1623, %v1623
      %v1654 = vmul.f32 %v1624, %v1624
      %v1655 = vmul.f32 %v1625, %v1625
      %v1656 = vmul.f32 %v1626, %v1626
      %v1657 = vmul.f32 %v1627, %v1627
      %v1658 = vmul.f32 %v1628, %v1628
      %v1659 = vmul.f32 %v1629, %v1629
      %v1660 = vsel %vm1177, %v1652, 0.0
      %v1661 = vsel %vm1177, %v1653, 0.0
      %v1662 = vadd.f32 %v1660, %v1661
      %v1663 = vsel %vm1177, %v1654, 0.0
      %v1664 = vadd.f32 %v1662, %v1663
      %v1665 = vsel %vm1177, %v1655, 0.0
      %v1666 = vadd.f32 %v1664, %v1665
      %v1667 = vsel %vm1177, %v1656, 0.0
      %v1668 = vadd.f32 %v1666, %v1667
      %v1669 = vsel %vm1177, %v1657, 0.0
      %v1670 = vadd.f32 %v1668, %v1669
      %v1671 = vsel %vm1177, %v1658, 0.0
      %v1672 = vadd.f32 %v1670, %v1671
      %v1673 = vsel %vm1177, %v1659, 0.0
      %v1674 = vadd.f32 %v1672, %v1673
      %v1675 = vrot.slane %v1674, 4
      %v1676 = vadd.f32 %v1674, %v1675
      %v1677 = vrot.slane %v1676, 2
      %v1678 = vadd.f32 %v1676, %v1677
      %v1679 = vrot.slane %v1678, 1
      %v1680 = vadd.f32 %v1678, %v1679
      %v1681 = vadd.f32 %v1229, %v1680
      %s1682 = scalar_lea.vmem %s235, 64
      %1683 = vst.msk [vmem:[%s1682] sm:$0xff] %vm1177, %v1622
      %1684 = vst.msk [vmem:[%s1682 + $0x8] sm:$0xff] %vm1177, %v1623
      %1685 = vst.msk [vmem:[%s1682 + $0x10] sm:$0xff] %vm1177, %v1624
      %1686 = vst.msk [vmem:[%s1682 + $0x18] sm:$0xff] %vm1177, %v1625
      %1687 = vst.msk [vmem:[%s1682 + $0x20] sm:$0xff] %vm1177, %v1626
      %1688 = vst.msk [vmem:[%s1682 + $0x28] sm:$0xff] %vm1177, %v1627
      %1689 = vst.msk [vmem:[%s1682 + $0x30] sm:$0xff] %vm1177, %v1628
      %1690 = vst.msk [vmem:[%s1682 + $0x38] sm:$0xff] %vm1177, %v1629
      %v1691 = vld [vmem:[%s776] sm:$0xff]
      %v1692 = vld [vmem:[%s776 + $0x10] sm:$0xff]
      %v1693 = vld [vmem:[%s776 + $0x20] sm:$0xff]
      %v1694 = vld [vmem:[%s776 + $0x30] sm:$0xff]
      %v1695 = vld [vmem:[%s776 + $0x40] sm:$0xff]
      %v1696 = vld [vmem:[%s776 + $0x50] sm:$0xff]
      %v1697 = vld [vmem:[%s776 + $0x60] sm:$0xff]
      %v1698 = vld [vmem:[%s776 + $0x70] sm:$0xff]
      %v1699 = vpack.c.bf16 %v1692, %v1691
      %v1700 = vpack.c.bf16 %v1694, %v1693
      %v1701 = vpack.c.bf16 %v1696, %v1695
      %v1702 = vpack.c.bf16 %v1698, %v1697
      %s1703 = scalar_lea.vmem %s2, 32
      %v1704 = vld [vmem:[%s1703] sm:$0xf]
      %v1705 = vld [vmem:[%s776 + $0x1] sm:$0xff]
      %v1706 = vld [vmem:[%s776 + $0x11] sm:$0xff]
      %v1707 = vld [vmem:[%s776 + $0x21] sm:$0xff]
      %v1708 = vld [vmem:[%s776 + $0x31] sm:$0xff]
      %v1709 = vld [vmem:[%s776 + $0x41] sm:$0xff]
      %v1710 = vld [vmem:[%s776 + $0x51] sm:$0xff]
      %v1711 = vld [vmem:[%s776 + $0x61] sm:$0xff]
      %v1712 = vld [vmem:[%s776 + $0x71] sm:$0xff]
      %v1713 = vpack.c.bf16 %v1706, %v1705
      %v1714 = vpack.c.bf16 %v1708, %v1707
      %v1715 = vpack.c.bf16 %v1710, %v1709
      %v1716 = vpack.c.bf16 %v1712, %v1711
      %s1717 = scalar_lea.vmem %s2, 36
      %v1718 = vld [vmem:[%s1717] sm:$0xf]
      %v1720 = vsel %vm754, %v1713, 0
      %v1723 = vsel %vm754, %v1714, 0
      %v1726 = vsel %vm754, %v1715, 0
      %v1729 = vsel %vm754, %v1716, 0
      %v1732 = vsel %vm824, %v1718, 0
      %1734 = vmatprep.subr.bf16.mxu0 0
      %1735 = vmatpush1.bf16.msra.mxu0 0
      %1736 = vmatprep.subr.bf16.mxu0 0
      %1737 = vmatpush1.bf16.msra.mxu0 0
      %1738 = vmatprep.subr.bf16.mxu0 0
      %1739 = vmatpush1.bf16.msra.mxu0 0
      %1740 = vmatprep.subr.bf16.mxu0 0
      %1741 = vmatpush1.bf16.msra.mxu0 0
      %1742 = vmatprep.subr.bf16.mxu0 0
      %1743 = vmatpush1.bf16.msra.mxu0 0
      %1744 = vmatprep.subr.bf16.mxu0 0
      %1745 = vmatpush1.bf16.msra.mxu0 0
      %1746 = vmatprep.subr.bf16.mxu0 0
      %1747 = vmatpush1.bf16.msra.mxu0 0
      %1748 = vmatprep.subr.bf16.mxu0 0
      %1749 = vmatpush1.bf16.msra.mxu0 %v1732
      %1750 = vmatprep.subr.bf16.mxu0 0
      %1751 = vmatpush2.bf16.msra.mxu0 0
      %1752 = vmatprep.subr.bf16.mxu0 0
      %1753 = vmatpush2.bf16.msra.mxu0 0
      %1754 = vmatprep.subr.bf16.mxu0 0
      %1755 = vmatpush2.bf16.msra.mxu0 0
      %1756 = vmatprep.subr.bf16.mxu0 0
      %1757 = vmatpush2.bf16.msra.mxu0 0
      %1758 = vmatprep.subr.bf16.mxu0 0
      %1759 = vmatpush2.bf16.msra.mxu0 0
      %1760 = vmatprep.subr.bf16.mxu0 0
      %1761 = vmatpush2.bf16.msra.mxu0 0
      %1762 = vmatprep.subr.bf16.mxu0 0
      %1763 = vmatpush2.bf16.msra.mxu0 0
      %1764 = vmatprep.subr.bf16.mxu0 0
      %1765 = vmatpush2.bf16.msra.mxu0 0
      %1766 = vmatprep.mubr.bf16.mxu0 0
      %1767 = vmatmul.mubr.bf16.gmra.mxu0 %v1720
      %v1768 = vpop.f32.mrf.mxu0
      %v1769 = vadd.f32 0.0, %v1768
      %v1770 = vpop.f32.mrf.mxu0
      %v1771 = vpop.f32.mrf.mxu0
      %v1772 = vadd.f32 0.0, %v1771
      %v1773 = vpop.f32.mrf.mxu0
      %1774 = vmatprep.mubr.bf16.mxu0 0
      %1775 = vmatmul.mubr.bf16.gmra.mxu0 %v1723
      %v1776 = vpop.f32.mrf.mxu0
      %v1777 = vadd.f32 0.0, %v1776
      %v1778 = vpop.f32.mrf.mxu0
      %v1779 = vpop.f32.mrf.mxu0
      %v1780 = vadd.f32 0.0, %v1779
      %v1781 = vpop.f32.mrf.mxu0
      %1782 = vmatprep.mubr.bf16.mxu0 0
      %1783 = vmatmul.mubr.bf16.gmra.mxu0 %v1726
      %v1784 = vpop.f32.mrf.mxu0
      %v1785 = vadd.f32 0.0, %v1784
      %v1786 = vpop.f32.mrf.mxu0
      %v1787 = vpop.f32.mrf.mxu0
      %v1788 = vadd.f32 0.0, %v1787
      %v1789 = vpop.f32.mrf.mxu0
      %1790 = vmatprep.mubr.bf16.mxu0 0
      %1791 = vmatmul.mubr.bf16.gmra.mxu0 %v1729
      %v1792 = vpop.f32.mrf.mxu0
      %v1793 = vadd.f32 0.0, %v1792
      %v1794 = vpop.f32.mrf.mxu0
      %v1795 = vpop.f32.mrf.mxu0
      %v1796 = vadd.f32 0.0, %v1795
      %v1797 = vpop.f32.mrf.mxu0
      %1798 = vdwg.mxu0
      %v1800 = vsel %vm754, %v1699, 0
      %v1803 = vsel %vm754, %v1700, 0
      %v1806 = vsel %vm754, %v1701, 0
      %v1809 = vsel %vm754, %v1702, 0
      %v1812 = vsel %vm824, %v1704, 0
      %1814 = vmatprep.subr.bf16.mxu0 0
      %1815 = vmatpush1.bf16.msra.mxu0 0
      %1816 = vmatprep.subr.bf16.mxu0 0
      %1817 = vmatpush1.bf16.msra.mxu0 0
      %1818 = vmatprep.subr.bf16.mxu0 0
      %1819 = vmatpush1.bf16.msra.mxu0 0
      %1820 = vmatprep.subr.bf16.mxu0 0
      %1821 = vmatpush1.bf16.msra.mxu0 0
      %1822 = vmatprep.subr.bf16.mxu0 0
      %1823 = vmatpush1.bf16.msra.mxu0 0
      %1824 = vmatprep.subr.bf16.mxu0 0
      %1825 = vmatpush1.bf16.msra.mxu0 0
      %1826 = vmatprep.subr.bf16.mxu0 0
      %1827 = vmatpush1.bf16.msra.mxu0 0
      %1828 = vmatprep.subr.bf16.mxu0 0
      %1829 = vmatpush1.bf16.msra.mxu0 %v1812
      %1830 = vmatprep.subr.bf16.mxu0 0
      %1831 = vmatpush2.bf16.msra.mxu0 0
      %1832 = vmatprep.subr.bf16.mxu0 0
      %1833 = vmatpush2.bf16.msra.mxu0 0
      %1834 = vmatprep.subr.bf16.mxu0 0
      %1835 = vmatpush2.bf16.msra.mxu0 0
      %1836 = vmatprep.subr.bf16.mxu0 0
      %1837 = vmatpush2.bf16.msra.mxu0 0
      %1838 = vmatprep.subr.bf16.mxu0 0
      %1839 = vmatpush2.bf16.msra.mxu0 0
      %1840 = vmatprep.subr.bf16.mxu0 0
      %1841 = vmatpush2.bf16.msra.mxu0 0
      %1842 = vmatprep.subr.bf16.mxu0 0
      %1843 = vmatpush2.bf16.msra.mxu0 0
      %1844 = vmatprep.subr.bf16.mxu0 0
      %1845 = vmatpush2.bf16.msra.mxu0 0
      %1846 = vmatprep.mubr.bf16.mxu0 0
      %1847 = vmatmul.mubr.bf16.gmra.mxu0 %v1800
      %v1848 = vpop.f32.mrf.mxu0
      %v1849 = vadd.f32 %v1769, %v1848
      %v1850 = vpop.f32.mrf.mxu0
      %v1851 = vpop.f32.mrf.mxu0
      %v1852 = vadd.f32 %v1772, %v1851
      %v1853 = vpop.f32.mrf.mxu0
      %1854 = vmatprep.mubr.bf16.mxu0 0
      %1855 = vmatmul.mubr.bf16.gmra.mxu0 %v1803
      %v1856 = vpop.f32.mrf.mxu0
      %v1857 = vadd.f32 %v1777, %v1856
      %v1858 = vpop.f32.mrf.mxu0
      %v1859 = vpop.f32.mrf.mxu0
      %v1860 = vadd.f32 %v1780, %v1859
      %v1861 = vpop.f32.mrf.mxu0
      %1862 = vmatprep.mubr.bf16.mxu0 0
      %1863 = vmatmul.mubr.bf16.gmra.mxu0 %v1806
      %v1864 = vpop.f32.mrf.mxu0
      %v1865 = vadd.f32 %v1785, %v1864
      %v1866 = vpop.f32.mrf.mxu0
      %v1867 = vpop.f32.mrf.mxu0
      %v1868 = vadd.f32 %v1788, %v1867
      %v1869 = vpop.f32.mrf.mxu0
      %1870 = vmatprep.mubr.bf16.mxu0 0
      %1871 = vmatmul.mubr.bf16.gmra.mxu0 %v1809
      %v1872 = vpop.f32.mrf.mxu0
      %v1873 = vadd.f32 %v1793, %v1872
      %v1874 = vpop.f32.mrf.mxu0
      %v1875 = vpop.f32.mrf.mxu0
      %v1876 = vadd.f32 %v1796, %v1875
      %v1877 = vpop.f32.mrf.mxu0
      %1878 = vdwg.mxu0
      %s1879 = scalar_lea.vmem [#allocation2], 32
      %v1880 = vld [vmem:[%s1879] sm:$0xff]
      %v1881 = vld [vmem:[%s1879 + $0x10] sm:$0xff]
      %v1882 = vld [vmem:[%s1879 + $0x20] sm:$0xff]
      %v1883 = vld [vmem:[%s1879 + $0x30] sm:$0xff]
      %v1884 = vld [vmem:[%s1879 + $0x40] sm:$0xff]
      %v1885 = vld [vmem:[%s1879 + $0x50] sm:$0xff]
      %v1886 = vld [vmem:[%s1879 + $0x60] sm:$0xff]
      %v1887 = vld [vmem:[%s1879 + $0x70] sm:$0xff]
      %v1888 = vpack.c.bf16 %v1881, %v1880
      %v1889 = vpack.c.bf16 %v1883, %v1882
      %v1890 = vpack.c.bf16 %v1885, %v1884
      %v1891 = vpack.c.bf16 %v1887, %v1886
      %s1892 = scalar_lea.vmem %s2, 40
      %v1893 = vld [vmem:[%s1892] sm:$0xf]
      %v1895 = vsel %vm754, %v1888, 0
      %v1898 = vsel %vm754, %v1889, 0
      %v1901 = vsel %vm754, %v1890, 0
      %v1904 = vsel %vm754, %v1891, 0
      %v1907 = vsel %vm824, %v1893, 0
      %1909 = vmatprep.subr.bf16.mxu0 0
      %1910 = vmatpush1.bf16.msra.mxu0 0
      %1911 = vmatprep.subr.bf16.mxu0 0
      %1912 = vmatpush1.bf16.msra.mxu0 0
      %1913 = vmatprep.subr.bf16.mxu0 0
      %1914 = vmatpush1.bf16.msra.mxu0 0
      %1915 = vmatprep.subr.bf16.mxu0 0
      %1916 = vmatpush1.bf16.msra.mxu0 0
      %1917 = vmatprep.subr.bf16.mxu0 0
      %1918 = vmatpush1.bf16.msra.mxu0 0
      %1919 = vmatprep.subr.bf16.mxu0 0
      %1920 = vmatpush1.bf16.msra.mxu0 0
      %1921 = vmatprep.subr.bf16.mxu0 0
      %1922 = vmatpush1.bf16.msra.mxu0 0
      %1923 = vmatprep.subr.bf16.mxu0 0
      %1924 = vmatpush1.bf16.msra.mxu0 %v1907
      %1925 = vmatprep.subr.bf16.mxu0 0
      %1926 = vmatpush2.bf16.msra.mxu0 0
      %1927 = vmatprep.subr.bf16.mxu0 0
      %1928 = vmatpush2.bf16.msra.mxu0 0
      %1929 = vmatprep.subr.bf16.mxu0 0
      %1930 = vmatpush2.bf16.msra.mxu0 0
      %1931 = vmatprep.subr.bf16.mxu0 0
      %1932 = vmatpush2.bf16.msra.mxu0 0
      %1933 = vmatprep.subr.bf16.mxu0 0
      %1934 = vmatpush2.bf16.msra.mxu0 0
      %1935 = vmatprep.subr.bf16.mxu0 0
      %1936 = vmatpush2.bf16.msra.mxu0 0
      %1937 = vmatprep.subr.bf16.mxu0 0
      %1938 = vmatpush2.bf16.msra.mxu0 0
      %1939 = vmatprep.subr.bf16.mxu0 0
      %1940 = vmatpush2.bf16.msra.mxu0 0
      %1941 = vmatprep.mubr.bf16.mxu0 0
      %1942 = vmatmul.mubr.bf16.gmra.mxu0 %v1895
      %v1943 = vpop.f32.mrf.mxu0
      %v1944 = vadd.f32 0.0, %v1943
      %v1945 = vpop.f32.mrf.mxu0
      %v1946 = vpop.f32.mrf.mxu0
      %v1947 = vadd.f32 0.0, %v1946
      %v1948 = vpop.f32.mrf.mxu0
      %1949 = vmatprep.mubr.bf16.mxu0 0
      %1950 = vmatmul.mubr.bf16.gmra.mxu0 %v1898
      %v1951 = vpop.f32.mrf.mxu0
      %v1952 = vadd.f32 0.0, %v1951
      %v1953 = vpop.f32.mrf.mxu0
      %v1954 = vpop.f32.mrf.mxu0
      %v1955 = vadd.f32 0.0, %v1954
      %v1956 = vpop.f32.mrf.mxu0
      %1957 = vmatprep.mubr.bf16.mxu0 0
      %1958 = vmatmul.mubr.bf16.gmra.mxu0 %v1901
      %v1959 = vpop.f32.mrf.mxu0
      %v1960 = vadd.f32 0.0, %v1959
      %v1961 = vpop.f32.mrf.mxu0
      %v1962 = vpop.f32.mrf.mxu0
      %v1963 = vadd.f32 0.0, %v1962
      %v1964 = vpop.f32.mrf.mxu0
      %1965 = vmatprep.mubr.bf16.mxu0 0
      %1966 = vmatmul.mubr.bf16.gmra.mxu0 %v1904
      %v1967 = vpop.f32.mrf.mxu0
      %v1968 = vadd.f32 0.0, %v1967
      %v1969 = vpop.f32.mrf.mxu0
      %v1970 = vpop.f32.mrf.mxu0
      %v1971 = vadd.f32 0.0, %v1970
      %v1972 = vpop.f32.mrf.mxu0
      %1973 = vdwg.mxu0
      %v1974 = vadd.f32 %v1849, %v1944
      %v1975 = vadd.f32 %v1852, %v1947
      %v1976 = vadd.f32 %v1857, %v1952
      %v1977 = vadd.f32 %v1860, %v1955
      %v1978 = vadd.f32 %v1865, %v1960
      %v1979 = vadd.f32 %v1868, %v1963
      %v1980 = vadd.f32 %v1873, %v1968
      %v1981 = vadd.f32 %v1876, %v1971
      %v1982 = vld [vmem:[%s1879 + $0x1] sm:$0xff]
      %v1983 = vld [vmem:[%s1879 + $0x11] sm:$0xff]
      %v1984 = vld [vmem:[%s1879 + $0x21] sm:$0xff]
      %v1985 = vld [vmem:[%s1879 + $0x31] sm:$0xff]
      %v1986 = vld [vmem:[%s1879 + $0x41] sm:$0xff]
      %v1987 = vld [vmem:[%s1879 + $0x51] sm:$0xff]
      %v1988 = vld [vmem:[%s1879 + $0x61] sm:$0xff]
      %v1989 = vld [vmem:[%s1879 + $0x71] sm:$0xff]
      %v1990 = vpack.c.bf16 %v1983, %v1982
      %v1991 = vpack.c.bf16 %v1985, %v1984
      %v1992 = vpack.c.bf16 %v1987, %v1986
      %v1993 = vpack.c.bf16 %v1989, %v1988
      %s1994 = scalar_lea.vmem %s2, 44
      %v1995 = vld [vmem:[%s1994] sm:$0xf]
      %v1997 = vsel %vm754, %v1990, 0
      %v2000 = vsel %vm754, %v1991, 0
      %v2003 = vsel %vm754, %v1992, 0
      %v2006 = vsel %vm754, %v1993, 0
      %v2009 = vsel %vm824, %v1995, 0
      %2011 = vmatprep.subr.bf16.mxu0 0
      %2012 = vmatpush1.bf16.msra.mxu0 0
      %2013 = vmatprep.subr.bf16.mxu0 0
      %2014 = vmatpush1.bf16.msra.mxu0 0
      %2015 = vmatprep.subr.bf16.mxu0 0
      %2016 = vmatpush1.bf16.msra.mxu0 0
      %2017 = vmatprep.subr.bf16.mxu0 0
      %2018 = vmatpush1.bf16.msra.mxu0 0
      %2019 = vmatprep.subr.bf16.mxu0 0
      %2020 = vmatpush1.bf16.msra.mxu0 0
      %2021 = vmatprep.subr.bf16.mxu0 0
      %2022 = vmatpush1.bf16.msra.mxu0 0
      %2023 = vmatprep.subr.bf16.mxu0 0
      %2024 = vmatpush1.bf16.msra.mxu0 0
      %2025 = vmatprep.subr.bf16.mxu0 0
      %2026 = vmatpush1.bf16.msra.mxu0 %v2009
      %2027 = vmatprep.subr.bf16.mxu0 0
      %2028 = vmatpush2.bf16.msra.mxu0 0
      %2029 = vmatprep.subr.bf16.mxu0 0
      %2030 = vmatpush2.bf16.msra.mxu0 0
      %2031 = vmatprep.subr.bf16.mxu0 0
      %2032 = vmatpush2.bf16.msra.mxu0 0
      %2033 = vmatprep.subr.bf16.mxu0 0
      %2034 = vmatpush2.bf16.msra.mxu0 0
      %2035 = vmatprep.subr.bf16.mxu0 0
      %2036 = vmatpush2.bf16.msra.mxu0 0
      %2037 = vmatprep.subr.bf16.mxu0 0
      %2038 = vmatpush2.bf16.msra.mxu0 0
      %2039 = vmatprep.subr.bf16.mxu0 0
      %2040 = vmatpush2.bf16.msra.mxu0 0
      %2041 = vmatprep.subr.bf16.mxu0 0
      %2042 = vmatpush2.bf16.msra.mxu0 0
      %2043 = vmatprep.mubr.bf16.mxu0 0
      %2044 = vmatmul.mubr.bf16.gmra.mxu0 %v1997
      %v2045 = vpop.f32.mrf.mxu0
      %v2046 = vadd.f32 0.0, %v2045
      %v2047 = vpop.f32.mrf.mxu0
      %v2048 = vpop.f32.mrf.mxu0
      %v2049 = vadd.f32 0.0, %v2048
      %v2050 = vpop.f32.mrf.mxu0
      %2051 = vmatprep.mubr.bf16.mxu0 0
      %2052 = vmatmul.mubr.bf16.gmra.mxu0 %v2000
      %v2053 = vpop.f32.mrf.mxu0
      %v2054 = vadd.f32 0.0, %v2053
      %v2055 = vpop.f32.mrf.mxu0
      %v2056 = vpop.f32.mrf.mxu0
      %v2057 = vadd.f32 0.0, %v2056
      %v2058 = vpop.f32.mrf.mxu0
      %2059 = vmatprep.mubr.bf16.mxu0 0
      %2060 = vmatmul.mubr.bf16.gmra.mxu0 %v2003
      %v2061 = vpop.f32.mrf.mxu0
      %v2062 = vadd.f32 0.0, %v2061
      %v2063 = vpop.f32.mrf.mxu0
      %v2064 = vpop.f32.mrf.mxu0
      %v2065 = vadd.f32 0.0, %v2064
      %v2066 = vpop.f32.mrf.mxu0
      %2067 = vmatprep.mubr.bf16.mxu0 0
      %2068 = vmatmul.mubr.bf16.gmra.mxu0 %v2006
      %v2069 = vpop.f32.mrf.mxu0
      %v2070 = vadd.f32 0.0, %v2069
      %v2071 = vpop.f32.mrf.mxu0
      %v2072 = vpop.f32.mrf.mxu0
      %v2073 = vadd.f32 0.0, %v2072
      %v2074 = vpop.f32.mrf.mxu0
      %2075 = vdwg.mxu0
      %v2076 = vadd.f32 %v1974, %v2046
      %v2077 = vadd.f32 %v1975, %v2049
      %v2078 = vadd.f32 %v1976, %v2054
      %v2079 = vadd.f32 %v1977, %v2057
      %v2080 = vadd.f32 %v1978, %v2062
      %v2081 = vadd.f32 %v1979, %v2065
      %v2082 = vadd.f32 %v1980, %v2070
      %v2083 = vadd.f32 %v1981, %v2073
      %v2084 = vsel %vm1177, %v2076, 0.0
      %v2085 = vsel %vm1177, %v2077, 0.0
      %v2086 = vadd.f32 %v2084, %v2085
      %v2087 = vsel %vm1177, %v2078, 0.0
      %v2088 = vadd.f32 %v2086, %v2087
      %v2089 = vsel %vm1177, %v2079, 0.0
      %v2090 = vadd.f32 %v2088, %v2089
      %v2091 = vsel %vm1177, %v2080, 0.0
      %v2092 = vadd.f32 %v2090, %v2091
      %v2093 = vsel %vm1177, %v2081, 0.0
      %v2094 = vadd.f32 %v2092, %v2093
      %v2095 = vsel %vm1177, %v2082, 0.0
      %v2096 = vadd.f32 %v2094, %v2095
      %v2097 = vsel %vm1177, %v2083, 0.0
      %v2098 = vadd.f32 %v2096, %v2097
      %v2099 = vrot.slane %v2098, 4
      %v2100 = vadd.f32 %v2098, %v2099
      %v2101 = vrot.slane %v2100, 2
      %v2102 = vadd.f32 %v2100, %v2101
      %v2103 = vrot.slane %v2102, 1
      %v2104 = vadd.f32 %v2102, %v2103
      %v2105 = vadd.f32 %v1651, %v2104
      %v2106 = vmul.f32 %v2076, %v2076
      %v2107 = vmul.f32 %v2077, %v2077
      %v2108 = vmul.f32 %v2078, %v2078
      %v2109 = vmul.f32 %v2079, %v2079
      %v2110 = vmul.f32 %v2080, %v2080
      %v2111 = vmul.f32 %v2081, %v2081
      %v2112 = vmul.f32 %v2082, %v2082
      %v2113 = vmul.f32 %v2083, %v2083
      %v2114 = vsel %vm1177, %v2106, 0.0
      %v2115 = vsel %vm1177, %v2107, 0.0
      %v2116 = vadd.f32 %v2114, %v2115
      %v2117 = vsel %vm1177, %v2108, 0.0
      %v2118 = vadd.f32 %v2116, %v2117
      %v2119 = vsel %vm1177, %v2109, 0.0
      %v2120 = vadd.f32 %v2118, %v2119
      %v2121 = vsel %vm1177, %v2110, 0.0
      %v2122 = vadd.f32 %v2120, %v2121
      %v2123 = vsel %vm1177, %v2111, 0.0
      %v2124 = vadd.f32 %v2122, %v2123
      %v2125 = vsel %vm1177, %v2112, 0.0
      %v2126 = vadd.f32 %v2124, %v2125
      %v2127 = vsel %vm1177, %v2113, 0.0
      %v2128 = vadd.f32 %v2126, %v2127
      %v2129 = vrot.slane %v2128, 4
      %v2130 = vadd.f32 %v2128, %v2129
      %v2131 = vrot.slane %v2130, 2
      %v2132 = vadd.f32 %v2130, %v2131
      %v2133 = vrot.slane %v2132, 1
      %v2134 = vadd.f32 %v2132, %v2133
      %v2135 = vadd.f32 %v1681, %v2134
      %s2136 = scalar_lea.vmem %s235, 128
      %2137 = vst.msk [vmem:[%s2136] sm:$0xff] %vm1177, %v2076
      %2138 = vst.msk [vmem:[%s2136 + $0x8] sm:$0xff] %vm1177, %v2077
      %2139 = vst.msk [vmem:[%s2136 + $0x10] sm:$0xff] %vm1177, %v2078
      %2140 = vst.msk [vmem:[%s2136 + $0x18] sm:$0xff] %vm1177, %v2079
      %2141 = vst.msk [vmem:[%s2136 + $0x20] sm:$0xff] %vm1177, %v2080
      %2142 = vst.msk [vmem:[%s2136 + $0x28] sm:$0xff] %vm1177, %v2081
      %2143 = vst.msk [vmem:[%s2136 + $0x30] sm:$0xff] %vm1177, %v2082
      %2144 = vst.msk [vmem:[%s2136 + $0x38] sm:$0xff] %vm1177, %v2083
      %v2145 = vld [vmem:[%s776 + $0x1] sm:$0xff]
      %v2146 = vld [vmem:[%s776 + $0x11] sm:$0xff]
      %v2147 = vld [vmem:[%s776 + $0x21] sm:$0xff]
      %v2148 = vld [vmem:[%s776 + $0x31] sm:$0xff]
      %v2149 = vld [vmem:[%s776 + $0x41] sm:$0xff]
      %v2150 = vld [vmem:[%s776 + $0x51] sm:$0xff]
      %v2151 = vld [vmem:[%s776 + $0x61] sm:$0xff]
      %v2152 = vld [vmem:[%s776 + $0x71] sm:$0xff]
      %v2153 = vpack.c.bf16 %v2146, %v2145
      %v2154 = vpack.c.bf16 %v2148, %v2147
      %v2155 = vpack.c.bf16 %v2150, %v2149
      %v2156 = vpack.c.bf16 %v2152, %v2151
      %s2157 = scalar_lea.vmem %s2, 48
      %v2158 = vld [vmem:[%s2157] sm:$0xf]
      %v2159 = vld [vmem:[%s776 + $0x2] sm:$0xff]
      %v2160 = vld [vmem:[%s776 + $0x12] sm:$0xff]
      %v2161 = vld [vmem:[%s776 + $0x22] sm:$0xff]
      %v2162 = vld [vmem:[%s776 + $0x32] sm:$0xff]
      %v2163 = vld [vmem:[%s776 + $0x42] sm:$0xff]
      %v2164 = vld [vmem:[%s776 + $0x52] sm:$0xff]
      %v2165 = vld [vmem:[%s776 + $0x62] sm:$0xff]
      %v2166 = vld [vmem:[%s776 + $0x72] sm:$0xff]
      %v2167 = vpack.c.bf16 %v2160, %v2159
      %v2168 = vpack.c.bf16 %v2162, %v2161
      %v2169 = vpack.c.bf16 %v2164, %v2163
      %v2170 = vpack.c.bf16 %v2166, %v2165
      %s2171 = scalar_lea.vmem %s2, 52
      %v2172 = vld [vmem:[%s2171] sm:$0xf]
      %v2174 = vsel %vm754, %v2167, 0
      %v2177 = vsel %vm754, %v2168, 0
      %v2180 = vsel %vm754, %v2169, 0
      %v2183 = vsel %vm754, %v2170, 0
      %v2186 = vsel %vm824, %v2172, 0
      %2188 = vmatprep.subr.bf16.mxu0 0
      %2189 = vmatpush1.bf16.msra.mxu0 0
      %2190 = vmatprep.subr.bf16.mxu0 0
      %2191 = vmatpush1.bf16.msra.mxu0 0
      %2192 = vmatprep.subr.bf16.mxu0 0
      %2193 = vmatpush1.bf16.msra.mxu0 0
      %2194 = vmatprep.subr.bf16.mxu0 0
      %2195 = vmatpush1.bf16.msra.mxu0 0
      %2196 = vmatprep.subr.bf16.mxu0 0
      %2197 = vmatpush1.bf16.msra.mxu0 0
      %2198 = vmatprep.subr.bf16.mxu0 0
      %2199 = vmatpush1.bf16.msra.mxu0 0
      %2200 = vmatprep.subr.bf16.mxu0 0
      %2201 = vmatpush1.bf16.msra.mxu0 0
      %2202 = vmatprep.subr.bf16.mxu0 0
      %2203 = vmatpush1.bf16.msra.mxu0 %v2186
      %2204 = vmatprep.subr.bf16.mxu0 0
      %2205 = vmatpush2.bf16.msra.mxu0 0
      %2206 = vmatprep.subr.bf16.mxu0 0
      %2207 = vmatpush2.bf16.msra.mxu0 0
      %2208 = vmatprep.subr.bf16.mxu0 0
      %2209 = vmatpush2.bf16.msra.mxu0 0
      %2210 = vmatprep.subr.bf16.mxu0 0
      %2211 = vmatpush2.bf16.msra.mxu0 0
      %2212 = vmatprep.subr.bf16.mxu0 0
      %2213 = vmatpush2.bf16.msra.mxu0 0
      %2214 = vmatprep.subr.bf16.mxu0 0
      %2215 = vmatpush2.bf16.msra.mxu0 0
      %2216 = vmatprep.subr.bf16.mxu0 0
      %2217 = vmatpush2.bf16.msra.mxu0 0
      %2218 = vmatprep.subr.bf16.mxu0 0
      %2219 = vmatpush2.bf16.msra.mxu0 0
      %2220 = vmatprep.mubr.bf16.mxu0 0
      %2221 = vmatmul.mubr.bf16.gmra.mxu0 %v2174
      %v2222 = vpop.f32.mrf.mxu0
      %v2223 = vadd.f32 0.0, %v2222
      %v2224 = vpop.f32.mrf.mxu0
      %v2225 = vpop.f32.mrf.mxu0
      %v2226 = vadd.f32 0.0, %v2225
      %v2227 = vpop.f32.mrf.mxu0
      %2228 = vmatprep.mubr.bf16.mxu0 0
      %2229 = vmatmul.mubr.bf16.gmra.mxu0 %v2177
      %v2230 = vpop.f32.mrf.mxu0
      %v2231 = vadd.f32 0.0, %v2230
      %v2232 = vpop.f32.mrf.mxu0
      %v2233 = vpop.f32.mrf.mxu0
      %v2234 = vadd.f32 0.0, %v2233
      %v2235 = vpop.f32.mrf.mxu0
      %2236 = vmatprep.mubr.bf16.mxu0 0
      %2237 = vmatmul.mubr.bf16.gmra.mxu0 %v2180
      %v2238 = vpop.f32.mrf.mxu0
      %v2239 = vadd.f32 0.0, %v2238
      %v2240 = vpop.f32.mrf.mxu0
      %v2241 = vpop.f32.mrf.mxu0
      %v2242 = vadd.f32 0.0, %v2241
      %v2243 = vpop.f32.mrf.mxu0
      %2244 = vmatprep.mubr.bf16.mxu0 0
      %2245 = vmatmul.mubr.bf16.gmra.mxu0 %v2183
      %v2246 = vpop.f32.mrf.mxu0
      %v2247 = vadd.f32 0.0, %v2246
      %v2248 = vpop.f32.mrf.mxu0
      %v2249 = vpop.f32.mrf.mxu0
      %v2250 = vadd.f32 0.0, %v2249
      %v2251 = vpop.f32.mrf.mxu0
      %2252 = vdwg.mxu0
      %v2254 = vsel %vm754, %v2153, 0
      %v2257 = vsel %vm754, %v2154, 0
      %v2260 = vsel %vm754, %v2155, 0
      %v2263 = vsel %vm754, %v2156, 0
      %v2266 = vsel %vm824, %v2158, 0
      %2268 = vmatprep.subr.bf16.mxu0 0
      %2269 = vmatpush1.bf16.msra.mxu0 0
      %2270 = vmatprep.subr.bf16.mxu0 0
      %2271 = vmatpush1.bf16.msra.mxu0 0
      %2272 = vmatprep.subr.bf16.mxu0 0
      %2273 = vmatpush1.bf16.msra.mxu0 0
      %2274 = vmatprep.subr.bf16.mxu0 0
      %2275 = vmatpush1.bf16.msra.mxu0 0
      %2276 = vmatprep.subr.bf16.mxu0 0
      %2277 = vmatpush1.bf16.msra.mxu0 0
      %2278 = vmatprep.subr.bf16.mxu0 0
      %2279 = vmatpush1.bf16.msra.mxu0 0
      %2280 = vmatprep.subr.bf16.mxu0 0
      %2281 = vmatpush1.bf16.msra.mxu0 0
      %2282 = vmatprep.subr.bf16.mxu0 0
      %2283 = vmatpush1.bf16.msra.mxu0 %v2266
      %2284 = vmatprep.subr.bf16.mxu0 0
      %2285 = vmatpush2.bf16.msra.mxu0 0
      %2286 = vmatprep.subr.bf16.mxu0 0
      %2287 = vmatpush2.bf16.msra.mxu0 0
      %2288 = vmatprep.subr.bf16.mxu0 0
      %2289 = vmatpush2.bf16.msra.mxu0 0
      %2290 = vmatprep.subr.bf16.mxu0 0
      %2291 = vmatpush2.bf16.msra.mxu0 0
      %2292 = vmatprep.subr.bf16.mxu0 0
      %2293 = vmatpush2.bf16.msra.mxu0 0
      %2294 = vmatprep.subr.bf16.mxu0 0
      %2295 = vmatpush2.bf16.msra.mxu0 0
      %2296 = vmatprep.subr.bf16.mxu0 0
      %2297 = vmatpush2.bf16.msra.mxu0 0
      %2298 = vmatprep.subr.bf16.mxu0 0
      %2299 = vmatpush2.bf16.msra.mxu0 0
      %2300 = vmatprep.mubr.bf16.mxu0 0
      %2301 = vmatmul.mubr.bf16.gmra.mxu0 %v2254
      %v2302 = vpop.f32.mrf.mxu0
      %v2303 = vadd.f32 %v2223, %v2302
      %v2304 = vpop.f32.mrf.mxu0
      %v2305 = vpop.f32.mrf.mxu0
      %v2306 = vadd.f32 %v2226, %v2305
      %v2307 = vpop.f32.mrf.mxu0
      %2308 = vmatprep.mubr.bf16.mxu0 0
      %2309 = vmatmul.mubr.bf16.gmra.mxu0 %v2257
      %v2310 = vpop.f32.mrf.mxu0
      %v2311 = vadd.f32 %v2231, %v2310
      %v2312 = vpop.f32.mrf.mxu0
      %v2313 = vpop.f32.mrf.mxu0
      %v2314 = vadd.f32 %v2234, %v2313
      %v2315 = vpop.f32.mrf.mxu0
      %2316 = vmatprep.mubr.bf16.mxu0 0
      %2317 = vmatmul.mubr.bf16.gmra.mxu0 %v2260
      %v2318 = vpop.f32.mrf.mxu0
      %v2319 = vadd.f32 %v2239, %v2318
      %v2320 = vpop.f32.mrf.mxu0
      %v2321 = vpop.f32.mrf.mxu0
      %v2322 = vadd.f32 %v2242, %v2321
      %v2323 = vpop.f32.mrf.mxu0
      %2324 = vmatprep.mubr.bf16.mxu0 0
      %2325 = vmatmul.mubr.bf16.gmra.mxu0 %v2263
      %v2326 = vpop.f32.mrf.mxu0
      %v2327 = vadd.f32 %v2247, %v2326
      %v2328 = vpop.f32.mrf.mxu0
      %v2329 = vpop.f32.mrf.mxu0
      %v2330 = vadd.f32 %v2250, %v2329
      %v2331 = vpop.f32.mrf.mxu0
      %2332 = vdwg.mxu0
      %v2333 = vld [vmem:[%s1879 + $0x1] sm:$0xff]
      %v2334 = vld [vmem:[%s1879 + $0x11] sm:$0xff]
      %v2335 = vld [vmem:[%s1879 + $0x21] sm:$0xff]
      %v2336 = vld [vmem:[%s1879 + $0x31] sm:$0xff]
      %v2337 = vld [vmem:[%s1879 + $0x41] sm:$0xff]
      %v2338 = vld [vmem:[%s1879 + $0x51] sm:$0xff]
      %v2339 = vld [vmem:[%s1879 + $0x61] sm:$0xff]
      %v2340 = vld [vmem:[%s1879 + $0x71] sm:$0xff]
      %v2341 = vpack.c.bf16 %v2334, %v2333
      %v2342 = vpack.c.bf16 %v2336, %v2335
      %v2343 = vpack.c.bf16 %v2338, %v2337
      %v2344 = vpack.c.bf16 %v2340, %v2339
      %s2345 = scalar_lea.vmem %s2, 56
      %v2346 = vld [vmem:[%s2345] sm:$0xf]
      %v2348 = vsel %vm754, %v2341, 0
      %v2351 = vsel %vm754, %v2342, 0
      %v2354 = vsel %vm754, %v2343, 0
      %v2357 = vsel %vm754, %v2344, 0
      %v2360 = vsel %vm824, %v2346, 0
      %2362 = vmatprep.subr.bf16.mxu0 0
      %2363 = vmatpush1.bf16.msra.mxu0 0
      %2364 = vmatprep.subr.bf16.mxu0 0
      %2365 = vmatpush1.bf16.msra.mxu0 0
      %2366 = vmatprep.subr.bf16.mxu0 0
      %2367 = vmatpush1.bf16.msra.mxu0 0
      %2368 = vmatprep.subr.bf16.mxu0 0
      %2369 = vmatpush1.bf16.msra.mxu0 0
      %2370 = vmatprep.subr.bf16.mxu0 0
      %2371 = vmatpush1.bf16.msra.mxu0 0
      %2372 = vmatprep.subr.bf16.mxu0 0
      %2373 = vmatpush1.bf16.msra.mxu0 0
      %2374 = vmatprep.subr.bf16.mxu0 0
      %2375 = vmatpush1.bf16.msra.mxu0 0
      %2376 = vmatprep.subr.bf16.mxu0 0
      %2377 = vmatpush1.bf16.msra.mxu0 %v2360
      %2378 = vmatprep.subr.bf16.mxu0 0
      %2379 = vmatpush2.bf16.msra.mxu0 0
      %2380 = vmatprep.subr.bf16.mxu0 0
      %2381 = vmatpush2.bf16.msra.mxu0 0
      %2382 = vmatprep.subr.bf16.mxu0 0
      %2383 = vmatpush2.bf16.msra.mxu0 0
      %2384 = vmatprep.subr.bf16.mxu0 0
      %2385 = vmatpush2.bf16.msra.mxu0 0
      %2386 = vmatprep.subr.bf16.mxu0 0
      %2387 = vmatpush2.bf16.msra.mxu0 0
      %2388 = vmatprep.subr.bf16.mxu0 0
      %2389 = vmatpush2.bf16.msra.mxu0 0
      %2390 = vmatprep.subr.bf16.mxu0 0
      %2391 = vmatpush2.bf16.msra.mxu0 0
      %2392 = vmatprep.subr.bf16.mxu0 0
      %2393 = vmatpush2.bf16.msra.mxu0 0
      %2394 = vmatprep.mubr.bf16.mxu0 0
      %2395 = vmatmul.mubr.bf16.gmra.mxu0 %v2348
      %v2396 = vpop.f32.mrf.mxu0
      %v2397 = vadd.f32 0.0, %v2396
      %v2398 = vpop.f32.mrf.mxu0
      %v2399 = vpop.f32.mrf.mxu0
      %v2400 = vadd.f32 0.0, %v2399
      %v2401 = vpop.f32.mrf.mxu0
      %2402 = vmatprep.mubr.bf16.mxu0 0
      %2403 = vmatmul.mubr.bf16.gmra.mxu0 %v2351
      %v2404 = vpop.f32.mrf.mxu0
      %v2405 = vadd.f32 0.0, %v2404
      %v2406 = vpop.f32.mrf.mxu0
      %v2407 = vpop.f32.mrf.mxu0
      %v2408 = vadd.f32 0.0, %v2407
      %v2409 = vpop.f32.mrf.mxu0
      %2410 = vmatprep.mubr.bf16.mxu0 0
      %2411 = vmatmul.mubr.bf16.gmra.mxu0 %v2354
      %v2412 = vpop.f32.mrf.mxu0
      %v2413 = vadd.f32 0.0, %v2412
      %v2414 = vpop.f32.mrf.mxu0
      %v2415 = vpop.f32.mrf.mxu0
      %v2416 = vadd.f32 0.0, %v2415
      %v2417 = vpop.f32.mrf.mxu0
      %2418 = vmatprep.mubr.bf16.mxu0 0
      %2419 = vmatmul.mubr.bf16.gmra.mxu0 %v2357
      %v2420 = vpop.f32.mrf.mxu0
      %v2421 = vadd.f32 0.0, %v2420
      %v2422 = vpop.f32.mrf.mxu0
      %v2423 = vpop.f32.mrf.mxu0
      %v2424 = vadd.f32 0.0, %v2423
      %v2425 = vpop.f32.mrf.mxu0
      %2426 = vdwg.mxu0
      %v2427 = vadd.f32 %v2303, %v2397
      %v2428 = vadd.f32 %v2306, %v2400
      %v2429 = vadd.f32 %v2311, %v2405
      %v2430 = vadd.f32 %v2314, %v2408
      %v2431 = vadd.f32 %v2319, %v2413
      %v2432 = vadd.f32 %v2322, %v2416
      %v2433 = vadd.f32 %v2327, %v2421
      %v2434 = vadd.f32 %v2330, %v2424
      %v2435 = vld [vmem:[%s1879 + $0x2] sm:$0xff]
      %v2436 = vld [vmem:[%s1879 + $0x12] sm:$0xff]
      %v2437 = vld [vmem:[%s1879 + $0x22] sm:$0xff]
      %v2438 = vld [vmem:[%s1879 + $0x32] sm:$0xff]
      %v2439 = vld [vmem:[%s1879 + $0x42] sm:$0xff]
      %v2440 = vld [vmem:[%s1879 + $0x52] sm:$0xff]
      %v2441 = vld [vmem:[%s1879 + $0x62] sm:$0xff]
      %v2442 = vld [vmem:[%s1879 + $0x72] sm:$0xff]
      %v2443 = vpack.c.bf16 %v2436, %v2435
      %v2444 = vpack.c.bf16 %v2438, %v2437
      %v2445 = vpack.c.bf16 %v2440, %v2439
      %v2446 = vpack.c.bf16 %v2442, %v2441
      %s2447 = scalar_lea.vmem %s2, 60
      %v2448 = vld [vmem:[%s2447] sm:$0xf]
      %v2450 = vsel %vm754, %v2443, 0
      %v2453 = vsel %vm754, %v2444, 0
      %v2456 = vsel %vm754, %v2445, 0
      %v2459 = vsel %vm754, %v2446, 0
      %v2462 = vsel %vm824, %v2448, 0
      %2464 = vmatprep.subr.bf16.mxu0 0
      %2465 = vmatpush1.bf16.msra.mxu0 0
      %2466 = vmatprep.subr.bf16.mxu0 0
      %2467 = vmatpush1.bf16.msra.mxu0 0
      %2468 = vmatprep.subr.bf16.mxu0 0
      %2469 = vmatpush1.bf16.msra.mxu0 0
      %2470 = vmatprep.subr.bf16.mxu0 0
      %2471 = vmatpush1.bf16.msra.mxu0 0
      %2472 = vmatprep.subr.bf16.mxu0 0
      %2473 = vmatpush1.bf16.msra.mxu0 0
      %2474 = vmatprep.subr.bf16.mxu0 0
      %2475 = vmatpush1.bf16.msra.mxu0 0
      %2476 = vmatprep.subr.bf16.mxu0 0
      %2477 = vmatpush1.bf16.msra.mxu0 0
      %2478 = vmatprep.subr.bf16.mxu0 0
      %2479 = vmatpush1.bf16.msra.mxu0 %v2462
      %2480 = vmatprep.subr.bf16.mxu0 0
      %2481 = vmatpush2.bf16.msra.mxu0 0
      %2482 = vmatprep.subr.bf16.mxu0 0
      %2483 = vmatpush2.bf16.msra.mxu0 0
      %2484 = vmatprep.subr.bf16.mxu0 0
      %2485 = vmatpush2.bf16.msra.mxu0 0
      %2486 = vmatprep.subr.bf16.mxu0 0
      %2487 = vmatpush2.bf16.msra.mxu0 0
      %2488 = vmatprep.subr.bf16.mxu0 0
      %2489 = vmatpush2.bf16.msra.mxu0 0
      %2490 = vmatprep.subr.bf16.mxu0 0
      %2491 = vmatpush2.bf16.msra.mxu0 0
      %2492 = vmatprep.subr.bf16.mxu0 0
      %2493 = vmatpush2.bf16.msra.mxu0 0
      %2494 = vmatprep.subr.bf16.mxu0 0
      %2495 = vmatpush2.bf16.msra.mxu0 0
      %2496 = vmatprep.mubr.bf16.mxu0 0
      %2497 = vmatmul.mubr.bf16.gmra.mxu0 %v2450
      %v2498 = vpop.f32.mrf.mxu0
      %v2499 = vadd.f32 0.0, %v2498
      %v2500 = vpop.f32.mrf.mxu0
      %v2501 = vpop.f32.mrf.mxu0
      %v2502 = vadd.f32 0.0, %v2501
      %v2503 = vpop.f32.mrf.mxu0
      %2504 = vmatprep.mubr.bf16.mxu0 0
      %2505 = vmatmul.mubr.bf16.gmra.mxu0 %v2453
      %v2506 = vpop.f32.mrf.mxu0
      %v2507 = vadd.f32 0.0, %v2506
      %v2508 = vpop.f32.mrf.mxu0
      %v2509 = vpop.f32.mrf.mxu0
      %v2510 = vadd.f32 0.0, %v2509
      %v2511 = vpop.f32.mrf.mxu0
      %2512 = vmatprep.mubr.bf16.mxu0 0
      %2513 = vmatmul.mubr.bf16.gmra.mxu0 %v2456
      %v2514 = vpop.f32.mrf.mxu0
      %v2515 = vadd.f32 0.0, %v2514
      %v2516 = vpop.f32.mrf.mxu0
      %v2517 = vpop.f32.mrf.mxu0
      %v2518 = vadd.f32 0.0, %v2517
      %v2519 = vpop.f32.mrf.mxu0
      %2520 = vmatprep.mubr.bf16.mxu0 0
      %2521 = vmatmul.mubr.bf16.gmra.mxu0 %v2459
      %v2522 = vpop.f32.mrf.mxu0
      %v2523 = vadd.f32 0.0, %v2522
      %v2524 = vpop.f32.mrf.mxu0
      %v2525 = vpop.f32.mrf.mxu0
      %v2526 = vadd.f32 0.0, %v2525
      %v2527 = vpop.f32.mrf.mxu0
      %2528 = vdwg.mxu0
      %v2529 = vadd.f32 %v2427, %v2499
      %v2530 = vadd.f32 %v2428, %v2502
      %v2531 = vadd.f32 %v2429, %v2507
      %v2532 = vadd.f32 %v2430, %v2510
      %v2533 = vadd.f32 %v2431, %v2515
      %v2534 = vadd.f32 %v2432, %v2518
      %v2535 = vadd.f32 %v2433, %v2523
      %v2536 = vadd.f32 %v2434, %v2526
      %v2537 = vsel %vm1177, %v2529, 0.0
      %v2538 = vsel %vm1177, %v2530, 0.0
      %v2539 = vadd.f32 %v2537, %v2538
      %v2540 = vsel %vm1177, %v2531, 0.0
      %v2541 = vadd.f32 %v2539, %v2540
      %v2542 = vsel %vm1177, %v2532, 0.0
      %v2543 = vadd.f32 %v2541, %v2542
      %v2544 = vsel %vm1177, %v2533, 0.0
      %v2545 = vadd.f32 %v2543, %v2544
      %v2546 = vsel %vm1177, %v2534, 0.0
      %v2547 = vadd.f32 %v2545, %v2546
      %v2548 = vsel %vm1177, %v2535, 0.0
      %v2549 = vadd.f32 %v2547, %v2548
      %v2550 = vsel %vm1177, %v2536, 0.0
      %v2551 = vadd.f32 %v2549, %v2550
      %v2552 = vrot.slane %v2551, 4
      %v2553 = vadd.f32 %v2551, %v2552
      %v2554 = vrot.slane %v2553, 2
      %v2555 = vadd.f32 %v2553, %v2554
      %v2556 = vrot.slane %v2555, 1
      %v2557 = vadd.f32 %v2555, %v2556
      %v2558 = vadd.f32 %v2105, %v2557
      %v2559 = vmul.f32 %v2529, %v2529
      %v2560 = vmul.f32 %v2530, %v2530
      %v2561 = vmul.f32 %v2531, %v2531
      %v2562 = vmul.f32 %v2532, %v2532
      %v2563 = vmul.f32 %v2533, %v2533
      %v2564 = vmul.f32 %v2534, %v2534
      %v2565 = vmul.f32 %v2535, %v2535
      %v2566 = vmul.f32 %v2536, %v2536
      %v2567 = vsel %vm1177, %v2559, 0.0
      %v2568 = vsel %vm1177, %v2560, 0.0
      %v2569 = vadd.f32 %v2567, %v2568
      %v2570 = vsel %vm1177, %v2561, 0.0
      %v2571 = vadd.f32 %v2569, %v2570
      %v2572 = vsel %vm1177, %v2562, 0.0
      %v2573 = vadd.f32 %v2571, %v2572
      %v2574 = vsel %vm1177, %v2563, 0.0
      %v2575 = vadd.f32 %v2573, %v2574
      %v2576 = vsel %vm1177, %v2564, 0.0
      %v2577 = vadd.f32 %v2575, %v2576
      %v2578 = vsel %vm1177, %v2565, 0.0
      %v2579 = vadd.f32 %v2577, %v2578
      %v2580 = vsel %vm1177, %v2566, 0.0
      %v2581 = vadd.f32 %v2579, %v2580
      %v2582 = vrot.slane %v2581, 4
      %v2583 = vadd.f32 %v2581, %v2582
      %v2584 = vrot.slane %v2583, 2
      %v2585 = vadd.f32 %v2583, %v2584
      %v2586 = vrot.slane %v2585, 1
      %v2587 = vadd.f32 %v2585, %v2586
      %v2588 = vadd.f32 %v2135, %v2587
      %s2589 = scalar_lea.vmem %s235, 192
      %2590 = vst.msk [vmem:[%s2589] sm:$0xff] %vm1177, %v2529
      %2591 = vst.msk [vmem:[%s2589 + $0x8] sm:$0xff] %vm1177, %v2530
      %2592 = vst.msk [vmem:[%s2589 + $0x10] sm:$0xff] %vm1177, %v2531
      %2593 = vst.msk [vmem:[%s2589 + $0x18] sm:$0xff] %vm1177, %v2532
      %2594 = vst.msk [vmem:[%s2589 + $0x20] sm:$0xff] %vm1177, %v2533
      %2595 = vst.msk [vmem:[%s2589 + $0x28] sm:$0xff] %vm1177, %v2534
      %2596 = vst.msk [vmem:[%s2589 + $0x30] sm:$0xff] %vm1177, %v2535
      %2597 = vst.msk [vmem:[%s2589 + $0x38] sm:$0xff] %vm1177, %v2536
      %vm2598 = vcmask 24576
      %2599 = vst.msk [vmem:[%s238] sm:$0x1] %vm2598, %v2558
      %2600 = vst.msk [vmem:[%s241] sm:$0x1] %vm2598, %v2588
      %p2601 = scmp.lt.s32.totalorder %s17, 1
      %s2602 = scalar_select %p2601, %s17, 1
      %s2603 = smul.addr %s2602, 32
      %s2604 = smul.addr %s2603, 8
      %s2605 = scalar_lea.vmem %s3, %s2604
      %p2606 = scmp.lt.s32.totalorder %s17, 1
      %s2607 = scalar_select %p2606, %s17, 1
      %s2608 = scalar_lea.vmem %s4, %s2607
      %p2609 = scmp.lt.s32.totalorder %s17, 1
      %s2610 = scalar_select %p2609, %s17, 1
      %s2611 = scalar_lea.vmem %s5, %s2610
      // Predicated region
      $region33: #{unet_block_innermost_forward.2} parent=31 // pred_check
        %p2612 = pneg %p103
      $region34: #{unet_block_innermost_forward.2} parent=31 // pred_check_branch
        %2614 = sbr.rel (%p2612) target = $region36
      $region35: #{unet_block_innermost_forward.2} parent=31 // pred_region
        _
      $region36: #{unet_block_innermost_forward.2} parent=31 // pred_fallthru
        _
      // Predicated region
      $region37: #{unet_block_innermost_forward.2} parent=31 // pred_check
        %p2615 = pneg %p129
      $region38: #{unet_block_innermost_forward.2} parent=31 // pred_check_branch
        %2617 = sbr.rel (%p2615) target = $region40
      $region39: #{unet_block_innermost_forward.2} parent=31 // pred_region
        _
      $region40: #{unet_block_innermost_forward.2} parent=31 // pred_fallthru
        _
      // Predicated region
      $region41: #{unet_block_innermost_forward.2} parent=31 // pred_check
        %p2618 = pneg %p155
      $region42: #{unet_block_innermost_forward.2} parent=31 // pred_check_branch
        %2620 = sbr.rel (%p2618) target = $region44
      $region43: #{unet_block_innermost_forward.2} parent=31 // pred_region
        _
      $region44: #{unet_block_innermost_forward.2} parent=31 // pred_fallthru
        _
    $region32: #{unet_block_innermost_forward.2} parent=5 // pred_fallthru
      _
    %p2621 = scmp.le.s32.totalorder 2, %s12
    // Predicated region
    $region45: #{unet_block_innermost_forward.2} parent=5 // pred_check
      %p2622 = pneg %p2621
    $region46: #{unet_block_innermost_forward.2} parent=5 // pred_check_branch
      %2624 = sbr.rel (%p2622) target = $region48
    $region47: #{unet_block_innermost_forward.2} parent=5 // pred_region
      %s2625 = ssub.s32 %s12, 2
      // Predicated region
      $region49: #{unet_block_innermost_forward.2} parent=47 // pred_check
        %p2626 = pneg %p109
      $region50: #{unet_block_innermost_forward.2} parent=47 // pred_check_branch
        %2628 = sbr.rel (%p2626) target = $region52
      $region51: #{unet_block_innermost_forward.2} parent=47 // pred_region
        %p2629 = scmp.lt.s32.totalorder %s18, 1
        %s2630 = scalar_select %p2629, %s18, 1
        %s2631 = smul.addr %s2630, 32
        %s2632 = smul.addr %s2631, 8
        %s2633 = scalar_lea.vmem %s3, %s2632
      $region52: #{unet_block_innermost_forward.2} parent=47 // pred_fallthru
        _
      // Predicated region
      $region53: #{unet_block_innermost_forward.2} parent=47 // pred_check
        %p2634 = pneg %p135
      $region54: #{unet_block_innermost_forward.2} parent=47 // pred_check_branch
        %2636 = sbr.rel (%p2634) target = $region56
      $region55: #{unet_block_innermost_forward.2} parent=47 // pred_region
        %p2637 = scmp.lt.s32.totalorder %s18, 1
        %s2638 = scalar_select %p2637, %s18, 1
        %s2639 = scalar_lea.vmem %s4, %s2638
      $region56: #{unet_block_innermost_forward.2} parent=47 // pred_fallthru
        _
      // Predicated region
      $region57: #{unet_block_innermost_forward.2} parent=47 // pred_check
        %p2640 = pneg %p161
      $region58: #{unet_block_innermost_forward.2} parent=47 // pred_check_branch
        %2642 = sbr.rel (%p2640) target = $region60
      $region59: #{unet_block_innermost_forward.2} parent=47 // pred_region
        %p2643 = scmp.lt.s32.totalorder %s18, 1
        %s2644 = scalar_select %p2643, %s18, 1
        %s2645 = scalar_lea.vmem %s5, %s2644
      $region60: #{unet_block_innermost_forward.2} parent=47 // pred_fallthru
        _
    $region48: #{unet_block_innermost_forward.2} parent=5 // pred_fallthru
      _
  $region6: #{unet_block_innermost_forward.2} parent=0 // loop_footer
    %s16 = sadd.s32 1, %s12
  $region7: #{unet_block_innermost_forward.2} parent=0 // loop_footer_branch
    %11 = sbr.rel target = $region3
  $region8: #{unet_block_innermost_forward.2} parent=0 // loop_exit
    _

</llo_original>
